<compile_context>
chip_gen: v5e
topology: v5e:2x2
jax: 0.10.0
libtpu: 0.0.40
codegen_flags: <defaults>
</compile_context>

<pallas_src>
import functools
import math
import numpy as np
import jax
import jax.numpy as jnp
from jax import lax
from jax.experimental import pallas as pl
from jax.experimental.pallas import tpu as pltpu

C = 15          # hash table channels: 3 dmeans, 4 quat, 3 scale, 3 sh, 1 opacity, 1 current
C_PAD = 16      # channel-padded table (sublane friendly, row 15 = 0)
F_OUT = 18      # packed output rows per voxel:
                #   [mean_xyz(3) | cov row-major 3x3 (9) | sh_rgb(3) | opacity(1) |
                #    current_existence_mask(1) | residual_mask(1)]

# spatial-hash primes; PI2 stored as its int32 (mod 2^32) value so int32
# wraparound multiply reproduces the low 32 bits of the torch int64 math.
PI1 = 1
PI2_I32 = -1640531535      # == 2654435761 mod 2^32
PI3 = 805459861


# ----------------------------------------------------------------------------
# Fused kernel: coords -> hash -> gather -> activate -> gaussians + masks
#   - voxel index N on lanes; all intermediates are (k, tn) lane-dense rows
#   - coordinates generated in-kernel from the grid index
#   - 4 grouped lane-dense output stores
# ----------------------------------------------------------------------------
def _voxel_gaussian_kernel(sparams_ref, offset_ref, tbl_ref, out_ref, *,
                           gather_mode, voxel_size, log2_vs, table_size,
                           min_opacity, tn):
    dm_scale = sparams_ref[0]      # k / std            (k = 2*far/voxel_size/6)
    dm_shift = sparams_ref[1]      # -mean * k / std
    s_mult = sparams_ref[2]        # 2*far/voxel_size   (scale act AND voxel-center scale)
    vc_bias = sparams_ref[3]       # far/voxel_size
    ox = offset_ref[0]
    oy = offset_ref[1]
    oz = offset_ref[2]

    # ---- dense voxel coordinates of this tile (ij meshgrid order), + offset ----
    m = pl.program_id(0) * tn + lax.broadcasted_iota(jnp.int32, (1, tn), 1)
    smask = voxel_size - 1
    cz = (m & smask) + oz
    cy = ((m >> log2_vs) & smask) + oy
    cx = (m >> (2 * log2_vs)) + ox

    # ---- spatial hash (int32 wraparound == low 32 bits of the int64 torch math;
    #      table_size is a power of two so & == mod, result is nonnegative) ----
    h = ((cx * PI1) ^ (cy * PI2_I32) ^ (cz * PI3)) & (table_size - 1)   # (1, tn)

    if gather_mode == "take":
        # true lane gather of the raw f32 table (exact selection)
        idx = jnp.broadcast_to(h, (C_PAD, tn))
        feats = jnp.take_along_axis(tbl_ref[...], idx, axis=1,
                                    mode="promise_in_bounds")           # (16, tn)
    else:
        # one-hot MXU selection fallback: a single (32,T)x(T,tn) bf16 matmul
        # against the hi/lo-split table precomputed in XLA.  Exact to ~2^-17
        # relative because each one-hot column selects exactly one entry.
        t_iota = lax.broadcasted_iota(jnp.int32, (table_size, tn), 0)
        onehot = (t_iota == h).astype(jnp.float32).astype(jnp.bfloat16)  # (T, tn)
        g = jnp.dot(tbl_ref[...], onehot,
                    preferred_element_type=jnp.float32)                  # (32, tn)
        feats = g[0:C_PAD, :] + g[C_PAD:2 * C_PAD, :]                    # (16, tn) raw

    # ---- per-channel activation on the gathered features (EUP sigmoids) ----
    coords = jnp.concatenate([cx, cy, cz], axis=0).astype(jnp.float32)   # (3, tn)
    means = (feats[0:3, :] * dm_scale + dm_shift) + (coords * s_mult + vc_bias)

    quat = feats[3:7, :]                                                 # identity act
    scl = jax.nn.sigmoid(feats[7:10, :]) * s_mult
    sh = jax.nn.sigmoid(feats[10:13, :])
    op = jax.nn.sigmoid(feats[13:14, :] - 4.0)
    cur = jax.nn.sigmoid(feats[14:15, :])

    # ---- covariance = (R diag(s)) (R diag(s))^T  (standard 3DGS build) ----
    q0 = quat[0:1, :]
    q1 = quat[1:2, :]
    q2 = quat[2:3, :]
    q3 = quat[3:4, :]
    s0 = scl[0:1, :]
    s1 = scl[1:2, :]
    s2 = scl[2:3, :]
    inv_n = lax.rsqrt(q0 * q0 + q1 * q1 + q2 * q2 + q3 * q3 + 1e-12)
    r = q0 * inv_n
    xq = q1 * inv_n
    yq = q2 * inv_n
    zq = q3 * inv_n
    R00 = 1.0 - 2.0 * (yq * yq + zq * zq)
    R01 = 2.0 * (xq * yq - r * zq)
    R02 = 2.0 * (xq * zq + r * yq)
    R10 = 2.0 * (xq * yq + r * zq)
    R11 = 1.0 - 2.0 * (xq * xq + zq * zq)
    R12 = 2.0 * (yq * zq - r * xq)
    R20 = 2.0 * (xq * zq - r * yq)
    R21 = 2.0 * (yq * zq + r * xq)
    R22 = 1.0 - 2.0 * (xq * xq + yq * yq)
    L00, L01, L02 = R00 * s0, R01 * s1, R02 * s2
    L10, L11, L12 = R10 * s0, R11 * s1, R12 * s2
    L20, L21, L22 = R20 * s0, R21 * s1, R22 * s2
    C00 = L00 * L00 + L01 * L01 + L02 * L02
    C01 = L00 * L10 + L01 * L11 + L02 * L12
    C02 = L00 * L20 + L01 * L21 + L02 * L22
    C11 = L10 * L10 + L11 * L11 + L12 * L12
    C12 = L10 * L20 + L11 * L21 + L12 * L22
    C22 = L20 * L20 + L21 * L21 + L22 * L22
    cov = jnp.concatenate([C00, C01, C02, C01, C11, C12, C02, C12, C22],
                          axis=0)                                        # (9, tn)

    # ---- masks ----
    exist = (op >= min_opacity).astype(jnp.float32)
    curm = (cur >= 0.5).astype(jnp.float32)
    masks = jnp.concatenate([exist * curm, exist * (1.0 - curm)], axis=0)  # (2, tn)

    # ---- grouped lane-dense stores (4 region writes, not 18 row writes) ----
    out_ref[0:3, :] = means
    out_ref[3:12, :] = cov
    out_ref[12:16, :] = jnp.concatenate([sh, op], axis=0)
    out_ref[16:18, :] = masks


def _build_query_call(*, gather_mode, resident_vmem, table_rows,
                      t, n, tn, voxel_size, log2_vs, min_opacity):
    kern = functools.partial(
        _voxel_gaussian_kernel, gather_mode=gather_mode, voxel_size=voxel_size,
        log2_vs=log2_vs, table_size=t, min_opacity=float(min_opacity), tn=tn)

    if resident_vmem:
        # whole table resident in VMEM, single-buffered (no per-step DMA)
        table_spec = pl.BlockSpec(memory_space=pltpu.MemorySpace.VMEM)
    else:
        # fallback: blocked full-table spec with a constant index map
        table_spec = pl.BlockSpec((table_rows, t), lambda i: (0, 0))

    return pl.pallas_call(
        kern,
        out_shape=jax.ShapeDtypeStruct((F_OUT, n), jnp.float32),
        grid=(n // tn,),
        in_specs=[
            pl.BlockSpec(memory_space=pltpu.MemorySpace.SMEM),   # sparams (4,) f32
            pl.BlockSpec(memory_space=pltpu.MemorySpace.SMEM),   # offset  (3,) i32
            table_spec,                                          # resident table
        ],
        out_specs=pl.BlockSpec((F_OUT, tn), lambda i: (0, i)),   # lane-dense output
        compiler_params=pltpu.CompilerParams(
            dimension_semantics=("parallel",),
            # 48 MiB fits v7x's 64 MiB/TC; v5e/v6e may raise toward ~100 MiB
            # for very large tables / tn.
            vmem_limit_bytes=48 * 1024 * 1024),
    )


def pallas_voxel_gaussians(hash_table, far, offset, voxel_size, min_opacity,
                           tn=512, gather_mode="auto"):
    """Returns the packed lane-major (F_OUT, N) gaussian slab."""
    c, t = hash_table.shape
    assert c == C
    assert t & (t - 1) == 0, "hash table size must be a power of two"
    log2_vs = int(round(math.log2(voxel_size)))
    assert (1 << log2_vs) == voxel_size, "voxel_size must be a power of two"

    n = voxel_size ** 3
    tn = min(tn, n)
    assert n % tn == 0 and tn % 128 == 0

    ht = hash_table.astype(jnp.float32)
    far = far.astype(jnp.float32)

    # tiny 3xT reduction done in XLA (unbiased std, like torch.std); -> SMEM scalars
    dm = ht[0:3]
    mean = jnp.mean(dm)
    std = jnp.std(dm, ddof=1)
    k = 2.0 * far / voxel_size / 6.0
    sparams = jnp.stack([k / std, -mean * k / std,
                         2.0 * far / voxel_size,
                         far / voxel_size]).astype(jnp.float32)
    offset = offset.astype(jnp.int32)

    # channel-pad raw table to 16 rows; hoist the bf16 hi/lo split out of the
    # kernel (computed once here) and stack to a single (32, T) bf16 LHS.
    ht_pad = jnp.concatenate([ht, jnp.zeros((1, t), jnp.float32)], axis=0)   # (16, T)
    hi = ht_pad.astype(jnp.bfloat16)
    lo = (ht_pad - hi.astype(jnp.float32)).astype(jnp.bfloat16)
    ht_stacked = jnp.concatenate([hi, lo], axis=0)                           # (32, T)

    if gather_mode == "auto":
        configs = [("take", True), ("take", False),
                   ("onehot", True), ("onehot", False)]
    elif gather_mode == "take":
        configs = [("take", True), ("take", False)]
    else:
        configs = [("onehot", True), ("onehot", False)]

    last_err = None
    for mode, resident in configs:
        tbl = ht_pad if mode == "take" else ht_stacked
        try:
            call = _build_query_call(
                gather_mode=mode, resident_vmem=resident,
                table_rows=tbl.shape[0], t=t, n=n, tn=tn,
                voxel_size=voxel_size, log2_vs=log2_vs,
                min_opacity=min_opacity)
            out = call(sparams, offset, tbl)
            jax.block_until_ready(out)
            return out
        except Exception as e:          # lowering rejected -> try next config
            last_err = e
    raise last_err


# ----------------------------------------------------------------------------
# Glue: single-scale forward (scale 0, batch 0)
# ----------------------------------------------------------------------------
def forward_single_scale(hash_table, extrinsics, fars, voxel_size, min_opacity,
                         tn=512, gather_mode="auto"):
    far = fars[0, 0]
    camera_center = jnp.linalg.inv(extrinsics)[0][:, :3, 3].mean(axis=0)      # [3]
    offset = ((camera_center - far) * voxel_size / 2.0 / far).astype(jnp.int32)

    packed = pallas_voxel_gaussians(hash_table, far, offset, voxel_size,
                                    min_opacity, tn=tn,
                                    gather_mode=gather_mode)                  # (18, N)
    n = voxel_size ** 3
    # NOTE: heavy consumers should read the lane-major `packed` slab directly;
    # the [N, ...] dict below only mirrors the torch module's output shapes.
    p = packed.T                                                              # (N, 18)
    gaussians = dict(
        means=p[:, 0:3][None],                          # [1, N, 3]
        covariances=p[:, 3:12].reshape(1, n, 3, 3),     # [1, N, 3, 3]
        harmonics=p[:, 12:15].reshape(1, n, 3, 1),      # [1, N, 3, 1]
        opacities=p[:, 15][None],                       # [1, N]
        current_existence_mask=p[:, 16] > 0.5,          # [N]
        residual_mask=p[:, 17] > 0.5,                   # [N]
    )
    return gaussians, packed, offset


# ----------------------------------------------------------------------------
# Pure numpy reference (int64 hash path, like torch) for verification
# ----------------------------------------------------------------------------
def _ref_numpy(ht, coords, far, offset, voxel_size, min_opacity):
    ht = np.asarray(ht, np.float32)
    coords = np.asarray(coords, np.int64)
    off = np.asarray(offset, np.int64)
    far = np.float32(far)
    sig = lambda v: 1.0 / (1.0 + np.exp(-v.astype(np.float32)))

    act = np.zeros_like(ht)
    dm = ht[0:3]
    mean = dm.mean(dtype=np.float32)
    std = dm.std(ddof=1, dtype=np.float32)
    act[0:3] = (dm - mean) / std * 2 * far / voxel_size / 6
    act[3:7] = ht[3:7]
    act[7:10] = sig(ht[7:10]) * 2 * far / voxel_size
    act[10:13] = sig(ht[10:13])
    act[13:14] = sig(ht[13:14] - 4)
    act[14:15] = sig(ht[14:15])

    c = coords + off[None]
    primes = np.array([1, 2654435761, 805459861], dtype=np.int64)
    hp = c * primes
    hidx = np.mod(hp[:, 0] ^ hp[:, 1] ^ hp[:, 2], ht.shape[1])
    feats = act[:, hidx].T.astype(np.float32)               # [N, 15]

    vc = c.astype(np.float32) / voxel_size * 2 * far + far / voxel_size
    means = feats[:, 0:3] + vc
    quat = feats[:, 3:7]
    qn = quat / np.linalg.norm(quat, axis=1, keepdims=True)
    r, xq, yq, zq = qn[:, 0], qn[:, 1], qn[:, 2], qn[:, 3]
    R = np.stack([
        np.stack([1 - 2 * (yq * yq + zq * zq), 2 * (xq * yq - r * zq), 2 * (xq * zq + r * yq)], -1),
        np.stack([2 * (xq * yq + r * zq), 1 - 2 * (xq * xq + zq * zq), 2 * (yq * zq - r * xq)], -1),
        np.stack([2 * (xq * zq - r * yq), 2 * (yq * zq + r * xq), 1 - 2 * (xq * xq + yq * yq)], -1),
    ], axis=1)                                              # [N, 3, 3]
    L = R * feats[:, None, 7:10]
    cov = L @ np.transpose(L, (0, 2, 1))
    sh = feats[:, 10:13]
    op = feats[:, 13:14]
    cur = feats[:, 14:15]
    exist = (op >= min_opacity).astype(np.float32)
    curm = (cur >= 0.5).astype(np.float32)
    packed = np.concatenate([means, cov.reshape(-1, 9), sh, op,
                             exist * curm, exist * (1 - curm)], axis=1)
    return packed


if __name__ == "__main__":
    key = jax.random.PRNGKey(0)
    k1, k2 = jax.random.split(key)

    T = 256                      # hash table size (power of two)
    VOXEL_SIZE = 8               # small demo scale (module default: [32,128,512])
    MIN_OPACITY = 0.1
    B, V = 1, 2
    TN = 256                     # demo tile: N=512 -> grid=(2,)

    # multi_scale_hash_tables[0] has shape [b, C=15, T]; take batch 0.
    hash_table = jax.random.normal(k1, (C, T), dtype=jnp.float32)

    # extrinsics [b, V, 4, 4]: identity rotation + small translation.
    trans = jax.random.normal(k2, (V, 3), dtype=jnp.float32) * 0.1
    ext = jnp.tile(jnp.eye(4, dtype=jnp.float32)[None], (V, 1, 1))
    ext = ext.at[:, :3, 3].set(trans)
    extrinsics = ext[None]                                  # [1, 2, 4, 4]
    fars = jnp.full((B, V), 4.0, dtype=jnp.float32)         # far = 4.0

    # dense voxel coordinates for the numpy reference
    idx = np.arange(VOXEL_SIZE, dtype=np.int64)
    xg, yg, zg = np.meshgrid(idx, idx, idx, indexing="ij")
    coords_np = np.stack([xg, yg, zg], -1).reshape(-1, 3)

    def run_and_check(mode):
        gaussians, packed, offset = forward_single_scale(
            hash_table, extrinsics, fars, VOXEL_SIZE, MIN_OPACITY,
            tn=TN, gather_mode=mode)
        jax.block_until_ready(packed)
        packed_ref = _ref_numpy(np.asarray(hash_table), coords_np,
                                float(fars[0, 0]), np.asarray(offset),
                                VOXEL_SIZE, MIN_OPACITY)
        ok = np.allclose(np.asarray(packed).T, packed_ref,
                         rtol=1e-2, atol=1e-2)
        return ok, gaussians, packed

    ok, gaussians, packed = run_and_check("auto")
    if not ok:
        # defensive: if the dynamic-gather path lowered but mismatched,
        # force the verified one-hot MXU selection path.
        ok, gaussians, packed = run_and_check("onehot")
    assert ok, "gaussian mismatch"

    print("KERNEL_OK")
</pallas_src>

<mosaic_0001>
module attributes {stable_mosaic.version = 11 : i64} {
  func.func @_voxel_gaussian_kernel(%arg0: i32, %arg1: memref<4xf32, #tpu.memory_space<smem>>, %arg2: memref<3xi32, #tpu.memory_space<smem>>, %arg3: memref<16x256xf32, #tpu.memory_space<vmem>>, %arg4: memref<18x256xf32, #tpu.memory_space<vmem>>) attributes {dimension_semantics = [#tpu.dimension_semantics<parallel>], iteration_bounds = array<i64: 2>, scalar_prefetch = 0 : i64, scratch_operands = 0 : i64, tpu.core_type = #tpu.core_type<tc>, window_params = [{transform_indices = @transform_0, window_bounds = array<i64: 4>}, {transform_indices = @transform_1, window_bounds = array<i64: 3>}, {pipeline_mode = #tpu.pipeline_mode<synchronous>, transform_indices = @transform_2, window_bounds = array<i64: 16, 256>}, {transform_indices = @transform_3, window_bounds = array<i64: 18, 256>}]} {
    %c0 = arith.constant 0 : index
    %0 = memref.load %arg1[%c0] : memref<4xf32, #tpu.memory_space<smem>>
    %c1 = arith.constant 1 : index
    %1 = memref.load %arg1[%c1] : memref<4xf32, #tpu.memory_space<smem>>
    %c2 = arith.constant 2 : index
    %2 = memref.load %arg1[%c2] : memref<4xf32, #tpu.memory_space<smem>>
    %c3 = arith.constant 3 : index
    %3 = memref.load %arg1[%c3] : memref<4xf32, #tpu.memory_space<smem>>
    %c0_0 = arith.constant 0 : index
    %4 = memref.load %arg2[%c0_0] : memref<3xi32, #tpu.memory_space<smem>>
    %c1_1 = arith.constant 1 : index
    %5 = memref.load %arg2[%c1_1] : memref<3xi32, #tpu.memory_space<smem>>
    %c2_2 = arith.constant 2 : index
    %6 = memref.load %arg2[%c2_2] : memref<3xi32, #tpu.memory_space<smem>>
    %c256_i32 = arith.constant 256 : i32
    %7 = arith.muli %arg0, %c256_i32 : i32
    %8 = tpu.iota {dimensions = array<i32: 1>} : vector<1x256xi32>
    %9 = vector.broadcast %7 : i32 to vector<1x256xi32>
    %10 = arith.addi %9, %8 : vector<1x256xi32>
    %c7_i32 = arith.constant 7 : i32
    %11 = vector.broadcast %c7_i32 : i32 to vector<1x256xi32>
    %12 = arith.andi %10, %11 : vector<1x256xi32>
    %13 = vector.broadcast %6 : i32 to vector<1x256xi32>
    %14 = arith.addi %12, %13 : vector<1x256xi32>
    %c3_i32 = arith.constant 3 : i32
    %15 = vector.broadcast %c3_i32 : i32 to vector<1x256xi32>
    %16 = arith.shrsi %10, %15 : vector<1x256xi32>
    %c7_i32_3 = arith.constant 7 : i32
    %17 = vector.broadcast %c7_i32_3 : i32 to vector<1x256xi32>
    %18 = arith.andi %16, %17 : vector<1x256xi32>
    %19 = vector.broadcast %5 : i32 to vector<1x256xi32>
    %20 = arith.addi %18, %19 : vector<1x256xi32>
    %c6_i32 = arith.constant 6 : i32
    %21 = vector.broadcast %c6_i32 : i32 to vector<1x256xi32>
    %22 = arith.shrsi %10, %21 : vector<1x256xi32>
    %23 = vector.broadcast %4 : i32 to vector<1x256xi32>
    %24 = arith.addi %22, %23 : vector<1x256xi32>
    %c1_i32 = arith.constant 1 : i32
    %25 = vector.broadcast %c1_i32 : i32 to vector<1x256xi32>
    %26 = arith.muli %24, %25 : vector<1x256xi32>
    %c-1640531535_i32 = arith.constant -1640531535 : i32
    %27 = vector.broadcast %c-1640531535_i32 : i32 to vector<1x256xi32>
    %28 = arith.muli %20, %27 : vector<1x256xi32>
    %29 = arith.xori %26, %28 : vector<1x256xi32>
    %c805459861_i32 = arith.constant 805459861 : i32
    %30 = vector.broadcast %c805459861_i32 : i32 to vector<1x256xi32>
    %31 = arith.muli %14, %30 : vector<1x256xi32>
    %32 = arith.xori %29, %31 : vector<1x256xi32>
    %c255_i32 = arith.constant 255 : i32
    %33 = vector.broadcast %c255_i32 : i32 to vector<1x256xi32>
    %34 = arith.andi %32, %33 : vector<1x256xi32>
    %35 = vector.shape_cast %34 : vector<1x256xi32> to vector<1x256xi32>
    %36 = vector.broadcast %35 : vector<1x256xi32> to vector<16x256xi32>
    %c0_4 = arith.constant 0 : index
    %c0_5 = arith.constant 0 : index
    %37 = vector.load %arg3[%c0_4, %c0_5] : memref<16x256xf32, #tpu.memory_space<vmem>>, vector<16x256xf32>
    %38 = vector.shape_cast %36 : vector<16x256xi32> to vector<16x256x1xi32>
    %39 = vector.shape_cast %38 : vector<16x256x1xi32> to vector<16x256xi32>
    %40 = tpu.dynamic_gather %37[%39] in [1] : vector<16x256xf32>, vector<16x256xi32> -> vector<16x256xf32>
    %41 = tpu.concatenate %24, %20, %14 in 0 : vector<1x256xi32>, vector<1x256xi32>, vector<1x256xi32> -> vector<3x256xi32>
    %42 = arith.sitofp %41 : vector<3x256xi32> to vector<3x256xf32>
    %43 = vector.extract_strided_slice %40 {offsets = [0, 0], sizes = [3, 256], strides = [1, 1]} : vector<16x256xf32> to vector<3x256xf32>
    %44 = vector.broadcast %0 : f32 to vector<3x256xf32>
    %45 = arith.mulf %43, %44 : vector<3x256xf32>
    %46 = vector.broadcast %1 : f32 to vector<3x256xf32>
    %47 = arith.addf %45, %46 : vector<3x256xf32>
    %48 = vector.broadcast %2 : f32 to vector<3x256xf32>
    %49 = arith.mulf %42, %48 : vector<3x256xf32>
    %50 = vector.broadcast %3 : f32 to vector<3x256xf32>
    %51 = arith.addf %49, %50 : vector<3x256xf32>
    %52 = arith.addf %47, %51 : vector<3x256xf32>
    %53 = vector.extract_strided_slice %40 {offsets = [3, 0], sizes = [4, 256], strides = [1, 1]} : vector<16x256xf32> to vector<4x256xf32>
    %54 = vector.extract_strided_slice %40 {offsets = [7, 0], sizes = [3, 256], strides = [1, 1]} : vector<16x256xf32> to vector<3x256xf32>
    %55 = arith.negf %54 : vector<3x256xf32>
    %56 = math.exp %55 : vector<3x256xf32>
    %cst = arith.constant 1.000000e+00 : f32
    %57 = vector.broadcast %cst : f32 to vector<3x256xf32>
    %58 = arith.addf %57, %56 : vector<3x256xf32>
    %59 = arith.divf %57, %58 : vector<3x256xf32>
    %60 = vector.broadcast %2 : f32 to vector<3x256xf32>
    %61 = arith.mulf %59, %60 : vector<3x256xf32>
    %62 = vector.extract_strided_slice %40 {offsets = [10, 0], sizes = [3, 256], strides = [1, 1]} : vector<16x256xf32> to vector<3x256xf32>
    %63 = arith.negf %62 : vector<3x256xf32>
    %64 = math.exp %63 : vector<3x256xf32>
    %cst_6 = arith.constant 1.000000e+00 : f32
    %65 = vector.broadcast %cst_6 : f32 to vector<3x256xf32>
    %66 = arith.addf %65, %64 : vector<3x256xf32>
    %67 = arith.divf %65, %66 : vector<3x256xf32>
    %68 = vector.extract_strided_slice %40 {offsets = [13, 0], sizes = [1, 256], strides = [1, 1]} : vector<16x256xf32> to vector<1x256xf32>
    %cst_7 = arith.constant 4.000000e+00 : f32
    %69 = vector.broadcast %cst_7 : f32 to vector<1x256xf32>
    %70 = arith.subf %68, %69 : vector<1x256xf32>
    %71 = arith.negf %70 : vector<1x256xf32>
    %72 = math.exp %71 : vector<1x256xf32>
    %cst_8 = arith.constant 1.000000e+00 : f32
    %73 = vector.broadcast %cst_8 : f32 to vector<1x256xf32>
    %74 = arith.addf %73, %72 : vector<1x256xf32>
    %75 = arith.divf %73, %74 : vector<1x256xf32>
    %76 = vector.extract_strided_slice %40 {offsets = [14, 0], sizes = [1, 256], strides = [1, 1]} : vector<16x256xf32> to vector<1x256xf32>
    %77 = arith.negf %76 : vector<1x256xf32>
    %78 = math.exp %77 : vector<1x256xf32>
    %cst_9 = arith.constant 1.000000e+00 : f32
    %79 = vector.broadcast %cst_9 : f32 to vector<1x256xf32>
    %80 = arith.addf %79, %78 : vector<1x256xf32>
    %81 = arith.divf %79, %80 : vector<1x256xf32>
    %82 = vector.extract_strided_slice %53 {offsets = [0, 0], sizes = [1, 256], strides = [1, 1]} : vector<4x256xf32> to vector<1x256xf32>
    %83 = vector.extract_strided_slice %53 {offsets = [1, 0], sizes = [1, 256], strides = [1, 1]} : vector<4x256xf32> to vector<1x256xf32>
    %84 = vector.extract_strided_slice %53 {offsets = [2, 0], sizes = [1, 256], strides = [1, 1]} : vector<4x256xf32> to vector<1x256xf32>
    %85 = vector.extract_strided_slice %53 {offsets = [3, 0], sizes = [1, 256], strides = [1, 1]} : vector<4x256xf32> to vector<1x256xf32>
    %86 = vector.extract_strided_slice %61 {offsets = [0, 0], sizes = [1, 256], strides = [1, 1]} : vector<3x256xf32> to vector<1x256xf32>
    %87 = vector.extract_strided_slice %61 {offsets = [1, 0], sizes = [1, 256], strides = [1, 1]} : vector<3x256xf32> to vector<1x256xf32>
    %88 = vector.extract_strided_slice %61 {offsets = [2, 0], sizes = [1, 256], strides = [1, 1]} : vector<3x256xf32> to vector<1x256xf32>
    %89 = arith.mulf %82, %82 : vector<1x256xf32>
    %90 = arith.mulf %83, %83 : vector<1x256xf32>
    %91 = arith.addf %89, %90 : vector<1x256xf32>
    %92 = arith.mulf %84, %84 : vector<1x256xf32>
    %93 = arith.addf %91, %92 : vector<1x256xf32>
    %94 = arith.mulf %85, %85 : vector<1x256xf32>
    %95 = arith.addf %93, %94 : vector<1x256xf32>
    %cst_10 = arith.constant 9.99999996E-13 : f32
    %96 = vector.broadcast %cst_10 : f32 to vector<1x256xf32>
    %97 = arith.addf %95, %96 : vector<1x256xf32>
    %98 = math.rsqrt %97 : vector<1x256xf32>
    %99 = arith.mulf %82, %98 : vector<1x256xf32>
    %100 = arith.mulf %83, %98 : vector<1x256xf32>
    %101 = arith.mulf %84, %98 : vector<1x256xf32>
    %102 = arith.mulf %85, %98 : vector<1x256xf32>
    %103 = arith.mulf %101, %101 : vector<1x256xf32>
    %104 = arith.mulf %102, %102 : vector<1x256xf32>
    %105 = arith.addf %103, %104 : vector<1x256xf32>
    %cst_11 = arith.constant 2.000000e+00 : f32
    %106 = vector.broadcast %cst_11 : f32 to vector<1x256xf32>
    %107 = arith.mulf %106, %105 : vector<1x256xf32>
    %cst_12 = arith.constant 1.000000e+00 : f32
    %108 = vector.broadcast %cst_12 : f32 to vector<1x256xf32>
    %109 = arith.subf %108, %107 : vector<1x256xf32>
    %110 = arith.mulf %100, %101 : vector<1x256xf32>
    %111 = arith.mulf %99, %102 : vector<1x256xf32>
    %112 = arith.subf %110, %111 : vector<1x256xf32>
    %cst_13 = arith.constant 2.000000e+00 : f32
    %113 = vector.broadcast %cst_13 : f32 to vector<1x256xf32>
    %114 = arith.mulf %113, %112 : vector<1x256xf32>
    %115 = arith.mulf %100, %102 : vector<1x256xf32>
    %116 = arith.mulf %99, %101 : vector<1x256xf32>
    %117 = arith.addf %115, %116 : vector<1x256xf32>
    %cst_14 = arith.constant 2.000000e+00 : f32
    %118 = vector.broadcast %cst_14 : f32 to vector<1x256xf32>
    %119 = arith.mulf %118, %117 : vector<1x256xf32>
    %120 = arith.mulf %100, %101 : vector<1x256xf32>
    %121 = arith.mulf %99, %102 : vector<1x256xf32>
    %122 = arith.addf %120, %121 : vector<1x256xf32>
    %cst_15 = arith.constant 2.000000e+00 : f32
    %123 = vector.broadcast %cst_15 : f32 to vector<1x256xf32>
    %124 = arith.mulf %123, %122 : vector<1x256xf32>
    %125 = arith.mulf %100, %100 : vector<1x256xf32>
    %126 = arith.mulf %102, %102 : vector<1x256xf32>
    %127 = arith.addf %125, %126 : vector<1x256xf32>
    %cst_16 = arith.constant 2.000000e+00 : f32
    %128 = vector.broadcast %cst_16 : f32 to vector<1x256xf32>
    %129 = arith.mulf %128, %127 : vector<1x256xf32>
    %cst_17 = arith.constant 1.000000e+00 : f32
    %130 = vector.broadcast %cst_17 : f32 to vector<1x256xf32>
    %131 = arith.subf %130, %129 : vector<1x256xf32>
    %132 = arith.mulf %101, %102 : vector<1x256xf32>
    %133 = arith.mulf %99, %100 : vector<1x256xf32>
    %134 = arith.subf %132, %133 : vector<1x256xf32>
    %cst_18 = arith.constant 2.000000e+00 : f32
    %135 = vector.broadcast %cst_18 : f32 to vector<1x256xf32>
    %136 = arith.mulf %135, %134 : vector<1x256xf32>
    %137 = arith.mulf %100, %102 : vector<1x256xf32>
    %138 = arith.mulf %99, %101 : vector<1x256xf32>
    %139 = arith.subf %137, %138 : vector<1x256xf32>
    %cst_19 = arith.constant 2.000000e+00 : f32
    %140 = vector.broadcast %cst_19 : f32 to vector<1x256xf32>
    %141 = arith.mulf %140, %139 : vector<1x256xf32>
    %142 = arith.mulf %101, %102 : vector<1x256xf32>
    %143 = arith.mulf %99, %100 : vector<1x256xf32>
    %144 = arith.addf %142, %143 : vector<1x256xf32>
    %cst_20 = arith.constant 2.000000e+00 : f32
    %145 = vector.broadcast %cst_20 : f32 to vector<1x256xf32>
    %146 = arith.mulf %145, %144 : vector<1x256xf32>
    %147 = arith.mulf %100, %100 : vector<1x256xf32>
    %148 = arith.mulf %101, %101 : vector<1x256xf32>
    %149 = arith.addf %147, %148 : vector<1x256xf32>
    %cst_21 = arith.constant 2.000000e+00 : f32
    %150 = vector.broadcast %cst_21 : f32 to vector<1x256xf32>
    %151 = arith.mulf %150, %149 : vector<1x256xf32>
    %cst_22 = arith.constant 1.000000e+00 : f32
    %152 = vector.broadcast %cst_22 : f32 to vector<1x256xf32>
    %153 = arith.subf %152, %151 : vector<1x256xf32>
    %154 = arith.mulf %109, %86 : vector<1x256xf32>
    %155 = arith.mulf %114, %87 : vector<1x256xf32>
    %156 = arith.mulf %119, %88 : vector<1x256xf32>
    %157 = arith.mulf %124, %86 : vector<1x256xf32>
    %158 = arith.mulf %131, %87 : vector<1x256xf32>
    %159 = arith.mulf %136, %88 : vector<1x256xf32>
    %160 = arith.mulf %141, %86 : vector<1x256xf32>
    %161 = arith.mulf %146, %87 : vector<1x256xf32>
    %162 = arith.mulf %153, %88 : vector<1x256xf32>
    %163 = arith.mulf %154, %154 : vector<1x256xf32>
    %164 = arith.mulf %155, %155 : vector<1x256xf32>
    %165 = arith.addf %163, %164 : vector<1x256xf32>
    %166 = arith.mulf %156, %156 : vector<1x256xf32>
    %167 = arith.addf %165, %166 : vector<1x256xf32>
    %168 = arith.mulf %154, %157 : vector<1x256xf32>
    %169 = arith.mulf %155, %158 : vector<1x256xf32>
    %170 = arith.addf %168, %169 : vector<1x256xf32>
    %171 = arith.mulf %156, %159 : vector<1x256xf32>
    %172 = arith.addf %170, %171 : vector<1x256xf32>
    %173 = arith.mulf %154, %160 : vector<1x256xf32>
    %174 = arith.mulf %155, %161 : vector<1x256xf32>
    %175 = arith.addf %173, %174 : vector<1x256xf32>
    %176 = arith.mulf %156, %162 : vector<1x256xf32>
    %177 = arith.addf %175, %176 : vector<1x256xf32>
    %178 = arith.mulf %157, %157 : vector<1x256xf32>
    %179 = arith.mulf %158, %158 : vector<1x256xf32>
    %180 = arith.addf %178, %179 : vector<1x256xf32>
    %181 = arith.mulf %159, %159 : vector<1x256xf32>
    %182 = arith.addf %180, %181 : vector<1x256xf32>
    %183 = arith.mulf %157, %160 : vector<1x256xf32>
    %184 = arith.mulf %158, %161 : vector<1x256xf32>
    %185 = arith.addf %183, %184 : vector<1x256xf32>
    %186 = arith.mulf %159, %162 : vector<1x256xf32>
    %187 = arith.addf %185, %186 : vector<1x256xf32>
    %188 = arith.mulf %160, %160 : vector<1x256xf32>
    %189 = arith.mulf %161, %161 : vector<1x256xf32>
    %190 = arith.addf %188, %189 : vector<1x256xf32>
    %191 = arith.mulf %162, %162 : vector<1x256xf32>
    %192 = arith.addf %190, %191 : vector<1x256xf32>
    %193 = tpu.concatenate %167, %172, %177, %172, %182, %187, %177, %187, %192 in 0 : vector<1x256xf32>, vector<1x256xf32>, vector<1x256xf32>, vector<1x256xf32>, vector<1x256xf32>, vector<1x256xf32>, vector<1x256xf32>, vector<1x256xf32>, vector<1x256xf32> -> vector<9x256xf32>
    %cst_23 = arith.constant 1.000000e-01 : f32
    %194 = vector.broadcast %cst_23 : f32 to vector<1x256xf32>
    %195 = arith.cmpf oge, %75, %194 : vector<1x256xf32>
    %196 = arith.extui %195 : vector<1x256xi1> to vector<1x256xi32>
    %197 = arith.sitofp %196 : vector<1x256xi32> to vector<1x256xf32>
    %cst_24 = arith.constant 5.000000e-01 : f32
    %198 = vector.broadcast %cst_24 : f32 to vector<1x256xf32>
    %199 = arith.cmpf oge, %81, %198 : vector<1x256xf32>
    %200 = arith.extui %199 : vector<1x256xi1> to vector<1x256xi32>
    %201 = arith.sitofp %200 : vector<1x256xi32> to vector<1x256xf32>
    %202 = arith.mulf %197, %201 : vector<1x256xf32>
    %cst_25 = arith.constant 1.000000e+00 : f32
    %203 = vector.broadcast %cst_25 : f32 to vector<1x256xf32>
    %204 = arith.subf %203, %201 : vector<1x256xf32>
    %205 = arith.mulf %197, %204 : vector<1x256xf32>
    %206 = tpu.concatenate %202, %205 in 0 : vector<1x256xf32>, vector<1x256xf32> -> vector<2x256xf32>
    %c0_26 = arith.constant 0 : index
    %c0_27 = arith.constant 0 : index
    %207 = vector.load %arg4[%c0_26, %c0_27] : memref<18x256xf32, #tpu.memory_space<vmem>>, vector<3x256xf32>
    tpu.vector_store %arg4[%c0_26, %c0_27], %52 {strides = array<i32>} : memref<18x256xf32, #tpu.memory_space<vmem>>, vector<3x256xf32>,
    %c3_28 = arith.constant 3 : index
    %c0_29 = arith.constant 0 : index
    %208 = vector.load %arg4[%c3_28, %c0_29] : memref<18x256xf32, #tpu.memory_space<vmem>>, vector<9x256xf32>
    tpu.vector_store %arg4[%c3_28, %c0_29], %193 {strides = array<i32>} : memref<18x256xf32, #tpu.memory_space<vmem>>, vector<9x256xf32>,
    %209 = tpu.concatenate %67, %75 in 0 : vector<3x256xf32>, vector<1x256xf32> -> vector<4x256xf32>
    %c12 = arith.constant 12 : index
    %c0_30 = arith.constant 0 : index
    %210 = vector.load %arg4[%c12, %c0_30] : memref<18x256xf32, #tpu.memory_space<vmem>>, vector<4x256xf32>
    tpu.vector_store %arg4[%c12, %c0_30], %209 {strides = array<i32>} : memref<18x256xf32, #tpu.memory_space<vmem>>, vector<4x256xf32>,
    %c16 = arith.constant 16 : index
    %c0_31 = arith.constant 0 : index
    %211 = vector.load %arg4[%c16, %c0_31] : memref<18x256xf32, #tpu.memory_space<vmem>>, vector<2x256xf32>
    tpu.vector_store %arg4[%c16, %c0_31], %206 {strides = array<i32>} : memref<18x256xf32, #tpu.memory_space<vmem>>, vector<2x256xf32>,
    return
  }
  func.func @transform_0(%arg0: i32) -> i32 {
    %c0_i32 = arith.constant 0 : i32
    %c0_i32_0 = arith.constant 0 : i32
    return %c0_i32 : i32
  }
  func.func @transform_1(%arg0: i32) -> i32 {
    %c0_i32 = arith.constant 0 : i32
    %c0_i32_0 = arith.constant 0 : i32
    return %c0_i32 : i32
  }
  func.func @transform_2(%arg0: i32) -> (i32, i32) {
    %c0_i32 = arith.constant 0 : i32
    %c0_i32_0 = arith.constant 0 : i32
    %c0_i32_1 = arith.constant 0 : i32
    return %c0_i32, %c0_i32_0 : i32, i32
  }
  func.func @transform_3(%arg0: i32) -> (i32, i32) {
    %c0_i32 = arith.constant 0 : i32
    %c0_i32_0 = arith.constant 0 : i32
    return %c0_i32, %arg0 : i32, i32
  }
}

module attributes {stable_mosaic.version = 11 : i64} {
  func.func @_voxel_gaussian_kernel(%arg0: i32, %arg1: memref<4xf32, #tpu.memory_space<smem>>, %arg2: memref<3xi32, #tpu.memory_space<smem>>, %arg3: memref<16x256xf32, #tpu.memory_space<vmem>>, %arg4: memref<18x256xf32, #tpu.memory_space<vmem>>) attributes {dimension_semantics = [#tpu.dimension_semantics<parallel>], iteration_bounds = array<i64: 2>, scalar_prefetch = 0 : i64, scratch_operands = 0 : i64, tpu.core_type = #tpu.core_type<tc>, window_params = [{transform_indices = @transform_0, window_bounds = array<i64: 4>}, {transform_indices = @transform_1, window_bounds = array<i64: 3>}, {pipeline_mode = #tpu.pipeline_mode<synchronous>, transform_indices = @transform_2, window_bounds = array<i64: 16, 256>}, {transform_indices = @transform_3, window_bounds = array<i64: 18, 256>}]} {
    %c0 = arith.constant 0 : index
    %0 = memref.load %arg1[%c0] : memref<4xf32, #tpu.memory_space<smem>>
    %c1 = arith.constant 1 : index
    %1 = memref.load %arg1[%c1] : memref<4xf32, #tpu.memory_space<smem>>
    %c2 = arith.constant 2 : index
    %2 = memref.load %arg1[%c2] : memref<4xf32, #tpu.memory_space<smem>>
    %c3 = arith.constant 3 : index
    %3 = memref.load %arg1[%c3] : memref<4xf32, #tpu.memory_space<smem>>
    %c0_0 = arith.constant 0 : index
    %4 = memref.load %arg2[%c0_0] : memref<3xi32, #tpu.memory_space<smem>>
    %c1_1 = arith.constant 1 : index
    %5 = memref.load %arg2[%c1_1] : memref<3xi32, #tpu.memory_space<smem>>
    %c2_2 = arith.constant 2 : index
    %6 = memref.load %arg2[%c2_2] : memref<3xi32, #tpu.memory_space<smem>>
    %c256_i32 = arith.constant 256 : i32
    %7 = arith.muli %arg0, %c256_i32 : i32
    %8 = tpu.iota {dimensions = array<i32: 1>} : vector<1x256xi32>
    %9 = vector.broadcast %7 : i32 to vector<1x256xi32>
    %10 = arith.addi %9, %8 : vector<1x256xi32>
    %c7_i32 = arith.constant 7 : i32
    %11 = vector.broadcast %c7_i32 : i32 to vector<1x256xi32>
    %12 = arith.andi %10, %11 : vector<1x256xi32>
    %13 = vector.broadcast %6 : i32 to vector<1x256xi32>
    %14 = arith.addi %12, %13 : vector<1x256xi32>
    %c3_i32 = arith.constant 3 : i32
    %15 = vector.broadcast %c3_i32 : i32 to vector<1x256xi32>
    %16 = arith.shrsi %10, %15 : vector<1x256xi32>
    %c7_i32_3 = arith.constant 7 : i32
    %17 = vector.broadcast %c7_i32_3 : i32 to vector<1x256xi32>
    %18 = arith.andi %16, %17 : vector<1x256xi32>
    %19 = vector.broadcast %5 : i32 to vector<1x256xi32>
    %20 = arith.addi %18, %19 : vector<1x256xi32>
    %c6_i32 = arith.constant 6 : i32
    %21 = vector.broadcast %c6_i32 : i32 to vector<1x256xi32>
    %22 = arith.shrsi %10, %21 : vector<1x256xi32>
    %23 = vector.broadcast %4 : i32 to vector<1x256xi32>
    %24 = arith.addi %22, %23 : vector<1x256xi32>
    %c1_i32 = arith.constant 1 : i32
    %25 = vector.broadcast %c1_i32 : i32 to vector<1x256xi32>
    %26 = arith.muli %24, %25 : vector<1x256xi32>
    %c-1640531535_i32 = arith.constant -1640531535 : i32
    %27 = vector.broadcast %c-1640531535_i32 : i32 to vector<1x256xi32>
    %28 = arith.muli %20, %27 : vector<1x256xi32>
    %29 = arith.xori %26, %28 : vector<1x256xi32>
    %c805459861_i32 = arith.constant 805459861 : i32
    %30 = vector.broadcast %c805459861_i32 : i32 to vector<1x256xi32>
    %31 = arith.muli %14, %30 : vector<1x256xi32>
    %32 = arith.xori %29, %31 : vector<1x256xi32>
    %c255_i32 = arith.constant 255 : i32
    %33 = vector.broadcast %c255_i32 : i32 to vector<1x256xi32>
    %34 = arith.andi %32, %33 : vector<1x256xi32>
    %35 = vector.shape_cast %34 : vector<1x256xi32> to vector<1x256xi32>
    %36 = vector.broadcast %35 : vector<1x256xi32> to vector<16x256xi32>
    %c0_4 = arith.constant 0 : index
    %c0_5 = arith.constant 0 : index
    %37 = vector.load %arg3[%c0_4, %c0_5] : memref<16x256xf32, #tpu.memory_space<vmem>>, vector<16x256xf32>
    %38 = vector.shape_cast %36 : vector<16x256xi32> to vector<16x256x1xi32>
    %39 = vector.shape_cast %38 : vector<16x256x1xi32> to vector<16x256xi32>
    %40 = tpu.dynamic_gather %37[%39] in [1] : vector<16x256xf32>, vector<16x256xi32> -> vector<16x256xf32>
    %41 = tpu.concatenate %24, %20, %14 in 0 : vector<1x256xi32>, vector<1x256xi32>, vector<1x256xi32> -> vector<3x256xi32>
    %42 = arith.sitofp %41 : vector<3x256xi32> to vector<3x256xf32>
    %43 = vector.extract_strided_slice %40 {offsets = [0, 0], sizes = [3, 256], strides = [1, 1]} : vector<16x256xf32> to vector<3x256xf32>
    %44 = vector.broadcast %0 : f32 to vector<3x256xf32>
    %45 = arith.mulf %43, %44 : vector<3x256xf32>
    %46 = vector.broadcast %1 : f32 to vector<3x256xf32>
    %47 = arith.addf %45, %46 : vector<3x256xf32>
    %48 = vector.broadcast %2 : f32 to vector<3x256xf32>
    %49 = arith.mulf %42, %48 : vector<3x256xf32>
    %50 = vector.broadcast %3 : f32 to vector<3x256xf32>
    %51 = arith.addf %49, %50 : vector<3x256xf32>
    %52 = arith.addf %47, %51 : vector<3x256xf32>
    %53 = vector.extract_strided_slice %40 {offsets = [3, 0], sizes = [4, 256], strides = [1, 1]} : vector<16x256xf32> to vector<4x256xf32>
    %54 = vector.extract_strided_slice %40 {offsets = [7, 0], sizes = [3, 256], strides = [1, 1]} : vector<16x256xf32> to vector<3x256xf32>
    %55 = arith.negf %54 : vector<3x256xf32>
    %56 = math.exp %55 : vector<3x256xf32>
    %cst = arith.constant 1.000000e+00 : f32
    %57 = vector.broadcast %cst : f32 to vector<3x256xf32>
    %58 = arith.addf %57, %56 : vector<3x256xf32>
    %59 = arith.divf %57, %58 : vector<3x256xf32>
    %60 = vector.broadcast %2 : f32 to vector<3x256xf32>
    %61 = arith.mulf %59, %60 : vector<3x256xf32>
    %62 = vector.extract_strided_slice %40 {offsets = [10, 0], sizes = [3, 256], strides = [1, 1]} : vector<16x256xf32> to vector<3x256xf32>
    %63 = arith.negf %62 : vector<3x256xf32>
    %64 = math.exp %63 : vector<3x256xf32>
    %cst_6 = arith.constant 1.000000e+00 : f32
    %65 = vector.broadcast %cst_6 : f32 to vector<3x256xf32>
    %66 = arith.addf %65, %64 : vector<3x256xf32>
    %67 = arith.divf %65, %66 : vector<3x256xf32>
    %68 = vector.extract_strided_slice %40 {offsets = [13, 0], sizes = [1, 256], strides = [1, 1]} : vector<16x256xf32> to vector<1x256xf32>
    %cst_7 = arith.constant 4.000000e+00 : f32
    %69 = vector.broadcast %cst_7 : f32 to vector<1x256xf32>
    %70 = arith.subf %68, %69 : vector<1x256xf32>
    %71 = arith.negf %70 : vector<1x256xf32>
    %72 = math.exp %71 : vector<1x256xf32>
    %cst_8 = arith.constant 1.000000e+00 : f32
    %73 = vector.broadcast %cst_8 : f32 to vector<1x256xf32>
    %74 = arith.addf %73, %72 : vector<1x256xf32>
    %75 = arith.divf %73, %74 : vector<1x256xf32>
    %76 = vector.extract_strided_slice %40 {offsets = [14, 0], sizes = [1, 256], strides = [1, 1]} : vector<16x256xf32> to vector<1x256xf32>
    %77 = arith.negf %76 : vector<1x256xf32>
    %78 = math.exp %77 : vector<1x256xf32>
    %cst_9 = arith.constant 1.000000e+00 : f32
    %79 = vector.broadcast %cst_9 : f32 to vector<1x256xf32>
    %80 = arith.addf %79, %78 : vector<1x256xf32>
    %81 = arith.divf %79, %80 : vector<1x256xf32>
    %82 = vector.extract_strided_slice %53 {offsets = [0, 0], sizes = [1, 256], strides = [1, 1]} : vector<4x256xf32> to vector<1x256xf32>
    %83 = vector.extract_strided_slice %53 {offsets = [1, 0], sizes = [1, 256], strides = [1, 1]} : vector<4x256xf32> to vector<1x256xf32>
    %84 = vector.extract_strided_slice %53 {offsets = [2, 0], sizes = [1, 256], strides = [1, 1]} : vector<4x256xf32> to vector<1x256xf32>
    %85 = vector.extract_strided_slice %53 {offsets = [3, 0], sizes = [1, 256], strides = [1, 1]} : vector<4x256xf32> to vector<1x256xf32>
    %86 = vector.extract_strided_slice %61 {offsets = [0, 0], sizes = [1, 256], strides = [1, 1]} : vector<3x256xf32> to vector<1x256xf32>
    %87 = vector.extract_strided_slice %61 {offsets = [1, 0], sizes = [1, 256], strides = [1, 1]} : vector<3x256xf32> to vector<1x256xf32>
    %88 = vector.extract_strided_slice %61 {offsets = [2, 0], sizes = [1, 256], strides = [1, 1]} : vector<3x256xf32> to vector<1x256xf32>
    %89 = arith.mulf %82, %82 : vector<1x256xf32>
    %90 = arith.mulf %83, %83 : vector<1x256xf32>
    %91 = arith.addf %89, %90 : vector<1x256xf32>
    %92 = arith.mulf %84, %84 : vector<1x256xf32>
    %93 = arith.addf %91, %92 : vector<1x256xf32>
    %94 = arith.mulf %85, %85 : vector<1x256xf32>
    %95 = arith.addf %93, %94 : vector<1x256xf32>
    %cst_10 = arith.constant 9.99999996E-13 : f32
    %96 = vector.broadcast %cst_10 : f32 to vector<1x256xf32>
    %97 = arith.addf %95, %96 : vector<1x256xf32>
    %98 = math.rsqrt %97 : vector<1x256xf32>
    %99 = arith.mulf %82, %98 : vector<1x256xf32>
    %100 = arith.mulf %83, %98 : vector<1x256xf32>
    %101 = arith.mulf %84, %98 : vector<1x256xf32>
    %102 = arith.mulf %85, %98 : vector<1x256xf32>
    %103 = arith.mulf %101, %101 : vector<1x256xf32>
    %104 = arith.mulf %102, %102 : vector<1x256xf32>
    %105 = arith.addf %103, %104 : vector<1x256xf32>
    %cst_11 = arith.constant 2.000000e+00 : f32
    %106 = vector.broadcast %cst_11 : f32 to vector<1x256xf32>
    %107 = arith.mulf %106, %105 : vector<1x256xf32>
    %cst_12 = arith.constant 1.000000e+00 : f32
    %108 = vector.broadcast %cst_12 : f32 to vector<1x256xf32>
    %109 = arith.subf %108, %107 : vector<1x256xf32>
    %110 = arith.mulf %100, %101 : vector<1x256xf32>
    %111 = arith.mulf %99, %102 : vector<1x256xf32>
    %112 = arith.subf %110, %111 : vector<1x256xf32>
    %cst_13 = arith.constant 2.000000e+00 : f32
    %113 = vector.broadcast %cst_13 : f32 to vector<1x256xf32>
    %114 = arith.mulf %113, %112 : vector<1x256xf32>
    %115 = arith.mulf %100, %102 : vector<1x256xf32>
    %116 = arith.mulf %99, %101 : vector<1x256xf32>
    %117 = arith.addf %115, %116 : vector<1x256xf32>
    %cst_14 = arith.constant 2.000000e+00 : f32
    %118 = vector.broadcast %cst_14 : f32 to vector<1x256xf32>
    %119 = arith.mulf %118, %117 : vector<1x256xf32>
    %120 = arith.mulf %100, %101 : vector<1x256xf32>
    %121 = arith.mulf %99, %102 : vector<1x256xf32>
    %122 = arith.addf %120, %121 : vector<1x256xf32>
    %cst_15 = arith.constant 2.000000e+00 : f32
    %123 = vector.broadcast %cst_15 : f32 to vector<1x256xf32>
    %124 = arith.mulf %123, %122 : vector<1x256xf32>
    %125 = arith.mulf %100, %100 : vector<1x256xf32>
    %126 = arith.mulf %102, %102 : vector<1x256xf32>
    %127 = arith.addf %125, %126 : vector<1x256xf32>
    %cst_16 = arith.constant 2.000000e+00 : f32
    %128 = vector.broadcast %cst_16 : f32 to vector<1x256xf32>
    %129 = arith.mulf %128, %127 : vector<1x256xf32>
    %cst_17 = arith.constant 1.000000e+00 : f32
    %130 = vector.broadcast %cst_17 : f32 to vector<1x256xf32>
    %131 = arith.subf %130, %129 : vector<1x256xf32>
    %132 = arith.mulf %101, %102 : vector<1x256xf32>
    %133 = arith.mulf %99, %100 : vector<1x256xf32>
    %134 = arith.subf %132, %133 : vector<1x256xf32>
    %cst_18 = arith.constant 2.000000e+00 : f32
    %135 = vector.broadcast %cst_18 : f32 to vector<1x256xf32>
    %136 = arith.mulf %135, %134 : vector<1x256xf32>
    %137 = arith.mulf %100, %102 : vector<1x256xf32>
    %138 = arith.mulf %99, %101 : vector<1x256xf32>
    %139 = arith.subf %137, %138 : vector<1x256xf32>
    %cst_19 = arith.constant 2.000000e+00 : f32
    %140 = vector.broadcast %cst_19 : f32 to vector<1x256xf32>
    %141 = arith.mulf %140, %139 : vector<1x256xf32>
    %142 = arith.mulf %101, %102 : vector<1x256xf32>
    %143 = arith.mulf %99, %100 : vector<1x256xf32>
    %144 = arith.addf %142, %143 : vector<1x256xf32>
    %cst_20 = arith.constant 2.000000e+00 : f32
    %145 = vector.broadcast %cst_20 : f32 to vector<1x256xf32>
    %146 = arith.mulf %145, %144 : vector<1x256xf32>
    %147 = arith.mulf %100, %100 : vector<1x256xf32>
    %148 = arith.mulf %101, %101 : vector<1x256xf32>
    %149 = arith.addf %147, %148 : vector<1x256xf32>
    %cst_21 = arith.constant 2.000000e+00 : f32
    %150 = vector.broadcast %cst_21 : f32 to vector<1x256xf32>
    %151 = arith.mulf %150, %149 : vector<1x256xf32>
    %cst_22 = arith.constant 1.000000e+00 : f32
    %152 = vector.broadcast %cst_22 : f32 to vector<1x256xf32>
    %153 = arith.subf %152, %151 : vector<1x256xf32>
    %154 = arith.mulf %109, %86 : vector<1x256xf32>
    %155 = arith.mulf %114, %87 : vector<1x256xf32>
    %156 = arith.mulf %119, %88 : vector<1x256xf32>
    %157 = arith.mulf %124, %86 : vector<1x256xf32>
    %158 = arith.mulf %131, %87 : vector<1x256xf32>
    %159 = arith.mulf %136, %88 : vector<1x256xf32>
    %160 = arith.mulf %141, %86 : vector<1x256xf32>
    %161 = arith.mulf %146, %87 : vector<1x256xf32>
    %162 = arith.mulf %153, %88 : vector<1x256xf32>
    %163 = arith.mulf %154, %154 : vector<1x256xf32>
    %164 = arith.mulf %155, %155 : vector<1x256xf32>
    %165 = arith.addf %163, %164 : vector<1x256xf32>
    %166 = arith.mulf %156, %156 : vector<1x256xf32>
    %167 = arith.addf %165, %166 : vector<1x256xf32>
    %168 = arith.mulf %154, %157 : vector<1x256xf32>
    %169 = arith.mulf %155, %158 : vector<1x256xf32>
    %170 = arith.addf %168, %169 : vector<1x256xf32>
    %171 = arith.mulf %156, %159 : vector<1x256xf32>
    %172 = arith.addf %170, %171 : vector<1x256xf32>
    %173 = arith.mulf %154, %160 : vector<1x256xf32>
    %174 = arith.mulf %155, %161 : vector<1x256xf32>
    %175 = arith.addf %173, %174 : vector<1x256xf32>
    %176 = arith.mulf %156, %162 : vector<1x256xf32>
    %177 = arith.addf %175, %176 : vector<1x256xf32>
    %178 = arith.mulf %157, %157 : vector<1x256xf32>
    %179 = arith.mulf %158, %158 : vector<1x256xf32>
    %180 = arith.addf %178, %179 : vector<1x256xf32>
    %181 = arith.mulf %159, %159 : vector<1x256xf32>
    %182 = arith.addf %180, %181 : vector<1x256xf32>
    %183 = arith.mulf %157, %160 : vector<1x256xf32>
    %184 = arith.mulf %158, %161 : vector<1x256xf32>
    %185 = arith.addf %183, %184 : vector<1x256xf32>
    %186 = arith.mulf %159, %162 : vector<1x256xf32>
    %187 = arith.addf %185, %186 : vector<1x256xf32>
    %188 = arith.mulf %160, %160 : vector<1x256xf32>
    %189 = arith.mulf %161, %161 : vector<1x256xf32>
    %190 = arith.addf %188, %189 : vector<1x256xf32>
    %191 = arith.mulf %162, %162 : vector<1x256xf32>
    %192 = arith.addf %190, %191 : vector<1x256xf32>
    %193 = tpu.concatenate %167, %172, %177, %172, %182, %187, %177, %187, %192 in 0 : vector<1x256xf32>, vector<1x256xf32>, vector<1x256xf32>, vector<1x256xf32>, vector<1x256xf32>, vector<1x256xf32>, vector<1x256xf32>, vector<1x256xf32>, vector<1x256xf32> -> vector<9x256xf32>
    %cst_23 = arith.constant 1.000000e-01 : f32
    %194 = vector.broadcast %cst_23 : f32 to vector<1x256xf32>
    %195 = arith.cmpf oge, %75, %194 : vector<1x256xf32>
    %196 = arith.extui %195 : vector<1x256xi1> to vector<1x256xi32>
    %197 = arith.sitofp %196 : vector<1x256xi32> to vector<1x256xf32>
    %cst_24 = arith.constant 5.000000e-01 : f32
    %198 = vector.broadcast %cst_24 : f32 to vector<1x256xf32>
    %199 = arith.cmpf oge, %81, %198 : vector<1x256xf32>
    %200 = arith.extui %199 : vector<1x256xi1> to vector<1x256xi32>
    %201 = arith.sitofp %200 : vector<1x256xi32> to vector<1x256xf32>
    %202 = arith.mulf %197, %201 : vector<1x256xf32>
    %cst_25 = arith.constant 1.000000e+00 : f32
    %203 = vector.broadcast %cst_25 : f32 to vector<1x256xf32>
    %204 = arith.subf %203, %201 : vector<1x256xf32>
    %205 = arith.mulf %197, %204 : vector<1x256xf32>
    %206 = tpu.concatenate %202, %205 in 0 : vector<1x256xf32>, vector<1x256xf32> -> vector<2x256xf32>
    %c0_26 = arith.constant 0 : index
    %c0_27 = arith.constant 0 : index
    %207 = vector.load %arg4[%c0_26, %c0_27] : memref<18x256xf32, #tpu.memory_space<vmem>>, vector<3x256xf32>
    tpu.vector_store %arg4[%c0_26, %c0_27], %52 {strides = array<i32>} : memref<18x256xf32, #tpu.memory_space<vmem>>, vector<3x256xf32>,
    %c3_28 = arith.constant 3 : index
    %c0_29 = arith.constant 0 : index
    %208 = vector.load %arg4[%c3_28, %c0_29] : memref<18x256xf32, #tpu.memory_space<vmem>>, vector<9x256xf32>
    tpu.vector_store %arg4[%c3_28, %c0_29], %193 {strides = array<i32>} : memref<18x256xf32, #tpu.memory_space<vmem>>, vector<9x256xf32>,
    %209 = tpu.concatenate %67, %75 in 0 : vector<3x256xf32>, vector<1x256xf32> -> vector<4x256xf32>
    %c12 = arith.constant 12 : index
    %c0_30 = arith.constant 0 : index
    %210 = vector.load %arg4[%c12, %c0_30] : memref<18x256xf32, #tpu.memory_space<vmem>>, vector<4x256xf32>
    tpu.vector_store %arg4[%c12, %c0_30], %209 {strides = array<i32>} : memref<18x256xf32, #tpu.memory_space<vmem>>, vector<4x256xf32>,
    %c16 = arith.constant 16 : index
    %c0_31 = arith.constant 0 : index
    %211 = vector.load %arg4[%c16, %c0_31] : memref<18x256xf32, #tpu.memory_space<vmem>>, vector<2x256xf32>
    tpu.vector_store %arg4[%c16, %c0_31], %206 {strides = array<i32>} : memref<18x256xf32, #tpu.memory_space<vmem>>, vector<2x256xf32>,
    return
  }
  func.func @transform_0(%arg0: i32) -> i32 {
    %c0_i32 = arith.constant 0 : i32
    %c0_i32_0 = arith.constant 0 : i32
    return %c0_i32 : i32
  }
  func.func @transform_1(%arg0: i32) -> i32 {
    %c0_i32 = arith.constant 0 : i32
    %c0_i32_0 = arith.constant 0 : i32
    return %c0_i32 : i32
  }
  func.func @transform_2(%arg0: i32) -> (i32, i32) {
    %c0_i32 = arith.constant 0 : i32
    %c0_i32_0 = arith.constant 0 : i32
    %c0_i32_1 = arith.constant 0 : i32
    return %c0_i32, %c0_i32_0 : i32, i32
  }
  func.func @transform_3(%arg0: i32) -> (i32, i32) {
    %c0_i32 = arith.constant 0 : i32
    %c0_i32_0 = arith.constant 0 : i32
    return %c0_i32, %arg0 : i32, i32
  }
}

module attributes {stable_mosaic.version = 11 : i64} {
  func.func @_voxel_gaussian_kernel(%arg0: i32, %arg1: memref<4xf32, #tpu.memory_space<smem>>, %arg2: memref<3xi32, #tpu.memory_space<smem>>, %arg3: memref<32x256xbf16, #tpu.memory_space<vmem>>, %arg4: memref<18x256xf32, #tpu.memory_space<vmem>>) attributes {dimension_semantics = [#tpu.dimension_semantics<parallel>], iteration_bounds = array<i64: 2>, scalar_prefetch = 0 : i64, scratch_operands = 0 : i64, tpu.core_type = #tpu.core_type<tc>, window_params = [{transform_indices = @transform_0, window_bounds = array<i64: 4>}, {transform_indices = @transform_1, window_bounds = array<i64: 3>}, {pipeline_mode = #tpu.pipeline_mode<synchronous>, transform_indices = @transform_2, window_bounds = array<i64: 32, 256>}, {transform_indices = @transform_3, window_bounds = array<i64: 18, 256>}]} {
    %c0 = arith.constant 0 : index
    %0 = memref.load %arg1[%c0] : memref<4xf32, #tpu.memory_space<smem>>
    %c1 = arith.constant 1 : index
    %1 = memref.load %arg1[%c1] : memref<4xf32, #tpu.memory_space<smem>>
    %c2 = arith.constant 2 : index
    %2 = memref.load %arg1[%c2] : memref<4xf32, #tpu.memory_space<smem>>
    %c3 = arith.constant 3 : index
    %3 = memref.load %arg1[%c3] : memref<4xf32, #tpu.memory_space<smem>>
    %c0_0 = arith.constant 0 : index
    %4 = memref.load %arg2[%c0_0] : memref<3xi32, #tpu.memory_space<smem>>
    %c1_1 = arith.constant 1 : index
    %5 = memref.load %arg2[%c1_1] : memref<3xi32, #tpu.memory_space<smem>>
    %c2_2 = arith.constant 2 : index
    %6 = memref.load %arg2[%c2_2] : memref<3xi32, #tpu.memory_space<smem>>
    %c256_i32 = arith.constant 256 : i32
    %7 = arith.muli %arg0, %c256_i32 : i32
    %8 = tpu.iota {dimensions = array<i32: 1>} : vector<1x256xi32>
    %9 = vector.broadcast %7 : i32 to vector<1x256xi32>
    %10 = arith.addi %9, %8 : vector<1x256xi32>
    %c7_i32 = arith.constant 7 : i32
    %11 = vector.broadcast %c7_i32 : i32 to vector<1x256xi32>
    %12 = arith.andi %10, %11 : vector<1x256xi32>
    %13 = vector.broadcast %6 : i32 to vector<1x256xi32>
    %14 = arith.addi %12, %13 : vector<1x256xi32>
    %c3_i32 = arith.constant 3 : i32
    %15 = vector.broadcast %c3_i32 : i32 to vector<1x256xi32>
    %16 = arith.shrsi %10, %15 : vector<1x256xi32>
    %c7_i32_3 = arith.constant 7 : i32
    %17 = vector.broadcast %c7_i32_3 : i32 to vector<1x256xi32>
    %18 = arith.andi %16, %17 : vector<1x256xi32>
    %19 = vector.broadcast %5 : i32 to vector<1x256xi32>
    %20 = arith.addi %18, %19 : vector<1x256xi32>
    %c6_i32 = arith.constant 6 : i32
    %21 = vector.broadcast %c6_i32 : i32 to vector<1x256xi32>
    %22 = arith.shrsi %10, %21 : vector<1x256xi32>
    %23 = vector.broadcast %4 : i32 to vector<1x256xi32>
    %24 = arith.addi %22, %23 : vector<1x256xi32>
    %c1_i32 = arith.constant 1 : i32
    %25 = vector.broadcast %c1_i32 : i32 to vector<1x256xi32>
    %26 = arith.muli %24, %25 : vector<1x256xi32>
    %c-1640531535_i32 = arith.constant -1640531535 : i32
    %27 = vector.broadcast %c-1640531535_i32 : i32 to vector<1x256xi32>
    %28 = arith.muli %20, %27 : vector<1x256xi32>
    %29 = arith.xori %26, %28 : vector<1x256xi32>
    %c805459861_i32 = arith.constant 805459861 : i32
    %30 = vector.broadcast %c805459861_i32 : i32 to vector<1x256xi32>
    %31 = arith.muli %14, %30 : vector<1x256xi32>
    %32 = arith.xori %29, %31 : vector<1x256xi32>
    %c255_i32 = arith.constant 255 : i32
    %33 = vector.broadcast %c255_i32 : i32 to vector<1x256xi32>
    %34 = arith.andi %32, %33 : vector<1x256xi32>
    %35 = tpu.iota {dimensions = array<i32: 0>} : vector<256x256xi32>
    %36 = vector.broadcast %34 : vector<1x256xi32> to vector<256x256xi32>
    %37 = arith.cmpi eq, %35, %36 : vector<256x256xi32>
    %38 = arith.extui %37 : vector<256x256xi1> to vector<256x256xi32>
    %39 = arith.sitofp %38 : vector<256x256xi32> to vector<256x256xf32>
    %40 = arith.truncf %39 : vector<256x256xf32> to vector<256x256xbf16>
    %c0_4 = arith.constant 0 : index
    %c0_5 = arith.constant 0 : index
    %41 = vector.load %arg3[%c0_4, %c0_5] : memref<32x256xbf16, #tpu.memory_space<vmem>>, vector<32x256xbf16>
    %cst = arith.constant dense<0.000000e+00> : vector<32x256xf32>
    %42 = tpu.matmul %41, %40, %cst {dimension_numbers = #tpu.dot_dimension_numbers<[1], [0], [0], [1], [0, 0, 1, 1], [], []>} : vector<32x256xbf16>, vector<256x256xbf16>, vector<32x256xf32> -> vector<32x256xf32>
    %43 = vector.extract_strided_slice %42 {offsets = [0, 0], sizes = [16, 256], strides = [1, 1]} : vector<32x256xf32> to vector<16x256xf32>
    %44 = vector.extract_strided_slice %42 {offsets = [16, 0], sizes = [16, 256], strides = [1, 1]} : vector<32x256xf32> to vector<16x256xf32>
    %45 = arith.addf %43, %44 : vector<16x256xf32>
    %46 = tpu.concatenate %24, %20, %14 in 0 : vector<1x256xi32>, vector<1x256xi32>, vector<1x256xi32> -> vector<3x256xi32>
    %47 = arith.sitofp %46 : vector<3x256xi32> to vector<3x256xf32>
    %48 = vector.extract_strided_slice %45 {offsets = [0, 0], sizes = [3, 256], strides = [1, 1]} : vector<16x256xf32> to vector<3x256xf32>
    %49 = vector.broadcast %0 : f32 to vector<3x256xf32>
    %50 = arith.mulf %48, %49 : vector<3x256xf32>
    %51 = vector.broadcast %1 : f32 to vector<3x256xf32>
    %52 = arith.addf %50, %51 : vector<3x256xf32>
    %53 = vector.broadcast %2 : f32 to vector<3x256xf32>
    %54 = arith.mulf %47, %53 : vector<3x256xf32>
    %55 = vector.broadcast %3 : f32 to vector<3x256xf32>
    %56 = arith.addf %54, %55 : vector<3x256xf32>
    %57 = arith.addf %52, %56 : vector<3x256xf32>
    %58 = vector.extract_strided_slice %45 {offsets = [3, 0], sizes = [4, 256], strides = [1, 1]} : vector<16x256xf32> to vector<4x256xf32>
    %59 = vector.extract_strided_slice %45 {offsets = [7, 0], sizes = [3, 256], strides = [1, 1]} : vector<16x256xf32> to vector<3x256xf32>
    %60 = arith.negf %59 : vector<3x256xf32>
    %61 = math.exp %60 : vector<3x256xf32>
    %cst_6 = arith.constant 1.000000e+00 : f32
    %62 = vector.broadcast %cst_6 : f32 to vector<3x256xf32>
    %63 = arith.addf %62, %61 : vector<3x256xf32>
    %64 = arith.divf %62, %63 : vector<3x256xf32>
    %65 = vector.broadcast %2 : f32 to vector<3x256xf32>
    %66 = arith.mulf %64, %65 : vector<3x256xf32>
    %67 = vector.extract_strided_slice %45 {offsets = [10, 0], sizes = [3, 256], strides = [1, 1]} : vector<16x256xf32> to vector<3x256xf32>
    %68 = arith.negf %67 : vector<3x256xf32>
    %69 = math.exp %68 : vector<3x256xf32>
    %cst_7 = arith.constant 1.000000e+00 : f32
    %70 = vector.broadcast %cst_7 : f32 to vector<3x256xf32>
    %71 = arith.addf %70, %69 : vector<3x256xf32>
    %72 = arith.divf %70, %71 : vector<3x256xf32>
    %73 = vector.extract_strided_slice %45 {offsets = [13, 0], sizes = [1, 256], strides = [1, 1]} : vector<16x256xf32> to vector<1x256xf32>
    %cst_8 = arith.constant 4.000000e+00 : f32
    %74 = vector.broadcast %cst_8 : f32 to vector<1x256xf32>
    %75 = arith.subf %73, %74 : vector<1x256xf32>
    %76 = arith.negf %75 : vector<1x256xf32>
    %77 = math.exp %76 : vector<1x256xf32>
    %cst_9 = arith.constant 1.000000e+00 : f32
    %78 = vector.broadcast %cst_9 : f32 to vector<1x256xf32>
    %79 = arith.addf %78, %77 : vector<1x256xf32>
    %80 = arith.divf %78, %79 : vector<1x256xf32>
    %81 = vector.extract_strided_slice %45 {offsets = [14, 0], sizes = [1, 256], strides = [1, 1]} : vector<16x256xf32> to vector<1x256xf32>
    %82 = arith.negf %81 : vector<1x256xf32>
    %83 = math.exp %82 : vector<1x256xf32>
    %cst_10 = arith.constant 1.000000e+00 : f32
    %84 = vector.broadcast %cst_10 : f32 to vector<1x256xf32>
    %85 = arith.addf %84, %83 : vector<1x256xf32>
    %86 = arith.divf %84, %85 : vector<1x256xf32>
    %87 = vector.extract_strided_slice %58 {offsets = [0, 0], sizes = [1, 256], strides = [1, 1]} : vector<4x256xf32> to vector<1x256xf32>
    %88 = vector.extract_strided_slice %58 {offsets = [1, 0], sizes = [1, 256], strides = [1, 1]} : vector<4x256xf32> to vector<1x256xf32>
    %89 = vector.extract_strided_slice %58 {offsets = [2, 0], sizes = [1, 256], strides = [1, 1]} : vector<4x256xf32> to vector<1x256xf32>
    %90 = vector.extract_strided_slice %58 {offsets = [3, 0], sizes = [1, 256], strides = [1, 1]} : vector<4x256xf32> to vector<1x256xf32>
    %91 = vector.extract_strided_slice %66 {offsets = [0, 0], sizes = [1, 256], strides = [1, 1]} : vector<3x256xf32> to vector<1x256xf32>
    %92 = vector.extract_strided_slice %66 {offsets = [1, 0], sizes = [1, 256], strides = [1, 1]} : vector<3x256xf32> to vector<1x256xf32>
    %93 = vector.extract_strided_slice %66 {offsets = [2, 0], sizes = [1, 256], strides = [1, 1]} : vector<3x256xf32> to vector<1x256xf32>
    %94 = arith.mulf %87, %87 : vector<1x256xf32>
    %95 = arith.mulf %88, %88 : vector<1x256xf32>
    %96 = arith.addf %94, %95 : vector<1x256xf32>
    %97 = arith.mulf %89, %89 : vector<1x256xf32>
    %98 = arith.addf %96, %97 : vector<1x256xf32>
    %99 = arith.mulf %90, %90 : vector<1x256xf32>
    %100 = arith.addf %98, %99 : vector<1x256xf32>
    %cst_11 = arith.constant 9.99999996E-13 : f32
    %101 = vector.broadcast %cst_11 : f32 to vector<1x256xf32>
    %102 = arith.addf %100, %101 : vector<1x256xf32>
    %103 = math.rsqrt %102 : vector<1x256xf32>
    %104 = arith.mulf %87, %103 : vector<1x256xf32>
    %105 = arith.mulf %88, %103 : vector<1x256xf32>
    %106 = arith.mulf %89, %103 : vector<1x256xf32>
    %107 = arith.mulf %90, %103 : vector<1x256xf32>
    %108 = arith.mulf %106, %106 : vector<1x256xf32>
    %109 = arith.mulf %107, %107 : vector<1x256xf32>
    %110 = arith.addf %108, %109 : vector<1x256xf32>
    %cst_12 = arith.constant 2.000000e+00 : f32
    %111 = vector.broadcast %cst_12 : f32 to vector<1x256xf32>
    %112 = arith.mulf %111, %110 : vector<1x256xf32>
    %cst_13 = arith.constant 1.000000e+00 : f32
    %113 = vector.broadcast %cst_13 : f32 to vector<1x256xf32>
    %114 = arith.subf %113, %112 : vector<1x256xf32>
    %115 = arith.mulf %105, %106 : vector<1x256xf32>
    %116 = arith.mulf %104, %107 : vector<1x256xf32>
    %117 = arith.subf %115, %116 : vector<1x256xf32>
    %cst_14 = arith.constant 2.000000e+00 : f32
    %118 = vector.broadcast %cst_14 : f32 to vector<1x256xf32>
    %119 = arith.mulf %118, %117 : vector<1x256xf32>
    %120 = arith.mulf %105, %107 : vector<1x256xf32>
    %121 = arith.mulf %104, %106 : vector<1x256xf32>
    %122 = arith.addf %120, %121 : vector<1x256xf32>
    %cst_15 = arith.constant 2.000000e+00 : f32
    %123 = vector.broadcast %cst_15 : f32 to vector<1x256xf32>
    %124 = arith.mulf %123, %122 : vector<1x256xf32>
    %125 = arith.mulf %105, %106 : vector<1x256xf32>
    %126 = arith.mulf %104, %107 : vector<1x256xf32>
    %127 = arith.addf %125, %126 : vector<1x256xf32>
    %cst_16 = arith.constant 2.000000e+00 : f32
    %128 = vector.broadcast %cst_16 : f32 to vector<1x256xf32>
    %129 = arith.mulf %128, %127 : vector<1x256xf32>
    %130 = arith.mulf %105, %105 : vector<1x256xf32>
    %131 = arith.mulf %107, %107 : vector<1x256xf32>
    %132 = arith.addf %130, %131 : vector<1x256xf32>
    %cst_17 = arith.constant 2.000000e+00 : f32
    %133 = vector.broadcast %cst_17 : f32 to vector<1x256xf32>
    %134 = arith.mulf %133, %132 : vector<1x256xf32>
    %cst_18 = arith.constant 1.000000e+00 : f32
    %135 = vector.broadcast %cst_18 : f32 to vector<1x256xf32>
    %136 = arith.subf %135, %134 : vector<1x256xf32>
    %137 = arith.mulf %106, %107 : vector<1x256xf32>
    %138 = arith.mulf %104, %105 : vector<1x256xf32>
    %139 = arith.subf %137, %138 : vector<1x256xf32>
    %cst_19 = arith.constant 2.000000e+00 : f32
    %140 = vector.broadcast %cst_19 : f32 to vector<1x256xf32>
    %141 = arith.mulf %140, %139 : vector<1x256xf32>
    %142 = arith.mulf %105, %107 : vector<1x256xf32>
    %143 = arith.mulf %104, %106 : vector<1x256xf32>
    %144 = arith.subf %142, %143 : vector<1x256xf32>
    %cst_20 = arith.constant 2.000000e+00 : f32
    %145 = vector.broadcast %cst_20 : f32 to vector<1x256xf32>
    %146 = arith.mulf %145, %144 : vector<1x256xf32>
    %147 = arith.mulf %106, %107 : vector<1x256xf32>
    %148 = arith.mulf %104, %105 : vector<1x256xf32>
    %149 = arith.addf %147, %148 : vector<1x256xf32>
    %cst_21 = arith.constant 2.000000e+00 : f32
    %150 = vector.broadcast %cst_21 : f32 to vector<1x256xf32>
    %151 = arith.mulf %150, %149 : vector<1x256xf32>
    %152 = arith.mulf %105, %105 : vector<1x256xf32>
    %153 = arith.mulf %106, %106 : vector<1x256xf32>
    %154 = arith.addf %152, %153 : vector<1x256xf32>
    %cst_22 = arith.constant 2.000000e+00 : f32
    %155 = vector.broadcast %cst_22 : f32 to vector<1x256xf32>
    %156 = arith.mulf %155, %154 : vector<1x256xf32>
    %cst_23 = arith.constant 1.000000e+00 : f32
    %157 = vector.broadcast %cst_23 : f32 to vector<1x256xf32>
    %158 = arith.subf %157, %156 : vector<1x256xf32>
    %159 = arith.mulf %114, %91 : vector<1x256xf32>
    %160 = arith.mulf %119, %92 : vector<1x256xf32>
    %161 = arith.mulf %124, %93 : vector<1x256xf32>
    %162 = arith.mulf %129, %91 : vector<1x256xf32>
    %163 = arith.mulf %136, %92 : vector<1x256xf32>
    %164 = arith.mulf %141, %93 : vector<1x256xf32>
    %165 = arith.mulf %146, %91 : vector<1x256xf32>
    %166 = arith.mulf %151, %92 : vector<1x256xf32>
    %167 = arith.mulf %158, %93 : vector<1x256xf32>
    %168 = arith.mulf %159, %159 : vector<1x256xf32>
    %169 = arith.mulf %160, %160 : vector<1x256xf32>
    %170 = arith.addf %168, %169 : vector<1x256xf32>
    %171 = arith.mulf %161, %161 : vector<1x256xf32>
    %172 = arith.addf %170, %171 : vector<1x256xf32>
    %173 = arith.mulf %159, %162 : vector<1x256xf32>
    %174 = arith.mulf %160, %163 : vector<1x256xf32>
    %175 = arith.addf %173, %174 : vector<1x256xf32>
    %176 = arith.mulf %161, %164 : vector<1x256xf32>
    %177 = arith.addf %175, %176 : vector<1x256xf32>
    %178 = arith.mulf %159, %165 : vector<1x256xf32>
    %179 = arith.mulf %160, %166 : vector<1x256xf32>
    %180 = arith.addf %178, %179 : vector<1x256xf32>
    %181 = arith.mulf %161, %167 : vector<1x256xf32>
    %182 = arith.addf %180, %181 : vector<1x256xf32>
    %183 = arith.mulf %162, %162 : vector<1x256xf32>
    %184 = arith.mulf %163, %163 : vector<1x256xf32>
    %185 = arith.addf %183, %184 : vector<1x256xf32>
    %186 = arith.mulf %164, %164 : vector<1x256xf32>
    %187 = arith.addf %185, %186 : vector<1x256xf32>
    %188 = arith.mulf %162, %165 : vector<1x256xf32>
    %189 = arith.mulf %163, %166 : vector<1x256xf32>
    %190 = arith.addf %188, %189 : vector<1x256xf32>
    %191 = arith.mulf %164, %167 : vector<1x256xf32>
    %192 = arith.addf %190, %191 : vector<1x256xf32>
    %193 = arith.mulf %165, %165 : vector<1x256xf32>
    %194 = arith.mulf %166, %166 : vector<1x256xf32>
    %195 = arith.addf %193, %194 : vector<1x256xf32>
    %196 = arith.mulf %167, %167 : vector<1x256xf32>
    %197 = arith.addf %195, %196 : vector<1x256xf32>
    %198 = tpu.concatenate %172, %177, %182, %177, %187, %192, %182, %192, %197 in 0 : vector<1x256xf32>, vector<1x256xf32>, vector<1x256xf32>, vector<1x256xf32>, vector<1x256xf32>, vector<1x256xf32>, vector<1x256xf32>, vector<1x256xf32>, vector<1x256xf32> -> vector<9x256xf32>
    %cst_24 = arith.constant 1.000000e-01 : f32
    %199 = vector.broadcast %cst_24 : f32 to vector<1x256xf32>
    %200 = arith.cmpf oge, %80, %199 : vector<1x256xf32>
    %201 = arith.extui %200 : vector<1x256xi1> to vector<1x256xi32>
    %202 = arith.sitofp %201 : vector<1x256xi32> to vector<1x256xf32>
    %cst_25 = arith.constant 5.000000e-01 : f32
    %203 = vector.broadcast %cst_25 : f32 to vector<1x256xf32>
    %204 = arith.cmpf oge, %86, %203 : vector<1x256xf32>
    %205 = arith.extui %204 : vector<1x256xi1> to vector<1x256xi32>
    %206 = arith.sitofp %205 : vector<1x256xi32> to vector<1x256xf32>
    %207 = arith.mulf %202, %206 : vector<1x256xf32>
    %cst_26 = arith.constant 1.000000e+00 : f32
    %208 = vector.broadcast %cst_26 : f32 to vector<1x256xf32>
    %209 = arith.subf %208, %206 : vector<1x256xf32>
    %210 = arith.mulf %202, %209 : vector<1x256xf32>
    %211 = tpu.concatenate %207, %210 in 0 : vector<1x256xf32>, vector<1x256xf32> -> vector<2x256xf32>
    %c0_27 = arith.constant 0 : index
    %c0_28 = arith.constant 0 : index
    %212 = vector.load %arg4[%c0_27, %c0_28] : memref<18x256xf32, #tpu.memory_space<vmem>>, vector<3x256xf32>
    tpu.vector_store %arg4[%c0_27, %c0_28], %57 {strides = array<i32>} : memref<18x256xf32, #tpu.memory_space<vmem>>, vector<3x256xf32>,
    %c3_29 = arith.constant 3 : index
    %c0_30 = arith.constant 0 : index
    %213 = vector.load %arg4[%c3_29, %c0_30] : memref<18x256xf32, #tpu.memory_space<vmem>>, vector<9x256xf32>
    tpu.vector_store %arg4[%c3_29, %c0_30], %198 {strides = array<i32>} : memref<18x256xf32, #tpu.memory_space<vmem>>, vector<9x256xf32>,
    %214 = tpu.concatenate %72, %80 in 0 : vector<3x256xf32>, vector<1x256xf32> -> vector<4x256xf32>
    %c12 = arith.constant 12 : index
    %c0_31 = arith.constant 0 : index
    %215 = vector.load %arg4[%c12, %c0_31] : memref<18x256xf32, #tpu.memory_space<vmem>>, vector<4x256xf32>
    tpu.vector_store %arg4[%c12, %c0_31], %214 {strides = array<i32>} : memref<18x256xf32, #tpu.memory_space<vmem>>, vector<4x256xf32>,
    %c16 = arith.constant 16 : index
    %c0_32 = arith.constant 0 : index
    %216 = vector.load %arg4[%c16, %c0_32] : memref<18x256xf32, #tpu.memory_space<vmem>>, vector<2x256xf32>
    tpu.vector_store %arg4[%c16, %c0_32], %211 {strides = array<i32>} : memref<18x256xf32, #tpu.memory_space<vmem>>, vector<2x256xf32>,
    return
  }
  func.func @transform_0(%arg0: i32) -> i32 {
    %c0_i32 = arith.constant 0 : i32
    %c0_i32_0 = arith.constant 0 : i32
    return %c0_i32 : i32
  }
  func.func @transform_1(%arg0: i32) -> i32 {
    %c0_i32 = arith.constant 0 : i32
    %c0_i32_0 = arith.constant 0 : i32
    return %c0_i32 : i32
  }
  func.func @transform_2(%arg0: i32) -> (i32, i32) {
    %c0_i32 = arith.constant 0 : i32
    %c0_i32_0 = arith.constant 0 : i32
    %c0_i32_1 = arith.constant 0 : i32
    return %c0_i32, %c0_i32_0 : i32, i32
  }
  func.func @transform_3(%arg0: i32) -> (i32, i32) {
    %c0_i32 = arith.constant 0 : i32
    %c0_i32_0 = arith.constant 0 : i32
    return %c0_i32, %arg0 : i32, i32
  }
}

module attributes {stable_mosaic.version = 11 : i64} {
  func.func @_voxel_gaussian_kernel(%arg0: i32, %arg1: memref<4xf32, #tpu.memory_space<smem>>, %arg2: memref<3xi32, #tpu.memory_space<smem>>, %arg3: memref<32x256xbf16, #tpu.memory_space<vmem>>, %arg4: memref<18x256xf32, #tpu.memory_space<vmem>>) attributes {dimension_semantics = [#tpu.dimension_semantics<parallel>], iteration_bounds = array<i64: 2>, scalar_prefetch = 0 : i64, scratch_operands = 0 : i64, tpu.core_type = #tpu.core_type<tc>, window_params = [{transform_indices = @transform_0, window_bounds = array<i64: 4>}, {transform_indices = @transform_1, window_bounds = array<i64: 3>}, {pipeline_mode = #tpu.pipeline_mode<synchronous>, transform_indices = @transform_2, window_bounds = array<i64: 32, 256>}, {transform_indices = @transform_3, window_bounds = array<i64: 18, 256>}]} {
    %c0 = arith.constant 0 : index
    %0 = memref.load %arg1[%c0] : memref<4xf32, #tpu.memory_space<smem>>
    %c1 = arith.constant 1 : index
    %1 = memref.load %arg1[%c1] : memref<4xf32, #tpu.memory_space<smem>>
    %c2 = arith.constant 2 : index
    %2 = memref.load %arg1[%c2] : memref<4xf32, #tpu.memory_space<smem>>
    %c3 = arith.constant 3 : index
    %3 = memref.load %arg1[%c3] : memref<4xf32, #tpu.memory_space<smem>>
    %c0_0 = arith.constant 0 : index
    %4 = memref.load %arg2[%c0_0] : memref<3xi32, #tpu.memory_space<smem>>
    %c1_1 = arith.constant 1 : index
    %5 = memref.load %arg2[%c1_1] : memref<3xi32, #tpu.memory_space<smem>>
    %c2_2 = arith.constant 2 : index
    %6 = memref.load %arg2[%c2_2] : memref<3xi32, #tpu.memory_space<smem>>
    %c256_i32 = arith.constant 256 : i32
    %7 = arith.muli %arg0, %c256_i32 : i32
    %8 = tpu.iota {dimensions = array<i32: 1>} : vector<1x256xi32>
    %9 = vector.broadcast %7 : i32 to vector<1x256xi32>
    %10 = arith.addi %9, %8 : vector<1x256xi32>
    %c7_i32 = arith.constant 7 : i32
    %11 = vector.broadcast %c7_i32 : i32 to vector<1x256xi32>
    %12 = arith.andi %10, %11 : vector<1x256xi32>
    %13 = vector.broadcast %6 : i32 to vector<1x256xi32>
    %14 = arith.addi %12, %13 : vector<1x256xi32>
    %c3_i32 = arith.constant 3 : i32
    %15 = vector.broadcast %c3_i32 : i32 to vector<1x256xi32>
    %16 = arith.shrsi %10, %15 : vector<1x256xi32>
    %c7_i32_3 = arith.constant 7 : i32
    %17 = vector.broadcast %c7_i32_3 : i32 to vector<1x256xi32>
    %18 = arith.andi %16, %17 : vector<1x256xi32>
    %19 = vector.broadcast %5 : i32 to vector<1x256xi32>
    %20 = arith.addi %18, %19 : vector<1x256xi32>
    %c6_i32 = arith.constant 6 : i32
    %21 = vector.broadcast %c6_i32 : i32 to vector<1x256xi32>
    %22 = arith.shrsi %10, %21 : vector<1x256xi32>
    %23 = vector.broadcast %4 : i32 to vector<1x256xi32>
    %24 = arith.addi %22, %23 : vector<1x256xi32>
    %c1_i32 = arith.constant 1 : i32
    %25 = vector.broadcast %c1_i32 : i32 to vector<1x256xi32>
    %26 = arith.muli %24, %25 : vector<1x256xi32>
    %c-1640531535_i32 = arith.constant -1640531535 : i32
    %27 = vector.broadcast %c-1640531535_i32 : i32 to vector<1x256xi32>
    %28 = arith.muli %20, %27 : vector<1x256xi32>
    %29 = arith.xori %26, %28 : vector<1x256xi32>
    %c805459861_i32 = arith.constant 805459861 : i32
    %30 = vector.broadcast %c805459861_i32 : i32 to vector<1x256xi32>
    %31 = arith.muli %14, %30 : vector<1x256xi32>
    %32 = arith.xori %29, %31 : vector<1x256xi32>
    %c255_i32 = arith.constant 255 : i32
    %33 = vector.broadcast %c255_i32 : i32 to vector<1x256xi32>
    %34 = arith.andi %32, %33 : vector<1x256xi32>
    %35 = tpu.iota {dimensions = array<i32: 0>} : vector<256x256xi32>
    %36 = vector.broadcast %34 : vector<1x256xi32> to vector<256x256xi32>
    %37 = arith.cmpi eq, %35, %36 : vector<256x256xi32>
    %38 = arith.extui %37 : vector<256x256xi1> to vector<256x256xi32>
    %39 = arith.sitofp %38 : vector<256x256xi32> to vector<256x256xf32>
    %40 = arith.truncf %39 : vector<256x256xf32> to vector<256x256xbf16>
    %c0_4 = arith.constant 0 : index
    %c0_5 = arith.constant 0 : index
    %41 = vector.load %arg3[%c0_4, %c0_5] : memref<32x256xbf16, #tpu.memory_space<vmem>>, vector<32x256xbf16>
    %cst = arith.constant dense<0.000000e+00> : vector<32x256xf32>
    %42 = tpu.matmul %41, %40, %cst {dimension_numbers = #tpu.dot_dimension_numbers<[1], [0], [0], [1], [0, 0, 1, 1], [], []>} : vector<32x256xbf16>, vector<256x256xbf16>, vector<32x256xf32> -> vector<32x256xf32>
    %43 = vector.extract_strided_slice %42 {offsets = [0, 0], sizes = [16, 256], strides = [1, 1]} : vector<32x256xf32> to vector<16x256xf32>
    %44 = vector.extract_strided_slice %42 {offsets = [16, 0], sizes = [16, 256], strides = [1, 1]} : vector<32x256xf32> to vector<16x256xf32>
    %45 = arith.addf %43, %44 : vector<16x256xf32>
    %46 = tpu.concatenate %24, %20, %14 in 0 : vector<1x256xi32>, vector<1x256xi32>, vector<1x256xi32> -> vector<3x256xi32>
    %47 = arith.sitofp %46 : vector<3x256xi32> to vector<3x256xf32>
    %48 = vector.extract_strided_slice %45 {offsets = [0, 0], sizes = [3, 256], strides = [1, 1]} : vector<16x256xf32> to vector<3x256xf32>
    %49 = vector.broadcast %0 : f32 to vector<3x256xf32>
    %50 = arith.mulf %48, %49 : vector<3x256xf32>
    %51 = vector.broadcast %1 : f32 to vector<3x256xf32>
    %52 = arith.addf %50, %51 : vector<3x256xf32>
    %53 = vector.broadcast %2 : f32 to vector<3x256xf32>
    %54 = arith.mulf %47, %53 : vector<3x256xf32>
    %55 = vector.broadcast %3 : f32 to vector<3x256xf32>
    %56 = arith.addf %54, %55 : vector<3x256xf32>
    %57 = arith.addf %52, %56 : vector<3x256xf32>
    %58 = vector.extract_strided_slice %45 {offsets = [3, 0], sizes = [4, 256], strides = [1, 1]} : vector<16x256xf32> to vector<4x256xf32>
    %59 = vector.extract_strided_slice %45 {offsets = [7, 0], sizes = [3, 256], strides = [1, 1]} : vector<16x256xf32> to vector<3x256xf32>
    %60 = arith.negf %59 : vector<3x256xf32>
    %61 = math.exp %60 : vector<3x256xf32>
    %cst_6 = arith.constant 1.000000e+00 : f32
    %62 = vector.broadcast %cst_6 : f32 to vector<3x256xf32>
    %63 = arith.addf %62, %61 : vector<3x256xf32>
    %64 = arith.divf %62, %63 : vector<3x256xf32>
    %65 = vector.broadcast %2 : f32 to vector<3x256xf32>
    %66 = arith.mulf %64, %65 : vector<3x256xf32>
    %67 = vector.extract_strided_slice %45 {offsets = [10, 0], sizes = [3, 256], strides = [1, 1]} : vector<16x256xf32> to vector<3x256xf32>
    %68 = arith.negf %67 : vector<3x256xf32>
    %69 = math.exp %68 : vector<3x256xf32>
    %cst_7 = arith.constant 1.000000e+00 : f32
    %70 = vector.broadcast %cst_7 : f32 to vector<3x256xf32>
    %71 = arith.addf %70, %69 : vector<3x256xf32>
    %72 = arith.divf %70, %71 : vector<3x256xf32>
    %73 = vector.extract_strided_slice %45 {offsets = [13, 0], sizes = [1, 256], strides = [1, 1]} : vector<16x256xf32> to vector<1x256xf32>
    %cst_8 = arith.constant 4.000000e+00 : f32
    %74 = vector.broadcast %cst_8 : f32 to vector<1x256xf32>
    %75 = arith.subf %73, %74 : vector<1x256xf32>
    %76 = arith.negf %75 : vector<1x256xf32>
    %77 = math.exp %76 : vector<1x256xf32>
    %cst_9 = arith.constant 1.000000e+00 : f32
    %78 = vector.broadcast %cst_9 : f32 to vector<1x256xf32>
    %79 = arith.addf %78, %77 : vector<1x256xf32>
    %80 = arith.divf %78, %79 : vector<1x256xf32>
    %81 = vector.extract_strided_slice %45 {offsets = [14, 0], sizes = [1, 256], strides = [1, 1]} : vector<16x256xf32> to vector<1x256xf32>
    %82 = arith.negf %81 : vector<1x256xf32>
    %83 = math.exp %82 : vector<1x256xf32>
    %cst_10 = arith.constant 1.000000e+00 : f32
    %84 = vector.broadcast %cst_10 : f32 to vector<1x256xf32>
    %85 = arith.addf %84, %83 : vector<1x256xf32>
    %86 = arith.divf %84, %85 : vector<1x256xf32>
    %87 = vector.extract_strided_slice %58 {offsets = [0, 0], sizes = [1, 256], strides = [1, 1]} : vector<4x256xf32> to vector<1x256xf32>
    %88 = vector.extract_strided_slice %58 {offsets = [1, 0], sizes = [1, 256], strides = [1, 1]} : vector<4x256xf32> to vector<1x256xf32>
    %89 = vector.extract_strided_slice %58 {offsets = [2, 0], sizes = [1, 256], strides = [1, 1]} : vector<4x256xf32> to vector<1x256xf32>
    %90 = vector.extract_strided_slice %58 {offsets = [3, 0], sizes = [1, 256], strides = [1, 1]} : vector<4x256xf32> to vector<1x256xf32>
    %91 = vector.extract_strided_slice %66 {offsets = [0, 0], sizes = [1, 256], strides = [1, 1]} : vector<3x256xf32> to vector<1x256xf32>
    %92 = vector.extract_strided_slice %66 {offsets = [1, 0], sizes = [1, 256], strides = [1, 1]} : vector<3x256xf32> to vector<1x256xf32>
    %93 = vector.extract_strided_slice %66 {offsets = [2, 0], sizes = [1, 256], strides = [1, 1]} : vector<3x256xf32> to vector<1x256xf32>
    %94 = arith.mulf %87, %87 : vector<1x256xf32>
    %95 = arith.mulf %88, %88 : vector<1x256xf32>
    %96 = arith.addf %94, %95 : vector<1x256xf32>
    %97 = arith.mulf %89, %89 : vector<1x256xf32>
    %98 = arith.addf %96, %97 : vector<1x256xf32>
    %99 = arith.mulf %90, %90 : vector<1x256xf32>
    %100 = arith.addf %98, %99 : vector<1x256xf32>
    %cst_11 = arith.constant 9.99999996E-13 : f32
    %101 = vector.broadcast %cst_11 : f32 to vector<1x256xf32>
    %102 = arith.addf %100, %101 : vector<1x256xf32>
    %103 = math.rsqrt %102 : vector<1x256xf32>
    %104 = arith.mulf %87, %103 : vector<1x256xf32>
    %105 = arith.mulf %88, %103 : vector<1x256xf32>
    %106 = arith.mulf %89, %103 : vector<1x256xf32>
    %107 = arith.mulf %90, %103 : vector<1x256xf32>
    %108 = arith.mulf %106, %106 : vector<1x256xf32>
    %109 = arith.mulf %107, %107 : vector<1x256xf32>
    %110 = arith.addf %108, %109 : vector<1x256xf32>
    %cst_12 = arith.constant 2.000000e+00 : f32
    %111 = vector.broadcast %cst_12 : f32 to vector<1x256xf32>
    %112 = arith.mulf %111, %110 : vector<1x256xf32>
    %cst_13 = arith.constant 1.000000e+00 : f32
    %113 = vector.broadcast %cst_13 : f32 to vector<1x256xf32>
    %114 = arith.subf %113, %112 : vector<1x256xf32>
    %115 = arith.mulf %105, %106 : vector<1x256xf32>
    %116 = arith.mulf %104, %107 : vector<1x256xf32>
    %117 = arith.subf %115, %116 : vector<1x256xf32>
    %cst_14 = arith.constant 2.000000e+00 : f32
    %118 = vector.broadcast %cst_14 : f32 to vector<1x256xf32>
    %119 = arith.mulf %118, %117 : vector<1x256xf32>
    %120 = arith.mulf %105, %107 : vector<1x256xf32>
    %121 = arith.mulf %104, %106 : vector<1x256xf32>
    %122 = arith.addf %120, %121 : vector<1x256xf32>
    %cst_15 = arith.constant 2.000000e+00 : f32
    %123 = vector.broadcast %cst_15 : f32 to vector<1x256xf32>
    %124 = arith.mulf %123, %122 : vector<1x256xf32>
    %125 = arith.mulf %105, %106 : vector<1x256xf32>
    %126 = arith.mulf %104, %107 : vector<1x256xf32>
    %127 = arith.addf %125, %126 : vector<1x256xf32>
    %cst_16 = arith.constant 2.000000e+00 : f32
    %128 = vector.broadcast %cst_16 : f32 to vector<1x256xf32>
    %129 = arith.mulf %128, %127 : vector<1x256xf32>
    %130 = arith.mulf %105, %105 : vector<1x256xf32>
    %131 = arith.mulf %107, %107 : vector<1x256xf32>
    %132 = arith.addf %130, %131 : vector<1x256xf32>
    %cst_17 = arith.constant 2.000000e+00 : f32
    %133 = vector.broadcast %cst_17 : f32 to vector<1x256xf32>
    %134 = arith.mulf %133, %132 : vector<1x256xf32>
    %cst_18 = arith.constant 1.000000e+00 : f32
    %135 = vector.broadcast %cst_18 : f32 to vector<1x256xf32>
    %136 = arith.subf %135, %134 : vector<1x256xf32>
    %137 = arith.mulf %106, %107 : vector<1x256xf32>
    %138 = arith.mulf %104, %105 : vector<1x256xf32>
    %139 = arith.subf %137, %138 : vector<1x256xf32>
    %cst_19 = arith.constant 2.000000e+00 : f32
    %140 = vector.broadcast %cst_19 : f32 to vector<1x256xf32>
    %141 = arith.mulf %140, %139 : vector<1x256xf32>
    %142 = arith.mulf %105, %107 : vector<1x256xf32>
    %143 = arith.mulf %104, %106 : vector<1x256xf32>
    %144 = arith.subf %142, %143 : vector<1x256xf32>
    %cst_20 = arith.constant 2.000000e+00 : f32
    %145 = vector.broadcast %cst_20 : f32 to vector<1x256xf32>
    %146 = arith.mulf %145, %144 : vector<1x256xf32>
    %147 = arith.mulf %106, %107 : vector<1x256xf32>
    %148 = arith.mulf %104, %105 : vector<1x256xf32>
    %149 = arith.addf %147, %148 : vector<1x256xf32>
    %cst_21 = arith.constant 2.000000e+00 : f32
    %150 = vector.broadcast %cst_21 : f32 to vector<1x256xf32>
    %151 = arith.mulf %150, %149 : vector<1x256xf32>
    %152 = arith.mulf %105, %105 : vector<1x256xf32>
    %153 = arith.mulf %106, %106 : vector<1x256xf32>
    %154 = arith.addf %152, %153 : vector<1x256xf32>
    %cst_22 = arith.constant 2.000000e+00 : f32
    %155 = vector.broadcast %cst_22 : f32 to vector<1x256xf32>
    %156 = arith.mulf %155, %154 : vector<1x256xf32>
    %cst_23 = arith.constant 1.000000e+00 : f32
    %157 = vector.broadcast %cst_23 : f32 to vector<1x256xf32>
    %158 = arith.subf %157, %156 : vector<1x256xf32>
    %159 = arith.mulf %114, %91 : vector<1x256xf32>
    %160 = arith.mulf %119, %92 : vector<1x256xf32>
    %161 = arith.mulf %124, %93 : vector<1x256xf32>
    %162 = arith.mulf %129, %91 : vector<1x256xf32>
    %163 = arith.mulf %136, %92 : vector<1x256xf32>
    %164 = arith.mulf %141, %93 : vector<1x256xf32>
    %165 = arith.mulf %146, %91 : vector<1x256xf32>
    %166 = arith.mulf %151, %92 : vector<1x256xf32>
    %167 = arith.mulf %158, %93 : vector<1x256xf32>
    %168 = arith.mulf %159, %159 : vector<1x256xf32>
    %169 = arith.mulf %160, %160 : vector<1x256xf32>
    %170 = arith.addf %168, %169 : vector<1x256xf32>
    %171 = arith.mulf %161, %161 : vector<1x256xf32>
    %172 = arith.addf %170, %171 : vector<1x256xf32>
    %173 = arith.mulf %159, %162 : vector<1x256xf32>
    %174 = arith.mulf %160, %163 : vector<1x256xf32>
    %175 = arith.addf %173, %174 : vector<1x256xf32>
    %176 = arith.mulf %161, %164 : vector<1x256xf32>
    %177 = arith.addf %175, %176 : vector<1x256xf32>
    %178 = arith.mulf %159, %165 : vector<1x256xf32>
    %179 = arith.mulf %160, %166 : vector<1x256xf32>
    %180 = arith.addf %178, %179 : vector<1x256xf32>
    %181 = arith.mulf %161, %167 : vector<1x256xf32>
    %182 = arith.addf %180, %181 : vector<1x256xf32>
    %183 = arith.mulf %162, %162 : vector<1x256xf32>
    %184 = arith.mulf %163, %163 : vector<1x256xf32>
    %185 = arith.addf %183, %184 : vector<1x256xf32>
    %186 = arith.mulf %164, %164 : vector<1x256xf32>
    %187 = arith.addf %185, %186 : vector<1x256xf32>
    %188 = arith.mulf %162, %165 : vector<1x256xf32>
    %189 = arith.mulf %163, %166 : vector<1x256xf32>
    %190 = arith.addf %188, %189 : vector<1x256xf32>
    %191 = arith.mulf %164, %167 : vector<1x256xf32>
    %192 = arith.addf %190, %191 : vector<1x256xf32>
    %193 = arith.mulf %165, %165 : vector<1x256xf32>
    %194 = arith.mulf %166, %166 : vector<1x256xf32>
    %195 = arith.addf %193, %194 : vector<1x256xf32>
    %196 = arith.mulf %167, %167 : vector<1x256xf32>
    %197 = arith.addf %195, %196 : vector<1x256xf32>
    %198 = tpu.concatenate %172, %177, %182, %177, %187, %192, %182, %192, %197 in 0 : vector<1x256xf32>, vector<1x256xf32>, vector<1x256xf32>, vector<1x256xf32>, vector<1x256xf32>, vector<1x256xf32>, vector<1x256xf32>, vector<1x256xf32>, vector<1x256xf32> -> vector<9x256xf32>
    %cst_24 = arith.constant 1.000000e-01 : f32
    %199 = vector.broadcast %cst_24 : f32 to vector<1x256xf32>
    %200 = arith.cmpf oge, %80, %199 : vector<1x256xf32>
    %201 = arith.extui %200 : vector<1x256xi1> to vector<1x256xi32>
    %202 = arith.sitofp %201 : vector<1x256xi32> to vector<1x256xf32>
    %cst_25 = arith.constant 5.000000e-01 : f32
    %203 = vector.broadcast %cst_25 : f32 to vector<1x256xf32>
    %204 = arith.cmpf oge, %86, %203 : vector<1x256xf32>
    %205 = arith.extui %204 : vector<1x256xi1> to vector<1x256xi32>
    %206 = arith.sitofp %205 : vector<1x256xi32> to vector<1x256xf32>
    %207 = arith.mulf %202, %206 : vector<1x256xf32>
    %cst_26 = arith.constant 1.000000e+00 : f32
    %208 = vector.broadcast %cst_26 : f32 to vector<1x256xf32>
    %209 = arith.subf %208, %206 : vector<1x256xf32>
    %210 = arith.mulf %202, %209 : vector<1x256xf32>
    %211 = tpu.concatenate %207, %210 in 0 : vector<1x256xf32>, vector<1x256xf32> -> vector<2x256xf32>
    %c0_27 = arith.constant 0 : index
    %c0_28 = arith.constant 0 : index
    %212 = vector.load %arg4[%c0_27, %c0_28] : memref<18x256xf32, #tpu.memory_space<vmem>>, vector<3x256xf32>
    tpu.vector_store %arg4[%c0_27, %c0_28], %57 {strides = array<i32>} : memref<18x256xf32, #tpu.memory_space<vmem>>, vector<3x256xf32>,
    %c3_29 = arith.constant 3 : index
    %c0_30 = arith.constant 0 : index
    %213 = vector.load %arg4[%c3_29, %c0_30] : memref<18x256xf32, #tpu.memory_space<vmem>>, vector<9x256xf32>
    tpu.vector_store %arg4[%c3_29, %c0_30], %198 {strides = array<i32>} : memref<18x256xf32, #tpu.memory_space<vmem>>, vector<9x256xf32>,
    %214 = tpu.concatenate %72, %80 in 0 : vector<3x256xf32>, vector<1x256xf32> -> vector<4x256xf32>
    %c12 = arith.constant 12 : index
    %c0_31 = arith.constant 0 : index
    %215 = vector.load %arg4[%c12, %c0_31] : memref<18x256xf32, #tpu.memory_space<vmem>>, vector<4x256xf32>
    tpu.vector_store %arg4[%c12, %c0_31], %214 {strides = array<i32>} : memref<18x256xf32, #tpu.memory_space<vmem>>, vector<4x256xf32>,
    %c16 = arith.constant 16 : index
    %c0_32 = arith.constant 0 : index
    %216 = vector.load %arg4[%c16, %c0_32] : memref<18x256xf32, #tpu.memory_space<vmem>>, vector<2x256xf32>
    tpu.vector_store %arg4[%c16, %c0_32], %211 {strides = array<i32>} : memref<18x256xf32, #tpu.memory_space<vmem>>, vector<2x256xf32>,
    return
  }
  func.func @transform_0(%arg0: i32) -> i32 {
    %c0_i32 = arith.constant 0 : i32
    %c0_i32_0 = arith.constant 0 : i32
    return %c0_i32 : i32
  }
  func.func @transform_1(%arg0: i32) -> i32 {
    %c0_i32 = arith.constant 0 : i32
    %c0_i32_0 = arith.constant 0 : i32
    return %c0_i32 : i32
  }
  func.func @transform_2(%arg0: i32) -> (i32, i32) {
    %c0_i32 = arith.constant 0 : i32
    %c0_i32_0 = arith.constant 0 : i32
    %c0_i32_1 = arith.constant 0 : i32
    return %c0_i32, %c0_i32_0 : i32, i32
  }
  func.func @transform_3(%arg0: i32) -> (i32, i32) {
    %c0_i32 = arith.constant 0 : i32
    %c0_i32_0 = arith.constant 0 : i32
    return %c0_i32, %arg0 : i32, i32
  }
}

</mosaic_0001>

<llo_original>
// kernel: tpu_custom_call.1
$region0: #{tpu_custom_call.1}
  #allocation0 [shape = 'u32[]', space=smem, size = 0x4, offset = 0x4, fixed_abs, tag = 'smem constant byte address 0x4 - core index']
  #allocation1 [shape = 'u32[72,128]{1,0:T(1,128)}', space=vmem, size = 0x9000, scoped, tag = 'internal scratch']
  %s0 = inlined_call_operand.hbm [shape: f32[4], index: 0, kind: input, shape index: {}]
  %s1 = inlined_call_operand.hbm [shape: s32[3], index: 1, kind: input, shape index: {}]
  %s2 = inlined_call_operand.hbm [shape: bf16[32,256], index: 2, kind: input, shape index: {}]
  %s3 = inlined_call_operand.hbm [shape: f32[18,512], index: 3, kind: output, shape index: {}]
  %s4 = sld [smem:[#allocation0]]
  $region57: #{tpu_custom_call.1} parent=0
    _
  %s6 = ssub.s32 1, %s4
  %s7 = scalar_select 0, %s6, %s4
  $region1: #{tpu_custom_call.1} parent=0
    #allocation2 [shape = 'u8[512]{0}', space=smem, size = 0x200, scoped, tag = 'input window, operand 0, single buffered']
    #allocation3 [shape = 's32[2]{0}', space=sflag, size = 0x8, scoped, tag = 'scoped memory for tpu_custom_call.1']
    #allocation4 [shape = 's32[2]{0}', space=sflag, size = 0x8, scoped, tag = 'scoped memory for tpu_custom_call.1']
    #allocation5 [shape = 's32[2]{0}', space=sflag, size = 0x8, scoped, tag = 'scoped memory for tpu_custom_call.1']
    #allocation6 [shape = 'u8[512]{0}', space=smem, size = 0x200, scoped, tag = 'input window, operand 1, single buffered']
    #allocation7 [shape = 's32[1]{0}', space=sflag, size = 0x4, scoped, tag = 'scoped memory for tpu_custom_call.1']
    #allocation8 [shape = 'u8[16384]{0}', space=vmem, size = 0x4000, scoped, tag = 'input window, operand 2, single buffered']
    #allocation9 [shape = 'u8[49152]{0}', space=vmem, size = 0xc000, scoped, tag = 'output window, operand 0']
    %8 = vsyncpa [#allocation5], 0
    %9 = vsyncpa [#allocation7], 0
    %10 = vsyncpa [#allocation3], 0
    %11 = vsyncpa [#allocation4], 0
    %s12 = scalar_lea.sflag [#allocation4], 1
    %13 = vsyncpa %s12, 0
    loop: start=0, step=1, limit=4
    $region2: #{tpu_custom_call.1} parent=1 // loop_pre_header
      _
    $region3: #{tpu_custom_call.1} parent=1 // loop_header
      %s15 = sphi 0, %s19
      %p16 = scmp.ge.s32.totalorder %s15, 4
      %s23 = sphi 0, %s23
      %s25 = sphi 0, %s23
      %s26 = sphi 0, %s25
      %s40 = sphi 0, %s26
      %s44 = sphi 0, %s44
      %s46 = sphi 0, %s44
      %s47 = sphi 0, %s46
      %s61 = sphi 0, %s47
      %s65 = sphi 0, %s65
      %s67 = sphi 0, %s65
      %s68 = sphi 0, %s67
      %s82 = sphi 0, %s68
      %s88 = sphi 0, %s90
      %s91 = sphi 0, %s88
      %s92 = sphi 0, %s91
      %s108 = sphi 0, %s92
    $region4: #{tpu_custom_call.1} parent=1 // loop_header_branch
      %18 = sbr.rel (%p16) target = $region8
    $region5: #{tpu_custom_call.1} parent=1 // loop_body
      %s20 = ssub.s32 %s15, 1
      %s21 = ssub.s32 %s15, 2
      %s22 = sadd.s32 %s15, 1
      %s24 = sadd.s32 %s23, 1
      %p27 = scmp.eq.s32.totalorder %s15, 1
      %p28 = scmp.ne.s32.totalorder %s23, %s25
      %p29 = scmp.eq.s32.totalorder %s15, 0
      %p30 = por %p28, %p29
      %p31 = scmp.ne.s32.totalorder %s23, %s25
      %p32 = scmp.eq.s32.totalorder %s20, 1
      %p33 = por %p31, %p32
      %p34 = scmp.ne.s32.totalorder %s25, %s26
      %p35 = scmp.eq.s32.totalorder %s20, 0
      %p36 = por %p34, %p35
      %p37 = scmp.ne.s32.totalorder %s25, %s26
      %p38 = scmp.eq.s32.totalorder %s21, 1
      %p39 = por %p37, %p38
      %p41 = scmp.ne.s32.totalorder %s26, %s40
      %p42 = scmp.eq.s32.totalorder %s21, 0
      %p43 = por %p41, %p42
      %s45 = sadd.s32 %s44, 1
      %p48 = scmp.eq.s32.totalorder %s15, 1
      %p49 = scmp.ne.s32.totalorder %s44, %s46
      %p50 = scmp.eq.s32.totalorder %s15, 0
      %p51 = por %p49, %p50
      %p52 = scmp.ne.s32.totalorder %s44, %s46
      %p53 = scmp.eq.s32.totalorder %s20, 1
      %p54 = por %p52, %p53
      %p55 = scmp.ne.s32.totalorder %s46, %s47
      %p56 = scmp.eq.s32.totalorder %s20, 0
      %p57 = por %p55, %p56
      %p58 = scmp.ne.s32.totalorder %s46, %s47
      %p59 = scmp.eq.s32.totalorder %s21, 1
      %p60 = por %p58, %p59
      %p62 = scmp.ne.s32.totalorder %s47, %s61
      %p63 = scmp.eq.s32.totalorder %s21, 0
      %p64 = por %p62, %p63
      %s66 = sadd.s32 %s65, 1
      %p69 = scmp.eq.s32.totalorder %s15, 1
      %p70 = scmp.ne.s32.totalorder %s65, %s67
      %p71 = scmp.eq.s32.totalorder %s15, 0
      %p72 = por %p70, %p71
      %p73 = scmp.ne.s32.totalorder %s65, %s67
      %p74 = scmp.eq.s32.totalorder %s20, 1
      %p75 = por %p73, %p74
      %p76 = scmp.ne.s32.totalorder %s67, %s68
      %p77 = scmp.eq.s32.totalorder %s20, 0
      %p78 = por %p76, %p77
      %p79 = scmp.ne.s32.totalorder %s67, %s68
      %p80 = scmp.eq.s32.totalorder %s21, 1
      %p81 = por %p79, %p80
      %p83 = scmp.ne.s32.totalorder %s68, %s82
      %p84 = scmp.eq.s32.totalorder %s21, 0
      %p85 = por %p83, %p84
      %s86 = ssub.s32 %s15, %s22
      %p87 = scmp.eq.s32.totalorder %s86, 0
      %s89 = sadd.s32 %s88, 1
      %s90 = scalar_select %p87, %s88, %s89
      %p93 = pneg %p87
      %p94 = scmp.eq.s32.totalorder %s15, 1
      %p95 = por %p93, %p94
      %p96 = scmp.ne.s32.totalorder %s88, %s91
      %p97 = scmp.eq.s32.totalorder %s15, 0
      %p98 = por %p96, %p97
      %p99 = scmp.ne.s32.totalorder %s88, %s91
      %p100 = scmp.eq.s32.totalorder %s20, 1
      %p101 = por %p99, %p100
      %p102 = scmp.ne.s32.totalorder %s91, %s92
      %p103 = scmp.eq.s32.totalorder %s20, 0
      %p104 = por %p102, %p103
      %p105 = scmp.ne.s32.totalorder %s91, %s92
      %p106 = scmp.eq.s32.totalorder %s21, 1
      %p107 = por %p105, %p106
      %p109 = scmp.ne.s32.totalorder %s92, %s108
      %p110 = scmp.eq.s32.totalorder %s21, 0
      %p111 = por %p109, %p110
      %p112 = scmp.le.s32.totalorder 1, %s15
      %p113 = scmp.lt.s32.totalorder %s15, 3
      %p114 = pnand %p112, %p113
      %p115 = pneg %p114
      // Predicated region
      $region9: #{tpu_custom_call.1} parent=5 // pred_check
        _
      $region10: #{tpu_custom_call.1} parent=5 // pred_check_branch
        %117 = sbr.rel (%p114) target = $region12
      $region11: #{tpu_custom_call.1} parent=5 // pred_region
        %s118 = ssub.s32 %s15, 1
        // Predicated region
        $region13: #{tpu_custom_call.1} parent=11 // pred_check
          %p119 = pneg %p36
        $region14: #{tpu_custom_call.1} parent=11 // pred_check_branch
          %121 = sbr.rel (%p119) target = $region16
        $region15: #{tpu_custom_call.1} parent=11 // pred_region
          %123 = vsyncadd [#allocation5], 0
          %s125 = sshll.u32 %s0, 4
          %s126 = int_to_ptr.hbm [resolvable:$true] %s125
          %128 = dma.hbm_to_smem %s126, 16, [#allocation2], [#allocation5]
        $region16: #{tpu_custom_call.1} parent=11 // pred_fallthru
          _
        // Predicated region
        $region17: #{tpu_custom_call.1} parent=11 // pred_check
          %p129 = pneg %p57
        $region18: #{tpu_custom_call.1} parent=11 // pred_check_branch
          %131 = sbr.rel (%p129) target = $region20
        $region19: #{tpu_custom_call.1} parent=11 // pred_region
          %133 = vsyncadd [#allocation7], 0
          %s135 = sshll.u32 %s1, 4
          %s136 = int_to_ptr.hbm [resolvable:$true] %s135
          %138 = dma.hbm_to_smem %s136, 16, [#allocation6], [#allocation7]
        $region20: #{tpu_custom_call.1} parent=11 // pred_fallthru
          _
        // Predicated region
        $region21: #{tpu_custom_call.1} parent=11 // pred_check
          %p139 = pneg %p78
        $region22: #{tpu_custom_call.1} parent=11 // pred_check_branch
          %141 = sbr.rel (%p139) target = $region24
        $region23: #{tpu_custom_call.1} parent=11 // pred_region
          %143 = vsyncadd [#allocation3], 0
          %s144 = sshll.u32 %s2, 4
          %s145 = int_to_ptr.hbm [resolvable:$true] %s144
          %s146 = sshll.u32 [#allocation8], 4
          %s147 = int_to_ptr.vmem [resolvable:$true] %s146
          %152 = dma.hbm_to_vmem [thread:$0]  %s145, 512, %s147, [#allocation3], 128, 128, 8
        $region24: #{tpu_custom_call.1} parent=11 // pred_fallthru
          _
      $region12: #{tpu_custom_call.1} parent=5 // pred_fallthru
        _
      %p153 = scmp.lt.s32.totalorder %s15, 2
      // Predicated region
      $region25: #{tpu_custom_call.1} parent=5 // pred_check
        %p154 = pneg %p153
      $region26: #{tpu_custom_call.1} parent=5 // pred_check_branch
        %156 = sbr.rel (%p154) target = $region28
      $region27: #{tpu_custom_call.1} parent=5 // pred_region
        _
      $region28: #{tpu_custom_call.1} parent=5 // pred_fallthru
        _
      %p157 = scmp.le.s32.totalorder 1, %s15
      %p158 = scmp.lt.s32.totalorder %s15, 3
      %p159 = pnand %p157, %p158
      %p160 = pneg %p159
      // Predicated region
      $region29: #{tpu_custom_call.1} parent=5 // pred_check
        _
      $region30: #{tpu_custom_call.1} parent=5 // pred_check_branch
        %162 = sbr.rel (%p159) target = $region32
      $region31: #{tpu_custom_call.1} parent=5 // pred_region
        %s163 = ssub.s32 %s15, 1
        // Predicated region
        $region33: #{tpu_custom_call.1} parent=31 // pred_check
          %p164 = pneg %p36
        $region34: #{tpu_custom_call.1} parent=31 // pred_check_branch
          %166 = sbr.rel (%p164) target = $region36
        $region35: #{tpu_custom_call.1} parent=31 // pred_region
          %168 = dma.done [#allocation5], 16
        $region36: #{tpu_custom_call.1} parent=31 // pred_fallthru
          _
        // Predicated region
        $region37: #{tpu_custom_call.1} parent=31 // pred_check
          %p169 = pneg %p57
        $region38: #{tpu_custom_call.1} parent=31 // pred_check_branch
          %171 = sbr.rel (%p169) target = $region40
        $region39: #{tpu_custom_call.1} parent=31 // pred_region
          %173 = dma.done [#allocation7], 16
        $region40: #{tpu_custom_call.1} parent=31 // pred_fallthru
          _
        // Predicated region
        $region41: #{tpu_custom_call.1} parent=31 // pred_check
          %p174 = pneg %p78
        $region42: #{tpu_custom_call.1} parent=31 // pred_check_branch
          %176 = sbr.rel (%p174) target = $region44
        $region43: #{tpu_custom_call.1} parent=31 // pred_region
          %178 = dma.done [#allocation3], 512
        $region44: #{tpu_custom_call.1} parent=31 // pred_fallthru
          _
        %179 = sfence
        %p180 = pneg %p36
        %p181 = pneg %p33
        %p182 = pneg %p57
        %p183 = pneg %p54
        %p184 = pneg %p78
        %p185 = pneg %p75
        %p186 = pneg %p104
        %p187 = pneg %p101
        %s188 = sand.u32 %s91, 1
        %s189 = scalar_lea.sflag [#allocation4], %s188
        %s190 = sand.u32 %s91, 1
        %s191 = smul.addr %s190, 48
        %s192 = scalar_lea.vmem [#allocation9], %s191
        %s193 = smul.u32 2, %s20
        %s194 = sld [smem:[#allocation2]]
        %s195 = sld [smem:[#allocation2 + $0x1]]
        %s196 = sld [smem:[#allocation2 + $0x2]]
        %s197 = sld [smem:[#allocation2 + $0x3]]
        %s198 = sld [smem:[#allocation6]]
        %s199 = sld [smem:[#allocation6 + $0x1]]
        %s200 = sld [smem:[#allocation6 + $0x2]]
        %s201 = smul.u32 %s20, 256
        %v202 = vlaneseq
        %v203 = vand.u32 %v202, 127
        %v204 = vadd.s32 %v203, 128
        %v205 = vstv %s201
        %v206 = vadd.s32 %v205, %v203
        %v207 = vadd.s32 %v205, %v204
        %v208 = vand.u32 %v206, 7
        %v209 = vand.u32 %v207, 7
        %v210 = vstv %s200
        %v211 = vadd.s32 %v208, %v210
        %v212 = vadd.s32 %v209, %v210
        %v213 = vshra.s32 %v206, 3
        %v214 = vshra.s32 %v207, 3
        %v215 = vand.u32 %v213, 7
        %v216 = vand.u32 %v214, 7
        %v217 = vstv %s199
        %v218 = vadd.s32 %v215, %v217
        %v219 = vadd.s32 %v216, %v217
        %v220 = vshra.s32 %v206, 6
        %v221 = vshra.s32 %v207, 6
        %v222 = vstv %s198
        %v223 = vadd.s32 %v220, %v222
        %v224 = vadd.s32 %v221, %v222
        %v225 = vmul.u32 %v218, 2654435761
        %v226 = vmul.u32 %v219, 2654435761
        %v227 = vxor.u32 %v223, %v225
        %v228 = vxor.u32 %v224, %v226
        %v229 = vmul.u32 %v211, 805459861
        %v230 = vmul.u32 %v212, 805459861
        %v231 = vxor.u32 %v227, %v229
        %v232 = vxor.u32 %v228, %v230
        %v233 = vand.u32 %v231, 255
        %v234 = vand.u32 %v232, 255
        %v235 = vlaneseq
        %v236 = vshrl.u32 %v235, 7
        %v237 = vadd.s32 %v236, 8
        %v238 = vadd.s32 %v236, 16
        %v239 = vadd.s32 %v236, 24
        %v240 = vadd.s32 %v236, 32
        %v241 = vadd.s32 %v236, 40
        %v242 = vadd.s32 %v236, 48
        %v243 = vadd.s32 %v236, 56
        %v244 = vadd.s32 %v236, 64
        %v245 = vadd.s32 %v236, 72
        %v246 = vadd.s32 %v236, 80
        %v247 = vadd.s32 %v236, 88
        %v248 = vadd.s32 %v236, 96
        %v249 = vadd.s32 %v236, 104
        %v250 = vadd.s32 %v236, 112
        %v251 = vadd.s32 %v236, 120
        %v252 = vadd.s32 %v236, 128
        %v253 = vadd.s32 %v236, 136
        %v254 = vadd.s32 %v236, 144
        %v255 = vadd.s32 %v236, 152
        %v256 = vadd.s32 %v236, 160
        %v257 = vadd.s32 %v236, 168
        %v258 = vadd.s32 %v236, 176
        %v259 = vadd.s32 %v236, 184
        %v260 = vadd.s32 %v236, 192
        %v261 = vadd.s32 %v236, 200
        %v262 = vadd.s32 %v236, 208
        %v263 = vadd.s32 %v236, 216
        %v264 = vadd.s32 %v236, 224
        %v265 = vadd.s32 %v236, 232
        %v266 = vadd.s32 %v236, 240
        %v267 = vadd.s32 %v236, 248
        %vm268 = vcmp.eq.s32.totalorder %v236, %v233
        %vm269 = vcmp.eq.s32.totalorder %v236, %v234
        %vm270 = vcmp.eq.s32.totalorder %v237, %v233
        %vm271 = vcmp.eq.s32.totalorder %v237, %v234
        %vm272 = vcmp.eq.s32.totalorder %v238, %v233
        %vm273 = vcmp.eq.s32.totalorder %v238, %v234
        %vm274 = vcmp.eq.s32.totalorder %v239, %v233
        %vm275 = vcmp.eq.s32.totalorder %v239, %v234
        %vm276 = vcmp.eq.s32.totalorder %v240, %v233
        %vm277 = vcmp.eq.s32.totalorder %v240, %v234
        %vm278 = vcmp.eq.s32.totalorder %v241, %v233
        %vm279 = vcmp.eq.s32.totalorder %v241, %v234
        %vm280 = vcmp.eq.s32.totalorder %v242, %v233
        %vm281 = vcmp.eq.s32.totalorder %v242, %v234
        %vm282 = vcmp.eq.s32.totalorder %v243, %v233
        %vm283 = vcmp.eq.s32.totalorder %v243, %v234
        %vm284 = vcmp.eq.s32.totalorder %v244, %v233
        %vm285 = vcmp.eq.s32.totalorder %v244, %v234
        %vm286 = vcmp.eq.s32.totalorder %v245, %v233
        %vm287 = vcmp.eq.s32.totalorder %v245, %v234
        %vm288 = vcmp.eq.s32.totalorder %v246, %v233
        %vm289 = vcmp.eq.s32.totalorder %v246, %v234
        %vm290 = vcmp.eq.s32.totalorder %v247, %v233
        %vm291 = vcmp.eq.s32.totalorder %v247, %v234
        %vm292 = vcmp.eq.s32.totalorder %v248, %v233
        %vm293 = vcmp.eq.s32.totalorder %v248, %v234
        %vm294 = vcmp.eq.s32.totalorder %v249, %v233
        %vm295 = vcmp.eq.s32.totalorder %v249, %v234
        %vm296 = vcmp.eq.s32.totalorder %v250, %v233
        %vm297 = vcmp.eq.s32.totalorder %v250, %v234
        %vm298 = vcmp.eq.s32.totalorder %v251, %v233
        %vm299 = vcmp.eq.s32.totalorder %v251, %v234
        %vm300 = vcmp.eq.s32.totalorder %v252, %v233
        %vm301 = vcmp.eq.s32.totalorder %v252, %v234
        %vm302 = vcmp.eq.s32.totalorder %v253, %v233
        %vm303 = vcmp.eq.s32.totalorder %v253, %v234
        %vm304 = vcmp.eq.s32.totalorder %v254, %v233
        %vm305 = vcmp.eq.s32.totalorder %v254, %v234
        %vm306 = vcmp.eq.s32.totalorder %v255, %v233
        %vm307 = vcmp.eq.s32.totalorder %v255, %v234
        %vm308 = vcmp.eq.s32.totalorder %v256, %v233
        %vm309 = vcmp.eq.s32.totalorder %v256, %v234
        %vm310 = vcmp.eq.s32.totalorder %v257, %v233
        %vm311 = vcmp.eq.s32.totalorder %v257, %v234
        %vm312 = vcmp.eq.s32.totalorder %v258, %v233
        %vm313 = vcmp.eq.s32.totalorder %v258, %v234
        %vm314 = vcmp.eq.s32.totalorder %v259, %v233
        %vm315 = vcmp.eq.s32.totalorder %v259, %v234
        %vm316 = vcmp.eq.s32.totalorder %v260, %v233
        %vm317 = vcmp.eq.s32.totalorder %v260, %v234
        %vm318 = vcmp.eq.s32.totalorder %v261, %v233
        %vm319 = vcmp.eq.s32.totalorder %v261, %v234
        %vm320 = vcmp.eq.s32.totalorder %v262, %v233
        %vm321 = vcmp.eq.s32.totalorder %v262, %v234
        %vm322 = vcmp.eq.s32.totalorder %v263, %v233
        %vm323 = vcmp.eq.s32.totalorder %v263, %v234
        %vm324 = vcmp.eq.s32.totalorder %v264, %v233
        %vm325 = vcmp.eq.s32.totalorder %v264, %v234
        %vm326 = vcmp.eq.s32.totalorder %v265, %v233
        %vm327 = vcmp.eq.s32.totalorder %v265, %v234
        %vm328 = vcmp.eq.s32.totalorder %v266, %v233
        %vm329 = vcmp.eq.s32.totalorder %v266, %v234
        %vm330 = vcmp.eq.s32.totalorder %v267, %v233
        %vm331 = vcmp.eq.s32.totalorder %v267, %v234
        %v332 = vsel %vm268, 1, 0
        %v333 = vsel %vm269, 1, 0
        %v334 = vsel %vm270, 1, 0
        %v335 = vsel %vm271, 1, 0
        %v336 = vsel %vm272, 1, 0
        %v337 = vsel %vm273, 1, 0
        %v338 = vsel %vm274, 1, 0
        %v339 = vsel %vm275, 1, 0
        %v340 = vsel %vm276, 1, 0
        %v341 = vsel %vm277, 1, 0
        %v342 = vsel %vm278, 1, 0
        %v343 = vsel %vm279, 1, 0
        %v344 = vsel %vm280, 1, 0
        %v345 = vsel %vm281, 1, 0
        %v346 = vsel %vm282, 1, 0
        %v347 = vsel %vm283, 1, 0
        %v348 = vsel %vm284, 1, 0
        %v349 = vsel %vm285, 1, 0
        %v350 = vsel %vm286, 1, 0
        %v351 = vsel %vm287, 1, 0
        %v352 = vsel %vm288, 1, 0
        %v353 = vsel %vm289, 1, 0
        %v354 = vsel %vm290, 1, 0
        %v355 = vsel %vm291, 1, 0
        %v356 = vsel %vm292, 1, 0
        %v357 = vsel %vm293, 1, 0
        %v358 = vsel %vm294, 1, 0
        %v359 = vsel %vm295, 1, 0
        %v360 = vsel %vm296, 1, 0
        %v361 = vsel %vm297, 1, 0
        %v362 = vsel %vm298, 1, 0
        %v363 = vsel %vm299, 1, 0
        %v364 = vsel %vm300, 1, 0
        %v365 = vsel %vm301, 1, 0
        %v366 = vsel %vm302, 1, 0
        %v367 = vsel %vm303, 1, 0
        %v368 = vsel %vm304, 1, 0
        %v369 = vsel %vm305, 1, 0
        %v370 = vsel %vm306, 1, 0
        %v371 = vsel %vm307, 1, 0
        %v372 = vsel %vm308, 1, 0
        %v373 = vsel %vm309, 1, 0
        %v374 = vsel %vm310, 1, 0
        %v375 = vsel %vm311, 1, 0
        %v376 = vsel %vm312, 1, 0
        %v377 = vsel %vm313, 1, 0
        %v378 = vsel %vm314, 1, 0
        %v379 = vsel %vm315, 1, 0
        %v380 = vsel %vm316, 1, 0
        %v381 = vsel %vm317, 1, 0
        %v382 = vsel %vm318, 1, 0
        %v383 = vsel %vm319, 1, 0
        %v384 = vsel %vm320, 1, 0
        %v385 = vsel %vm321, 1, 0
        %v386 = vsel %vm322, 1, 0
        %v387 = vsel %vm323, 1, 0
        %v388 = vsel %vm324, 1, 0
        %v389 = vsel %vm325, 1, 0
        %v390 = vsel %vm326, 1, 0
        %v391 = vsel %vm327, 1, 0
        %v392 = vsel %vm328, 1, 0
        %v393 = vsel %vm329, 1, 0
        %v394 = vsel %vm330, 1, 0
        %v395 = vsel %vm331, 1, 0
        %v396 = vcvt.s32.f32 %v332
        %v397 = vcvt.s32.f32 %v333
        %v398 = vcvt.s32.f32 %v334
        %v399 = vcvt.s32.f32 %v335
        %v400 = vcvt.s32.f32 %v336
        %v401 = vcvt.s32.f32 %v337
        %v402 = vcvt.s32.f32 %v338
        %v403 = vcvt.s32.f32 %v339
        %v404 = vcvt.s32.f32 %v340
        %v405 = vcvt.s32.f32 %v341
        %v406 = vcvt.s32.f32 %v342
        %v407 = vcvt.s32.f32 %v343
        %v408 = vcvt.s32.f32 %v344
        %v409 = vcvt.s32.f32 %v345
        %v410 = vcvt.s32.f32 %v346
        %v411 = vcvt.s32.f32 %v347
        %v412 = vcvt.s32.f32 %v348
        %v413 = vcvt.s32.f32 %v349
        %v414 = vcvt.s32.f32 %v350
        %v415 = vcvt.s32.f32 %v351
        %v416 = vcvt.s32.f32 %v352
        %v417 = vcvt.s32.f32 %v353
        %v418 = vcvt.s32.f32 %v354
        %v419 = vcvt.s32.f32 %v355
        %v420 = vcvt.s32.f32 %v356
        %v421 = vcvt.s32.f32 %v357
        %v422 = vcvt.s32.f32 %v358
        %v423 = vcvt.s32.f32 %v359
        %v424 = vcvt.s32.f32 %v360
        %v425 = vcvt.s32.f32 %v361
        %v426 = vcvt.s32.f32 %v362
        %v427 = vcvt.s32.f32 %v363
        %v428 = vcvt.s32.f32 %v364
        %v429 = vcvt.s32.f32 %v365
        %v430 = vcvt.s32.f32 %v366
        %v431 = vcvt.s32.f32 %v367
        %v432 = vcvt.s32.f32 %v368
        %v433 = vcvt.s32.f32 %v369
        %v434 = vcvt.s32.f32 %v370
        %v435 = vcvt.s32.f32 %v371
        %v436 = vcvt.s32.f32 %v372
        %v437 = vcvt.s32.f32 %v373
        %v438 = vcvt.s32.f32 %v374
        %v439 = vcvt.s32.f32 %v375
        %v440 = vcvt.s32.f32 %v376
        %v441 = vcvt.s32.f32 %v377
        %v442 = vcvt.s32.f32 %v378
        %v443 = vcvt.s32.f32 %v379
        %v444 = vcvt.s32.f32 %v380
        %v445 = vcvt.s32.f32 %v381
        %v446 = vcvt.s32.f32 %v382
        %v447 = vcvt.s32.f32 %v383
        %v448 = vcvt.s32.f32 %v384
        %v449 = vcvt.s32.f32 %v385
        %v450 = vcvt.s32.f32 %v386
        %v451 = vcvt.s32.f32 %v387
        %v452 = vcvt.s32.f32 %v388
        %v453 = vcvt.s32.f32 %v389
        %v454 = vcvt.s32.f32 %v390
        %v455 = vcvt.s32.f32 %v391
        %v456 = vcvt.s32.f32 %v392
        %v457 = vcvt.s32.f32 %v393
        %v458 = vcvt.s32.f32 %v394
        %v459 = vcvt.s32.f32 %v395
        %v460 = vpack.c.bf16 %v398, %v396
        %v461 = vpack.c.bf16 %v399, %v397
        %v462 = vpack.c.bf16 %v402, %v400
        %v463 = vpack.c.bf16 %v403, %v401
        %v464 = vpack.c.bf16 %v406, %v404
        %v465 = vpack.c.bf16 %v407, %v405
        %v466 = vpack.c.bf16 %v410, %v408
        %v467 = vpack.c.bf16 %v411, %v409
        %v468 = vpack.c.bf16 %v414, %v412
        %v469 = vpack.c.bf16 %v415, %v413
        %v470 = vpack.c.bf16 %v418, %v416
        %v471 = vpack.c.bf16 %v419, %v417
        %v472 = vpack.c.bf16 %v422, %v420
        %v473 = vpack.c.bf16 %v423, %v421
        %v474 = vpack.c.bf16 %v426, %v424
        %v475 = vpack.c.bf16 %v427, %v425
        %v476 = vpack.c.bf16 %v430, %v428
        %v477 = vpack.c.bf16 %v431, %v429
        %v478 = vpack.c.bf16 %v434, %v432
        %v479 = vpack.c.bf16 %v435, %v433
        %v480 = vpack.c.bf16 %v438, %v436
        %v481 = vpack.c.bf16 %v439, %v437
        %v482 = vpack.c.bf16 %v442, %v440
        %v483 = vpack.c.bf16 %v443, %v441
        %v484 = vpack.c.bf16 %v446, %v444
        %v485 = vpack.c.bf16 %v447, %v445
        %v486 = vpack.c.bf16 %v450, %v448
        %v487 = vpack.c.bf16 %v451, %v449
        %v488 = vpack.c.bf16 %v454, %v452
        %v489 = vpack.c.bf16 %v455, %v453
        %v490 = vpack.c.bf16 %v458, %v456
        %v491 = vpack.c.bf16 %v459, %v457
        %v492 = vld [vmem:[#allocation8] sm:$0xff]
        %v493 = vld [vmem:[#allocation8 + $0x8] sm:$0xff]
        %v494 = vld [vmem:[#allocation8 + $0x10] sm:$0xff]
        %v495 = vld [vmem:[#allocation8 + $0x18] sm:$0xff]
        %v500 = vunpack.c.l.b16 %v492
        %v501 = vunpack.c.h.b16 %v492
        %v502 = vunpack.c.l.b16 %v493
        %v503 = vunpack.c.h.b16 %v493
        %v504 = vunpack.c.l.b16 %v494
        %v505 = vunpack.c.h.b16 %v494
        %v506 = vunpack.c.l.b16 %v495
        %v507 = vunpack.c.h.b16 %v495
        %v508 = vpack.c.b16 %v502, %v500
        %v509 = vpack.c.b16 %v503, %v501
        %v510 = vpack.c.b16 %v506, %v504
        %v511 = vpack.c.b16 %v507, %v505
        %516 = vmatpush.bf16.msra.mxu0 %v474
        %517 = vmatpush.bf16.msra.mxu0 %v472
        %518 = vmatpush.bf16.msra.mxu0 %v470
        %519 = vmatpush.bf16.msra.mxu0 %v468
        %520 = vmatpush.bf16.msra.mxu0 %v466
        %521 = vmatpush.bf16.msra.mxu0 %v464
        %522 = vmatpush.bf16.msra.mxu0 %v462
        %523 = vmatpush.bf16.msra.mxu0 %v460
        %524 = vmatmul.bf16.gmra.mxu0 %v508
        %v525 = vpop.f32.mrf.mxu0
        %v526 = vadd.f32 0.0, %v525
        %v527 = vpop.f32.mrf.mxu0
        %v528 = vadd.f32 0.0, %v527
        %529 = vmatmul.bf16.gmra.mxu0 %v510
        %v530 = vpop.f32.mrf.mxu0
        %v531 = vadd.f32 0.0, %v530
        %v532 = vpop.f32.mrf.mxu0
        %v533 = vadd.f32 0.0, %v532
        %534 = vdwg.mxu0
        %535 = vmatpush.bf16.msra.mxu0 %v490
        %536 = vmatpush.bf16.msra.mxu0 %v488
        %537 = vmatpush.bf16.msra.mxu0 %v486
        %538 = vmatpush.bf16.msra.mxu0 %v484
        %539 = vmatpush.bf16.msra.mxu0 %v482
        %540 = vmatpush.bf16.msra.mxu0 %v480
        %541 = vmatpush.bf16.msra.mxu0 %v478
        %542 = vmatpush.bf16.msra.mxu0 %v476
        %543 = vmatmul.bf16.gmra.mxu0 %v509
        %v544 = vpop.f32.mrf.mxu0
        %v545 = vadd.f32 %v526, %v544
        %v546 = vpop.f32.mrf.mxu0
        %v547 = vadd.f32 %v528, %v546
        %548 = vmatmul.bf16.gmra.mxu0 %v511
        %v549 = vpop.f32.mrf.mxu0
        %v550 = vadd.f32 %v531, %v549
        %v551 = vpop.f32.mrf.mxu0
        %v552 = vadd.f32 %v533, %v551
        %553 = vdwg.mxu0
        %554 = vmatpush.bf16.msra.mxu0 %v475
        %555 = vmatpush.bf16.msra.mxu0 %v473
        %556 = vmatpush.bf16.msra.mxu0 %v471
        %557 = vmatpush.bf16.msra.mxu0 %v469
        %558 = vmatpush.bf16.msra.mxu0 %v467
        %559 = vmatpush.bf16.msra.mxu0 %v465
        %560 = vmatpush.bf16.msra.mxu0 %v463
        %561 = vmatpush.bf16.msra.mxu0 %v461
        %562 = vmatmul.bf16.gmra.mxu0 %v508
        %v563 = vpop.f32.mrf.mxu0
        %v564 = vadd.f32 0.0, %v563
        %v565 = vpop.f32.mrf.mxu0
        %v566 = vadd.f32 0.0, %v565
        %567 = vmatmul.bf16.gmra.mxu0 %v510
        %v568 = vpop.f32.mrf.mxu0
        %v569 = vadd.f32 0.0, %v568
        %v570 = vpop.f32.mrf.mxu0
        %v571 = vadd.f32 0.0, %v570
        %572 = vdwg.mxu0
        %573 = vmatpush.bf16.msra.mxu0 %v491
        %574 = vmatpush.bf16.msra.mxu0 %v489
        %575 = vmatpush.bf16.msra.mxu0 %v487
        %576 = vmatpush.bf16.msra.mxu0 %v485
        %577 = vmatpush.bf16.msra.mxu0 %v483
        %578 = vmatpush.bf16.msra.mxu0 %v481
        %579 = vmatpush.bf16.msra.mxu0 %v479
        %580 = vmatpush.bf16.msra.mxu0 %v477
        %581 = vmatmul.bf16.gmra.mxu0 %v509
        %v582 = vpop.f32.mrf.mxu0
        %v583 = vadd.f32 %v564, %v582
        %v584 = vpop.f32.mrf.mxu0
        %v585 = vadd.f32 %v566, %v584
        %586 = vmatmul.bf16.gmra.mxu0 %v511
        %v587 = vpop.f32.mrf.mxu0
        %v588 = vadd.f32 %v569, %v587
        %v589 = vpop.f32.mrf.mxu0
        %v590 = vadd.f32 %v571, %v589
        %591 = vdwg.mxu0
        %v592 = vadd.f32 %v545, %v550
        %v593 = vadd.f32 %v583, %v588
        %v594 = vadd.f32 %v547, %v552
        %v595 = vadd.f32 %v585, %v590
        %vm596 = vcmask 1040384
        %v597 = vsel %vm596, %v223, %v218
        %v598 = vsel %vm596, %v224, %v219
        %vm599 = vcmask 1041408
        %v600 = vsel %vm599, %v597, %v211
        %v601 = vsel %vm599, %v598, %v212
        %v602 = vcvt.s32.f32 %v600
        %v603 = vcvt.s32.f32 %v601
        %v604 = vstv %s194
        %v605 = vmul.f32 %v592, %v604
        %v606 = vmul.f32 %v593, %v604
        %v607 = vstv %s195
        %v608 = vadd.f32 %v605, %v607
        %v609 = vadd.f32 %v606, %v607
        %v610 = vstv %s196
        %v611 = vmul.f32 %v602, %v610
        %v612 = vmul.f32 %v603, %v610
        %v613 = vstv %s197
        %v614 = vadd.f32 %v611, %v613
        %v615 = vadd.f32 %v612, %v613
        %v616 = vadd.f32 %v608, %v614
        %v617 = vadd.f32 %v609, %v615
        %v618 = vxor.u32 %v592, 2147483648
        %v619 = vxor.u32 %v593, 2147483648
        %v620 = vxor.u32 %v594, 2147483648
        %v621 = vxor.u32 %v595, 2147483648
        %v622 = vmul.f32 %v618, 1.442695
        %v623 = vpow.pop %v622
        %v624 = vmul.f32 %v619, 1.442695
        %v625 = vpow.pop %v624
        %v626 = vmul.f32 %v620, 1.442695
        %v627 = vpow.pop %v626
        %v628 = vmul.f32 %v621, 1.442695
        %v629 = vpow.pop %v628
        %v630 = vadd.f32 %v623, 1.0
        %v631 = vadd.f32 %v625, 1.0
        %v632 = vadd.f32 %v627, 1.0
        %v633 = vadd.f32 %v629, 1.0
        %v634 = vrcp.pop %v630
        %v635 = vmul.f32 %v630, %v634
        %v636 = vsub.f32 1.0, %v635
        %v637 = vmul.f32 %v634, %v636
        %v638 = vadd.f32 %v634, %v637
        %vm639 = vweird.f32 %v630
        %vm640 = vweird.f32 %v634
        %vm641 = vmor %vm639, %vm640
        %v642 = vsel %vm641, %v634, %v638
        %v643 = vand.u32 2147483647, %v630
        %vm644 = vcmp.eq.f32.partialorder %v643, 8.507059e+37
        %v645 = vand.u32 %v630, 2147483648
        %v646 = vor.u32 1.1754944e-38, %v645
        %v647 = vsel %vm644, %v646, %v642
        %v648 = vmul.f32 1.0, %v647
        %v649 = vrcp.pop %v631
        %v650 = vmul.f32 %v631, %v649
        %v651 = vsub.f32 1.0, %v650
        %v652 = vmul.f32 %v649, %v651
        %v653 = vadd.f32 %v649, %v652
        %vm654 = vweird.f32 %v631
        %vm655 = vweird.f32 %v649
        %vm656 = vmor %vm654, %vm655
        %v657 = vsel %vm656, %v649, %v653
        %v658 = vand.u32 2147483647, %v631
        %vm659 = vcmp.eq.f32.partialorder %v658, 8.507059e+37
        %v660 = vand.u32 %v631, 2147483648
        %v661 = vor.u32 1.1754944e-38, %v660
        %v662 = vsel %vm659, %v661, %v657
        %v663 = vmul.f32 1.0, %v662
        %v664 = vrcp.pop %v632
        %v665 = vmul.f32 %v632, %v664
        %v666 = vsub.f32 1.0, %v665
        %v667 = vmul.f32 %v664, %v666
        %v668 = vadd.f32 %v664, %v667
        %vm669 = vweird.f32 %v632
        %vm670 = vweird.f32 %v664
        %vm671 = vmor %vm669, %vm670
        %v672 = vsel %vm671, %v664, %v668
        %v673 = vand.u32 2147483647, %v632
        %vm674 = vcmp.eq.f32.partialorder %v673, 8.507059e+37
        %v675 = vand.u32 %v632, 2147483648
        %v676 = vor.u32 1.1754944e-38, %v675
        %v677 = vsel %vm674, %v676, %v672
        %v678 = vmul.f32 1.0, %v677
        %v679 = vrcp.pop %v633
        %v680 = vmul.f32 %v633, %v679
        %v681 = vsub.f32 1.0, %v680
        %v682 = vmul.f32 %v679, %v681
        %v683 = vadd.f32 %v679, %v682
        %vm684 = vweird.f32 %v633
        %vm685 = vweird.f32 %v679
        %vm686 = vmor %vm684, %vm685
        %v687 = vsel %vm686, %v679, %v683
        %v688 = vand.u32 2147483647, %v633
        %vm689 = vcmp.eq.f32.partialorder %v688, 8.507059e+37
        %v690 = vand.u32 %v633, 2147483648
        %v691 = vor.u32 1.1754944e-38, %v690
        %v692 = vsel %vm689, %v691, %v687
        %v693 = vmul.f32 1.0, %v692
        %v694 = vmul.f32 %v648, %v610
        %v695 = vmul.f32 %v663, %v610
        %v696 = vmul.f32 %v678, %v610
        %v697 = vmul.f32 %v693, %v610
        %v698 = vsub.f32 %v594, 4.0
        %v699 = vsub.f32 %v595, 4.0
        %v700 = vxor.u32 %v698, 2147483648
        %v701 = vxor.u32 %v699, 2147483648
        %v702 = vmul.f32 %v700, 1.442695
        %v703 = vpow.pop %v702
        %v704 = vmul.f32 %v701, 1.442695
        %v705 = vpow.pop %v704
        %v706 = vadd.f32 %v703, 1.0
        %v707 = vadd.f32 %v705, 1.0
        %v708 = vrcp.pop %v706
        %v709 = vmul.f32 %v706, %v708
        %v710 = vsub.f32 1.0, %v709
        %v711 = vmul.f32 %v708, %v710
        %v712 = vadd.f32 %v708, %v711
        %vm713 = vweird.f32 %v706
        %vm714 = vweird.f32 %v708
        %vm715 = vmor %vm713, %vm714
        %v716 = vsel %vm715, %v708, %v712
        %v717 = vand.u32 2147483647, %v706
        %vm718 = vcmp.eq.f32.partialorder %v717, 8.507059e+37
        %v719 = vand.u32 %v706, 2147483648
        %v720 = vor.u32 1.1754944e-38, %v719
        %v721 = vsel %vm718, %v720, %v716
        %v722 = vmul.f32 1.0, %v721
        %v723 = vrcp.pop %v707
        %v724 = vmul.f32 %v707, %v723
        %v725 = vsub.f32 1.0, %v724
        %v726 = vmul.f32 %v723, %v725
        %v727 = vadd.f32 %v723, %v726
        %vm728 = vweird.f32 %v707
        %vm729 = vweird.f32 %v723
        %vm730 = vmor %vm728, %vm729
        %v731 = vsel %vm730, %v723, %v727
        %v732 = vand.u32 2147483647, %v707
        %vm733 = vcmp.eq.f32.partialorder %v732, 8.507059e+37
        %v734 = vand.u32 %v707, 2147483648
        %v735 = vor.u32 1.1754944e-38, %v734
        %v736 = vsel %vm733, %v735, %v731
        %v737 = vmul.f32 1.0, %v736
        %v738 = vmul.f32 %v592, %v592
        %v739 = vmul.f32 %v593, %v593
        %v742 = vrot.slane %v738, 1
        %v743 = vrot.slane %v739, 1
        %v746 = vadd.f32 %v738, %v742
        %v747 = vadd.f32 %v739, %v743
        %v748 = vrot.slane %v738, 2
        %v749 = vrot.slane %v739, 2
        %v752 = vadd.f32 %v746, %v748
        %v753 = vadd.f32 %v747, %v749
        %v754 = vrot.slane %v738, 3
        %v755 = vrot.slane %v739, 3
        %v758 = vadd.f32 %v752, %v754
        %v759 = vadd.f32 %v753, %v755
        %v760 = vadd.f32 %v758, 1e-12
        %v761 = vadd.f32 %v759, 1e-12
        %v762 = vrsqrt.pop %v760
        %v763 = vmul.f32 %v762, %v760
        %v764 = vmul.f32 %v763, %v762
        %v765 = vmul.f32 0.5, %v764
        %v766 = vsub.f32 1.5, %v765
        %v767 = vmul.f32 %v762, %v766
        %vm768 = vweird.f32 %v760
        %vm769 = vweird.f32 %v762
        %vm770 = vmor %vm768, %vm769
        %v771 = vsel %vm770, %v762, %v767
        %v772 = vrsqrt.pop %v761
        %v773 = vmul.f32 %v772, %v761
        %v774 = vmul.f32 %v773, %v772
        %v775 = vmul.f32 0.5, %v774
        %v776 = vsub.f32 1.5, %v775
        %v777 = vmul.f32 %v772, %v776
        %vm778 = vweird.f32 %v761
        %vm779 = vweird.f32 %v772
        %vm780 = vmor %vm778, %vm779
        %v781 = vsel %vm780, %v772, %v777
        %v782 = vmul.f32 %v592, %v771
        %v783 = vmul.f32 %v593, %v781
        %v786 = vrot.slane %v771, 7
        %v787 = vrot.slane %v781, 7
        %v790 = vmul.f32 %v592, %v786
        %v791 = vmul.f32 %v593, %v787
        %v792 = vrot.slane %v771, 6
        %v793 = vrot.slane %v781, 6
        %v796 = vmul.f32 %v592, %v792
        %v797 = vmul.f32 %v593, %v793
        %v798 = vrot.slane %v771, 5
        %v799 = vrot.slane %v781, 5
        %v802 = vmul.f32 %v592, %v798
        %v803 = vmul.f32 %v593, %v799
        %v804 = vmul.f32 %v796, %v796
        %v805 = vmul.f32 %v797, %v797
        %v806 = vmul.f32 %v802, %v802
        %v807 = vmul.f32 %v803, %v803
        %v810 = vrot.slane %v806, 1
        %v811 = vrot.slane %v807, 1
        %v814 = vadd.f32 %v804, %v810
        %v815 = vadd.f32 %v805, %v811
        %v816 = vmul.f32 %v814, 2.0
        %v817 = vmul.f32 %v815, 2.0
        %v818 = vsub.f32 1.0, %v816
        %v819 = vsub.f32 1.0, %v817
        %v822 = vrot.slane %v796, 1
        %v823 = vrot.slane %v797, 1
        %v826 = vmul.f32 %v790, %v822
        %v827 = vmul.f32 %v791, %v823
        %v830 = vrot.slane %v802, 3
        %v831 = vrot.slane %v803, 3
        %v834 = vmul.f32 %v782, %v830
        %v835 = vmul.f32 %v783, %v831
        %v838 = vrot.slane %v834, 7
        %v839 = vrot.slane %v835, 7
        %v842 = vsub.f32 %v826, %v838
        %v843 = vsub.f32 %v827, %v839
        %v844 = vmul.f32 %v842, 2.0
        %v845 = vmul.f32 %v843, 2.0
        %v846 = vrot.slane %v802, 2
        %v847 = vrot.slane %v803, 2
        %v850 = vmul.f32 %v790, %v846
        %v851 = vmul.f32 %v791, %v847
        %v852 = vrot.slane %v796, 2
        %v853 = vrot.slane %v797, 2
        %v856 = vmul.f32 %v782, %v852
        %v857 = vmul.f32 %v783, %v853
        %v860 = vrot.slane %v856, 7
        %v861 = vrot.slane %v857, 7
        %v864 = vadd.f32 %v850, %v860
        %v865 = vadd.f32 %v851, %v861
        %v866 = vmul.f32 %v864, 2.0
        %v867 = vmul.f32 %v865, 2.0
        %v868 = vadd.f32 %v826, %v838
        %v869 = vadd.f32 %v827, %v839
        %v870 = vmul.f32 %v868, 2.0
        %v871 = vmul.f32 %v869, 2.0
        %v872 = vmul.f32 %v790, %v790
        %v873 = vmul.f32 %v791, %v791
        %v874 = vrot.slane %v806, 2
        %v875 = vrot.slane %v807, 2
        %v878 = vadd.f32 %v872, %v874
        %v879 = vadd.f32 %v873, %v875
        %v880 = vmul.f32 %v878, 2.0
        %v881 = vmul.f32 %v879, 2.0
        %v882 = vsub.f32 1.0, %v880
        %v883 = vsub.f32 1.0, %v881
        %v884 = vrot.slane %v802, 1
        %v885 = vrot.slane %v803, 1
        %v888 = vmul.f32 %v796, %v884
        %v889 = vmul.f32 %v797, %v885
        %v892 = vrot.slane %v790, 1
        %v893 = vrot.slane %v791, 1
        %v896 = vmul.f32 %v782, %v892
        %v897 = vmul.f32 %v783, %v893
        %v900 = vrot.slane %v896, 6
        %v901 = vrot.slane %v897, 6
        %v904 = vsub.f32 %v888, %v900
        %v905 = vsub.f32 %v889, %v901
        %v906 = vmul.f32 %v904, 2.0
        %v907 = vmul.f32 %v905, 2.0
        %v908 = vsub.f32 %v850, %v860
        %v909 = vsub.f32 %v851, %v861
        %v910 = vmul.f32 %v908, 2.0
        %v911 = vmul.f32 %v909, 2.0
        %v912 = vadd.f32 %v888, %v900
        %v913 = vadd.f32 %v889, %v901
        %v914 = vmul.f32 %v912, 2.0
        %v915 = vmul.f32 %v913, 2.0
        %v918 = vrot.slane %v804, 1
        %v919 = vrot.slane %v805, 1
        %v922 = vadd.f32 %v872, %v918
        %v923 = vadd.f32 %v873, %v919
        %v924 = vmul.f32 %v922, 2.0
        %v925 = vmul.f32 %v923, 2.0
        %v926 = vsub.f32 1.0, %v924
        %v927 = vsub.f32 1.0, %v925
        %v930 = vrot.slane %v694, 2
        %v931 = vrot.slane %v695, 2
        %v934 = vmul.f32 %v818, %v930
        %v935 = vmul.f32 %v819, %v931
        %v938 = vrot.slane %v696, 4
        %v939 = vrot.slane %v697, 4
        %v942 = vmul.f32 %v844, %v938
        %v943 = vmul.f32 %v845, %v939
        %v944 = vrot.slane %v696, 5
        %v945 = vrot.slane %v697, 5
        %v948 = vmul.f32 %v866, %v944
        %v949 = vmul.f32 %v867, %v945
        %v950 = vrot.slane %v694, 3
        %v951 = vrot.slane %v695, 3
        %v954 = vmul.f32 %v870, %v950
        %v955 = vmul.f32 %v871, %v951
        %v956 = vmul.f32 %v882, %v938
        %v957 = vmul.f32 %v883, %v939
        %v958 = vmul.f32 %v906, %v938
        %v959 = vmul.f32 %v907, %v939
        %v960 = vmul.f32 %v910, %v950
        %v961 = vmul.f32 %v911, %v951
        %v962 = vrot.slane %v696, 3
        %v963 = vrot.slane %v697, 3
        %v966 = vmul.f32 %v914, %v962
        %v967 = vmul.f32 %v915, %v963
        %v968 = vmul.f32 %v926, %v944
        %v969 = vmul.f32 %v927, %v945
        %v970 = vmul.f32 %v934, %v934
        %v971 = vmul.f32 %v935, %v935
        %v972 = vmul.f32 %v942, %v942
        %v973 = vmul.f32 %v943, %v943
        %v976 = vrot.slane %v972, 7
        %v977 = vrot.slane %v973, 7
        %v980 = vadd.f32 %v970, %v976
        %v981 = vadd.f32 %v971, %v977
        %v982 = vmul.f32 %v948, %v948
        %v983 = vmul.f32 %v949, %v949
        %v986 = vrot.slane %v982, 7
        %v987 = vrot.slane %v983, 7
        %v990 = vadd.f32 %v980, %v986
        %v991 = vadd.f32 %v981, %v987
        %v994 = vrot.slane %v954, 7
        %v995 = vrot.slane %v955, 7
        %v998 = vmul.f32 %v934, %v994
        %v999 = vmul.f32 %v935, %v995
        %v1000 = vmul.f32 %v942, %v956
        %v1001 = vmul.f32 %v943, %v957
        %v1004 = vrot.slane %v1000, 7
        %v1005 = vrot.slane %v1001, 7
        %v1008 = vadd.f32 %v998, %v1004
        %v1009 = vadd.f32 %v999, %v1005
        %v1012 = vrot.slane %v958, 1
        %v1013 = vrot.slane %v959, 1
        %v1016 = vmul.f32 %v948, %v1012
        %v1017 = vmul.f32 %v949, %v1013
        %v1020 = vrot.slane %v1016, 7
        %v1021 = vrot.slane %v1017, 7
        %v1024 = vadd.f32 %v1008, %v1020
        %v1025 = vadd.f32 %v1009, %v1021
        %v1028 = vrot.slane %v960, 7
        %v1029 = vrot.slane %v961, 7
        %v1032 = vmul.f32 %v934, %v1028
        %v1033 = vmul.f32 %v935, %v1029
        %v1036 = vrot.slane %v966, 1
        %v1037 = vrot.slane %v967, 1
        %v1040 = vmul.f32 %v942, %v1036
        %v1041 = vmul.f32 %v943, %v1037
        %v1044 = vrot.slane %v1040, 7
        %v1045 = vrot.slane %v1041, 7
        %v1048 = vadd.f32 %v1032, %v1044
        %v1049 = vadd.f32 %v1033, %v1045
        %v1050 = vmul.f32 %v948, %v968
        %v1051 = vmul.f32 %v949, %v969
        %v1054 = vrot.slane %v1050, 7
        %v1055 = vrot.slane %v1051, 7
        %v1058 = vadd.f32 %v1048, %v1054
        %v1059 = vadd.f32 %v1049, %v1055
        %v1060 = vmul.f32 %v954, %v954
        %v1061 = vmul.f32 %v955, %v955
        %v1062 = vmul.f32 %v956, %v956
        %v1063 = vmul.f32 %v957, %v957
        %v1064 = vadd.f32 %v1060, %v1062
        %v1065 = vadd.f32 %v1061, %v1063
        %v1066 = vmul.f32 %v958, %v958
        %v1067 = vmul.f32 %v959, %v959
        %v1070 = vrot.slane %v1066, 1
        %v1071 = vrot.slane %v1067, 1
        %v1074 = vadd.f32 %v1064, %v1070
        %v1075 = vadd.f32 %v1065, %v1071
        %v1076 = vmul.f32 %v954, %v960
        %v1077 = vmul.f32 %v955, %v961
        %v1078 = vmul.f32 %v956, %v1036
        %v1079 = vmul.f32 %v957, %v1037
        %v1080 = vadd.f32 %v1076, %v1078
        %v1081 = vadd.f32 %v1077, %v1079
        %v1084 = vrot.slane %v968, 7
        %v1085 = vrot.slane %v969, 7
        %v1088 = vmul.f32 %v958, %v1084
        %v1089 = vmul.f32 %v959, %v1085
        %v1092 = vrot.slane %v1088, 1
        %v1093 = vrot.slane %v1089, 1
        %v1096 = vadd.f32 %v1080, %v1092
        %v1097 = vadd.f32 %v1081, %v1093
        %v1098 = vmul.f32 %v960, %v960
        %v1099 = vmul.f32 %v961, %v961
        %v1100 = vmul.f32 %v966, %v966
        %v1101 = vmul.f32 %v967, %v967
        %v1104 = vrot.slane %v1100, 1
        %v1105 = vrot.slane %v1101, 1
        %v1108 = vadd.f32 %v1098, %v1104
        %v1109 = vadd.f32 %v1099, %v1105
        %v1110 = vmul.f32 %v968, %v968
        %v1111 = vmul.f32 %v969, %v969
        %v1112 = vadd.f32 %v1108, %v1110
        %v1113 = vadd.f32 %v1109, %v1111
        %v1116 = vrot.slane %v990, 5
        %v1117 = vrot.slane %v991, 5
        %v1122 = vrot.slane %v1024, 4
        %v1123 = vrot.slane %v1025, 4
        %v1128 = vrot.slane %v1058, 3
        %v1129 = vrot.slane %v1059, 3
        %v1132 = vrot.slane %v1024, 2
        %v1133 = vrot.slane %v1025, 2
        %v1138 = vrot.slane %v1096, 7
        %v1139 = vrot.slane %v1097, 7
        %v1142 = vrot.slane %v1058, 7
        %v1143 = vrot.slane %v1059, 7
        %v1146 = vrot.slane %v1096, 5
        %v1147 = vrot.slane %v1097, 5
        %v1152 = vrot.slane %v1112, 4
        %v1153 = vrot.slane %v1113, 4
        %v1154 = vsel %vm596, %v1116, %v1122
        %v1155 = vsel %vm596, %v1117, %v1123
        %v1156 = vsel %vm599, %v1154, %v1128
        %v1157 = vsel %vm599, %v1155, %v1129
        %vm1158 = vcmask 1042432
        %v1159 = vsel %vm1158, %v1156, %v1132
        %v1160 = vsel %vm1158, %v1157, %v1133
        %vm1161 = vcmask 1043456
        %v1162 = vsel %vm1161, %v1159, %v1074
        %v1163 = vsel %vm1161, %v1160, %v1075
        %vm1164 = vcmask 1044480
        %v1165 = vsel %vm1164, %v1162, %v1138
        %v1166 = vsel %vm1164, %v1163, %v1139
        %vm1167 = vcmask 1045504
        %v1168 = vsel %vm1167, %v1165, %v1142
        %v1169 = vsel %vm1167, %v1166, %v1143
        %vm1170 = vcmask 1046528
        %v1171 = vsel %vm1170, %v1168, %v1146
        %v1172 = vsel %vm1170, %v1169, %v1147
        %vm1173 = vcmp.ge.f32.partialorder %v722, 0.1
        %vm1174 = vcmp.ge.f32.partialorder %v737, 0.1
        %v1175 = vsel %vm1173, 1, 0
        %v1176 = vsel %vm1174, 1, 0
        %v1177 = vcvt.s32.f32 %v1175
        %v1178 = vcvt.s32.f32 %v1176
        %vm1179 = vcmp.ge.f32.partialorder %v678, 0.5
        %vm1180 = vcmp.ge.f32.partialorder %v693, 0.5
        %v1181 = vsel %vm1179, 1, 0
        %v1182 = vsel %vm1180, 1, 0
        %v1183 = vcvt.s32.f32 %v1181
        %v1184 = vcvt.s32.f32 %v1182
        %v1187 = vrot.slane %v1183, 1
        %v1188 = vrot.slane %v1184, 1
        %v1191 = vmul.f32 %v1177, %v1187
        %v1192 = vmul.f32 %v1178, %v1188
        %v1193 = vsub.f32 1.0, %v1183
        %v1194 = vsub.f32 1.0, %v1184
        %v1197 = vrot.slane %v1193, 1
        %v1198 = vrot.slane %v1194, 1
        %v1201 = vmul.f32 %v1177, %v1197
        %v1202 = vmul.f32 %v1178, %v1198
        %v1205 = vrot.slane %v1191, 5
        %v1206 = vrot.slane %v1192, 5
        %v1211 = vrot.slane %v1201, 4
        %v1212 = vrot.slane %v1202, 4
        %v1215 = vsel %vm596, %v1205, %v1211
        %v1216 = vsel %vm596, %v1206, %v1212
        %1217 = vst [vmem:[%s192] sm:$0x7] %v616
        %1218 = vst [vmem:[%s192 + $0x8] sm:$0x7] %v617
        %v1221 = vrot.slane %v1171, 5
        %v1222 = vrot.slane %v1172, 5
        %v1223 = vrot.slane %v1152, 5
        %v1224 = vsel %vm1158, %v1221, %v1223
        %v1225 = vrot.slane %v1153, 5
        %v1226 = vsel %vm1158, %v1222, %v1225
        %1231 = vst [vmem:[%s192] sm:$0xf8] %v1221
        %1232 = vst [vmem:[%s192 + $0x8] sm:$0xf8] %v1222
        %1233 = vst [vmem:[%s192 + $0x10] sm:$0xf] %v1224
        %1234 = vst [vmem:[%s192 + $0x18] sm:$0xf] %v1226
        %v1237 = vrot.slane %v678, 2
        %v1238 = vrot.slane %v693, 2
        %v1243 = vrot.slane %v722, 2
        %v1244 = vrot.slane %v737, 2
        %v1247 = vsel %vm1158, %v1237, %v1243
        %v1248 = vsel %vm1158, %v1238, %v1244
        %v1251 = vrot.slane %v1247, 4
        %v1252 = vrot.slane %v1248, 4
        %1255 = vst [vmem:[%s192 + $0x10] sm:$0xf0] %v1251
        %1256 = vst [vmem:[%s192 + $0x18] sm:$0xf0] %v1252
        %1257 = vst [vmem:[%s192 + $0x20] sm:$0x3] %v1215
        %1258 = vst [vmem:[%s192 + $0x28] sm:$0x3] %v1216
        %s1259 = sand.u32 %s91, 1
        %s1260 = scalar_lea.sflag [#allocation4], %s1259
        %s1261 = sand.u32 %s91, 1
        %s1262 = smul.addr %s1261, 48
        %s1263 = scalar_lea.vmem [#allocation9], %s1262
        // Predicated region
        $region45: #{tpu_custom_call.1} parent=31 // pred_check
          %p1264 = pneg %p101
        $region46: #{tpu_custom_call.1} parent=31 // pred_check_branch
          %1266 = sbr.rel (%p1264) target = $region48
        $region47: #{tpu_custom_call.1} parent=31 // pred_region
          %s1267 = smul.u32 2, %s20
          %1269 = vsyncadd %s1260, 0
          %s1270 = smul.addr %s1267, 8
          %s1271 = scalar_lea.hbm %s3, %s1270
          %s1272 = sshll.u32 %s1263, 4
          %s1273 = int_to_ptr.vmem [resolvable:$true] %s1272
          %s1274 = sshll.u32 %s1271, 4
          %s1275 = int_to_ptr.hbm [resolvable:$true] %s1274
          %1280 = dma.vmem_to_hbm [thread:$0]  %s1273, 768, %s1275, %s1260, 256, 512, 16
        $region48: #{tpu_custom_call.1} parent=31 // pred_fallthru
          _
      $region32: #{tpu_custom_call.1} parent=5 // pred_fallthru
        _
      %p1281 = scmp.le.s32.totalorder 2, %s15
      // Predicated region
      $region49: #{tpu_custom_call.1} parent=5 // pred_check
        %p1282 = pneg %p1281
      $region50: #{tpu_custom_call.1} parent=5 // pred_check_branch
        %1284 = sbr.rel (%p1282) target = $region52
      $region51: #{tpu_custom_call.1} parent=5 // pred_region
        %s1285 = ssub.s32 %s15, 2
        // Predicated region
        $region53: #{tpu_custom_call.1} parent=51 // pred_check
          %p1286 = pneg %p107
        $region54: #{tpu_custom_call.1} parent=51 // pred_check_branch
          %1288 = sbr.rel (%p1286) target = $region56
        $region55: #{tpu_custom_call.1} parent=51 // pred_region
          %s1289 = sand.u32 %s92, 1
          %s1290 = scalar_lea.sflag [#allocation4], %s1289
          %s1291 = sand.u32 %s92, 1
          %s1292 = smul.addr %s1291, 48
          %s1293 = scalar_lea.vmem [#allocation9], %s1292
          %1295 = dma.done %s1290, 768
        $region56: #{tpu_custom_call.1} parent=51 // pred_fallthru
          _
      $region52: #{tpu_custom_call.1} parent=5 // pred_fallthru
        _
    $region6: #{tpu_custom_call.1} parent=1 // loop_footer
      %s19 = sadd.s32 1, %s15
    $region7: #{tpu_custom_call.1} parent=1 // loop_footer_branch
      %14 = sbr.rel target = $region3
    $region8: #{tpu_custom_call.1} parent=1 // loop_exit
      _
    %1296 = vsyncpa [#allocation3], 1
    %s1297 = scalar_lea.sflag [#allocation3], 1
    %1298 = vsyncpa %s1297, 1
    %1299 = vsyncpa [#allocation4], 1
    %s1300 = scalar_lea.sflag [#allocation4], 1
    %1301 = vsyncpa %s1300, 1
    %1302 = vsyncpa [#allocation5], 1
    %s1303 = scalar_lea.sflag [#allocation5], 1
    %1304 = vsyncpa %s1303, 1
    %1305 = vsyncpa [#allocation7], 1

// kernel: tpu_custom_call.1
$region0: #{tpu_custom_call.1}
  #allocation0 [shape = 'u32[]', space=smem, size = 0x4, offset = 0x4, fixed_abs, tag = 'smem constant byte address 0x4 - core index']
  #allocation1 [shape = 'u32[72,128]{1,0:T(1,128)}', space=vmem, size = 0x9000, scoped, tag = 'internal scratch']
  %s0 = inlined_call_operand.hbm [shape: f32[4], index: 0, kind: input, shape index: {}]
  %s1 = inlined_call_operand.hbm [shape: s32[3], index: 1, kind: input, shape index: {}]
  %s2 = inlined_call_operand.hbm [shape: bf16[32,256], index: 2, kind: input, shape index: {}]
  %s3 = inlined_call_operand.hbm [shape: f32[18,512], index: 3, kind: output, shape index: {}]
  %s4 = sld [smem:[#allocation0]]
  $region57: #{tpu_custom_call.1} parent=0
    _
  %s6 = ssub.s32 1, %s4
  %s7 = scalar_select 0, %s6, %s4
  $region1: #{tpu_custom_call.1} parent=0
    #allocation2 [shape = 'u8[512]{0}', space=smem, size = 0x200, scoped, tag = 'input window, operand 0, single buffered']
    #allocation3 [shape = 's32[2]{0}', space=sflag, size = 0x8, scoped, tag = 'scoped memory for tpu_custom_call.1']
    #allocation4 [shape = 's32[2]{0}', space=sflag, size = 0x8, scoped, tag = 'scoped memory for tpu_custom_call.1']
    #allocation5 [shape = 's32[2]{0}', space=sflag, size = 0x8, scoped, tag = 'scoped memory for tpu_custom_call.1']
    #allocation6 [shape = 'u8[512]{0}', space=smem, size = 0x200, scoped, tag = 'input window, operand 1, single buffered']
    #allocation7 [shape = 's32[1]{0}', space=sflag, size = 0x4, scoped, tag = 'scoped memory for tpu_custom_call.1']
    #allocation8 [shape = 'u8[16384]{0}', space=vmem, size = 0x4000, scoped, tag = 'input window, operand 2, single buffered']
    #allocation9 [shape = 'u8[49152]{0}', space=vmem, size = 0xc000, scoped, tag = 'output window, operand 0']
    %8 = vsyncpa [#allocation5], 0
    %9 = vsyncpa [#allocation7], 0
    %10 = vsyncpa [#allocation3], 0
    %11 = vsyncpa [#allocation4], 0
    %s12 = scalar_lea.sflag [#allocation4], 1
    %13 = vsyncpa %s12, 0
    loop: start=0, step=1, limit=4
    $region2: #{tpu_custom_call.1} parent=1 // loop_pre_header
      _
    $region3: #{tpu_custom_call.1} parent=1 // loop_header
      %s15 = sphi 0, %s19
      %p16 = scmp.ge.s32.totalorder %s15, 4
      %s23 = sphi 0, %s23
      %s25 = sphi 0, %s23
      %s26 = sphi 0, %s25
      %s40 = sphi 0, %s26
      %s44 = sphi 0, %s44
      %s46 = sphi 0, %s44
      %s47 = sphi 0, %s46
      %s61 = sphi 0, %s47
      %s65 = sphi 0, %s65
      %s67 = sphi 0, %s65
      %s68 = sphi 0, %s67
      %s82 = sphi 0, %s68
      %s88 = sphi 0, %s90
      %s91 = sphi 0, %s88
      %s92 = sphi 0, %s91
      %s108 = sphi 0, %s92
    $region4: #{tpu_custom_call.1} parent=1 // loop_header_branch
      %18 = sbr.rel (%p16) target = $region8
    $region5: #{tpu_custom_call.1} parent=1 // loop_body
      %s20 = ssub.s32 %s15, 1
      %s21 = ssub.s32 %s15, 2
      %s22 = sadd.s32 %s15, 1
      %s24 = sadd.s32 %s23, 1
      %p27 = scmp.eq.s32.totalorder %s15, 1
      %p28 = scmp.ne.s32.totalorder %s23, %s25
      %p29 = scmp.eq.s32.totalorder %s15, 0
      %p30 = por %p28, %p29
      %p31 = scmp.ne.s32.totalorder %s23, %s25
      %p32 = scmp.eq.s32.totalorder %s20, 1
      %p33 = por %p31, %p32
      %p34 = scmp.ne.s32.totalorder %s25, %s26
      %p35 = scmp.eq.s32.totalorder %s20, 0
      %p36 = por %p34, %p35
      %p37 = scmp.ne.s32.totalorder %s25, %s26
      %p38 = scmp.eq.s32.totalorder %s21, 1
      %p39 = por %p37, %p38
      %p41 = scmp.ne.s32.totalorder %s26, %s40
      %p42 = scmp.eq.s32.totalorder %s21, 0
      %p43 = por %p41, %p42
      %s45 = sadd.s32 %s44, 1
      %p48 = scmp.eq.s32.totalorder %s15, 1
      %p49 = scmp.ne.s32.totalorder %s44, %s46
      %p50 = scmp.eq.s32.totalorder %s15, 0
      %p51 = por %p49, %p50
      %p52 = scmp.ne.s32.totalorder %s44, %s46
      %p53 = scmp.eq.s32.totalorder %s20, 1
      %p54 = por %p52, %p53
      %p55 = scmp.ne.s32.totalorder %s46, %s47
      %p56 = scmp.eq.s32.totalorder %s20, 0
      %p57 = por %p55, %p56
      %p58 = scmp.ne.s32.totalorder %s46, %s47
      %p59 = scmp.eq.s32.totalorder %s21, 1
      %p60 = por %p58, %p59
      %p62 = scmp.ne.s32.totalorder %s47, %s61
      %p63 = scmp.eq.s32.totalorder %s21, 0
      %p64 = por %p62, %p63
      %s66 = sadd.s32 %s65, 1
      %p69 = scmp.eq.s32.totalorder %s15, 1
      %p70 = scmp.ne.s32.totalorder %s65, %s67
      %p71 = scmp.eq.s32.totalorder %s15, 0
      %p72 = por %p70, %p71
      %p73 = scmp.ne.s32.totalorder %s65, %s67
      %p74 = scmp.eq.s32.totalorder %s20, 1
      %p75 = por %p73, %p74
      %p76 = scmp.ne.s32.totalorder %s67, %s68
      %p77 = scmp.eq.s32.totalorder %s20, 0
      %p78 = por %p76, %p77
      %p79 = scmp.ne.s32.totalorder %s67, %s68
      %p80 = scmp.eq.s32.totalorder %s21, 1
      %p81 = por %p79, %p80
      %p83 = scmp.ne.s32.totalorder %s68, %s82
      %p84 = scmp.eq.s32.totalorder %s21, 0
      %p85 = por %p83, %p84
      %s86 = ssub.s32 %s15, %s22
      %p87 = scmp.eq.s32.totalorder %s86, 0
      %s89 = sadd.s32 %s88, 1
      %s90 = scalar_select %p87, %s88, %s89
      %p93 = pneg %p87
      %p94 = scmp.eq.s32.totalorder %s15, 1
      %p95 = por %p93, %p94
      %p96 = scmp.ne.s32.totalorder %s88, %s91
      %p97 = scmp.eq.s32.totalorder %s15, 0
      %p98 = por %p96, %p97
      %p99 = scmp.ne.s32.totalorder %s88, %s91
      %p100 = scmp.eq.s32.totalorder %s20, 1
      %p101 = por %p99, %p100
      %p102 = scmp.ne.s32.totalorder %s91, %s92
      %p103 = scmp.eq.s32.totalorder %s20, 0
      %p104 = por %p102, %p103
      %p105 = scmp.ne.s32.totalorder %s91, %s92
      %p106 = scmp.eq.s32.totalorder %s21, 1
      %p107 = por %p105, %p106
      %p109 = scmp.ne.s32.totalorder %s92, %s108
      %p110 = scmp.eq.s32.totalorder %s21, 0
      %p111 = por %p109, %p110
      %p112 = scmp.le.s32.totalorder 1, %s15
      %p113 = scmp.lt.s32.totalorder %s15, 3
      %p114 = pnand %p112, %p113
      %p115 = pneg %p114
      // Predicated region
      $region9: #{tpu_custom_call.1} parent=5 // pred_check
        _
      $region10: #{tpu_custom_call.1} parent=5 // pred_check_branch
        %117 = sbr.rel (%p114) target = $region12
      $region11: #{tpu_custom_call.1} parent=5 // pred_region
        %s118 = ssub.s32 %s15, 1
        // Predicated region
        $region13: #{tpu_custom_call.1} parent=11 // pred_check
          %p119 = pneg %p36
        $region14: #{tpu_custom_call.1} parent=11 // pred_check_branch
          %121 = sbr.rel (%p119) target = $region16
        $region15: #{tpu_custom_call.1} parent=11 // pred_region
          %123 = vsyncadd [#allocation5], 0
          %s125 = sshll.u32 %s0, 4
          %s126 = int_to_ptr.hbm [resolvable:$true] %s125
          %128 = dma.hbm_to_smem %s126, 16, [#allocation2], [#allocation5]
        $region16: #{tpu_custom_call.1} parent=11 // pred_fallthru
          _
        // Predicated region
        $region17: #{tpu_custom_call.1} parent=11 // pred_check
          %p129 = pneg %p57
        $region18: #{tpu_custom_call.1} parent=11 // pred_check_branch
          %131 = sbr.rel (%p129) target = $region20
        $region19: #{tpu_custom_call.1} parent=11 // pred_region
          %133 = vsyncadd [#allocation7], 0
          %s135 = sshll.u32 %s1, 4
          %s136 = int_to_ptr.hbm [resolvable:$true] %s135
          %138 = dma.hbm_to_smem %s136, 16, [#allocation6], [#allocation7]
        $region20: #{tpu_custom_call.1} parent=11 // pred_fallthru
          _
        // Predicated region
        $region21: #{tpu_custom_call.1} parent=11 // pred_check
          %p139 = pneg %p78
        $region22: #{tpu_custom_call.1} parent=11 // pred_check_branch
          %141 = sbr.rel (%p139) target = $region24
        $region23: #{tpu_custom_call.1} parent=11 // pred_region
          %143 = vsyncadd [#allocation3], 0
          %s144 = sshll.u32 %s2, 4
          %s145 = int_to_ptr.hbm [resolvable:$true] %s144
          %s146 = sshll.u32 [#allocation8], 4
          %s147 = int_to_ptr.vmem [resolvable:$true] %s146
          %152 = dma.hbm_to_vmem [thread:$0]  %s145, 512, %s147, [#allocation3], 128, 128, 8
        $region24: #{tpu_custom_call.1} parent=11 // pred_fallthru
          _
      $region12: #{tpu_custom_call.1} parent=5 // pred_fallthru
        _
      %p153 = scmp.lt.s32.totalorder %s15, 2
      // Predicated region
      $region25: #{tpu_custom_call.1} parent=5 // pred_check
        %p154 = pneg %p153
      $region26: #{tpu_custom_call.1} parent=5 // pred_check_branch
        %156 = sbr.rel (%p154) target = $region28
      $region27: #{tpu_custom_call.1} parent=5 // pred_region
        _
      $region28: #{tpu_custom_call.1} parent=5 // pred_fallthru
        _
      %p157 = scmp.le.s32.totalorder 1, %s15
      %p158 = scmp.lt.s32.totalorder %s15, 3
      %p159 = pnand %p157, %p158
      %p160 = pneg %p159
      // Predicated region
      $region29: #{tpu_custom_call.1} parent=5 // pred_check
        _
      $region30: #{tpu_custom_call.1} parent=5 // pred_check_branch
        %162 = sbr.rel (%p159) target = $region32
      $region31: #{tpu_custom_call.1} parent=5 // pred_region
        %s163 = ssub.s32 %s15, 1
        // Predicated region
        $region33: #{tpu_custom_call.1} parent=31 // pred_check
          %p164 = pneg %p36
        $region34: #{tpu_custom_call.1} parent=31 // pred_check_branch
          %166 = sbr.rel (%p164) target = $region36
        $region35: #{tpu_custom_call.1} parent=31 // pred_region
          %168 = dma.done [#allocation5], 16
        $region36: #{tpu_custom_call.1} parent=31 // pred_fallthru
          _
        // Predicated region
        $region37: #{tpu_custom_call.1} parent=31 // pred_check
          %p169 = pneg %p57
        $region38: #{tpu_custom_call.1} parent=31 // pred_check_branch
          %171 = sbr.rel (%p169) target = $region40
        $region39: #{tpu_custom_call.1} parent=31 // pred_region
          %173 = dma.done [#allocation7], 16
        $region40: #{tpu_custom_call.1} parent=31 // pred_fallthru
          _
        // Predicated region
        $region41: #{tpu_custom_call.1} parent=31 // pred_check
          %p174 = pneg %p78
        $region42: #{tpu_custom_call.1} parent=31 // pred_check_branch
          %176 = sbr.rel (%p174) target = $region44
        $region43: #{tpu_custom_call.1} parent=31 // pred_region
          %178 = dma.done [#allocation3], 512
        $region44: #{tpu_custom_call.1} parent=31 // pred_fallthru
          _
        %179 = sfence
        %p180 = pneg %p36
        %p181 = pneg %p33
        %p182 = pneg %p57
        %p183 = pneg %p54
        %p184 = pneg %p78
        %p185 = pneg %p75
        %p186 = pneg %p104
        %p187 = pneg %p101
        %s188 = sand.u32 %s91, 1
        %s189 = scalar_lea.sflag [#allocation4], %s188
        %s190 = sand.u32 %s91, 1
        %s191 = smul.addr %s190, 48
        %s192 = scalar_lea.vmem [#allocation9], %s191
        %s193 = smul.u32 2, %s20
        %s194 = sld [smem:[#allocation2]]
        %s195 = sld [smem:[#allocation2 + $0x1]]
        %s196 = sld [smem:[#allocation2 + $0x2]]
        %s197 = sld [smem:[#allocation2 + $0x3]]
        %s198 = sld [smem:[#allocation6]]
        %s199 = sld [smem:[#allocation6 + $0x1]]
        %s200 = sld [smem:[#allocation6 + $0x2]]
        %s201 = smul.u32 %s20, 256
        %v202 = vlaneseq
        %v203 = vand.u32 %v202, 127
        %v204 = vadd.s32 %v203, 128
        %v205 = vstv %s201
        %v206 = vadd.s32 %v205, %v203
        %v207 = vadd.s32 %v205, %v204
        %v208 = vand.u32 %v206, 7
        %v209 = vand.u32 %v207, 7
        %v210 = vstv %s200
        %v211 = vadd.s32 %v208, %v210
        %v212 = vadd.s32 %v209, %v210
        %v213 = vshra.s32 %v206, 3
        %v214 = vshra.s32 %v207, 3
        %v215 = vand.u32 %v213, 7
        %v216 = vand.u32 %v214, 7
        %v217 = vstv %s199
        %v218 = vadd.s32 %v215, %v217
        %v219 = vadd.s32 %v216, %v217
        %v220 = vshra.s32 %v206, 6
        %v221 = vshra.s32 %v207, 6
        %v222 = vstv %s198
        %v223 = vadd.s32 %v220, %v222
        %v224 = vadd.s32 %v221, %v222
        %v225 = vmul.u32 %v218, 2654435761
        %v226 = vmul.u32 %v219, 2654435761
        %v227 = vxor.u32 %v223, %v225
        %v228 = vxor.u32 %v224, %v226
        %v229 = vmul.u32 %v211, 805459861
        %v230 = vmul.u32 %v212, 805459861
        %v231 = vxor.u32 %v227, %v229
        %v232 = vxor.u32 %v228, %v230
        %v233 = vand.u32 %v231, 255
        %v234 = vand.u32 %v232, 255
        %v235 = vlaneseq
        %v236 = vshrl.u32 %v235, 7
        %v237 = vadd.s32 %v236, 8
        %v238 = vadd.s32 %v236, 16
        %v239 = vadd.s32 %v236, 24
        %v240 = vadd.s32 %v236, 32
        %v241 = vadd.s32 %v236, 40
        %v242 = vadd.s32 %v236, 48
        %v243 = vadd.s32 %v236, 56
        %v244 = vadd.s32 %v236, 64
        %v245 = vadd.s32 %v236, 72
        %v246 = vadd.s32 %v236, 80
        %v247 = vadd.s32 %v236, 88
        %v248 = vadd.s32 %v236, 96
        %v249 = vadd.s32 %v236, 104
        %v250 = vadd.s32 %v236, 112
        %v251 = vadd.s32 %v236, 120
        %v252 = vadd.s32 %v236, 128
        %v253 = vadd.s32 %v236, 136
        %v254 = vadd.s32 %v236, 144
        %v255 = vadd.s32 %v236, 152
        %v256 = vadd.s32 %v236, 160
        %v257 = vadd.s32 %v236, 168
        %v258 = vadd.s32 %v236, 176
        %v259 = vadd.s32 %v236, 184
        %v260 = vadd.s32 %v236, 192
        %v261 = vadd.s32 %v236, 200
        %v262 = vadd.s32 %v236, 208
        %v263 = vadd.s32 %v236, 216
        %v264 = vadd.s32 %v236, 224
        %v265 = vadd.s32 %v236, 232
        %v266 = vadd.s32 %v236, 240
        %v267 = vadd.s32 %v236, 248
        %vm268 = vcmp.eq.s32.totalorder %v236, %v233
        %vm269 = vcmp.eq.s32.totalorder %v236, %v234
        %vm270 = vcmp.eq.s32.totalorder %v237, %v233
        %vm271 = vcmp.eq.s32.totalorder %v237, %v234
        %vm272 = vcmp.eq.s32.totalorder %v238, %v233
        %vm273 = vcmp.eq.s32.totalorder %v238, %v234
        %vm274 = vcmp.eq.s32.totalorder %v239, %v233
        %vm275 = vcmp.eq.s32.totalorder %v239, %v234
        %vm276 = vcmp.eq.s32.totalorder %v240, %v233
        %vm277 = vcmp.eq.s32.totalorder %v240, %v234
        %vm278 = vcmp.eq.s32.totalorder %v241, %v233
        %vm279 = vcmp.eq.s32.totalorder %v241, %v234
        %vm280 = vcmp.eq.s32.totalorder %v242, %v233
        %vm281 = vcmp.eq.s32.totalorder %v242, %v234
        %vm282 = vcmp.eq.s32.totalorder %v243, %v233
        %vm283 = vcmp.eq.s32.totalorder %v243, %v234
        %vm284 = vcmp.eq.s32.totalorder %v244, %v233
        %vm285 = vcmp.eq.s32.totalorder %v244, %v234
        %vm286 = vcmp.eq.s32.totalorder %v245, %v233
        %vm287 = vcmp.eq.s32.totalorder %v245, %v234
        %vm288 = vcmp.eq.s32.totalorder %v246, %v233
        %vm289 = vcmp.eq.s32.totalorder %v246, %v234
        %vm290 = vcmp.eq.s32.totalorder %v247, %v233
        %vm291 = vcmp.eq.s32.totalorder %v247, %v234
        %vm292 = vcmp.eq.s32.totalorder %v248, %v233
        %vm293 = vcmp.eq.s32.totalorder %v248, %v234
        %vm294 = vcmp.eq.s32.totalorder %v249, %v233
        %vm295 = vcmp.eq.s32.totalorder %v249, %v234
        %vm296 = vcmp.eq.s32.totalorder %v250, %v233
        %vm297 = vcmp.eq.s32.totalorder %v250, %v234
        %vm298 = vcmp.eq.s32.totalorder %v251, %v233
        %vm299 = vcmp.eq.s32.totalorder %v251, %v234
        %vm300 = vcmp.eq.s32.totalorder %v252, %v233
        %vm301 = vcmp.eq.s32.totalorder %v252, %v234
        %vm302 = vcmp.eq.s32.totalorder %v253, %v233
        %vm303 = vcmp.eq.s32.totalorder %v253, %v234
        %vm304 = vcmp.eq.s32.totalorder %v254, %v233
        %vm305 = vcmp.eq.s32.totalorder %v254, %v234
        %vm306 = vcmp.eq.s32.totalorder %v255, %v233
        %vm307 = vcmp.eq.s32.totalorder %v255, %v234
        %vm308 = vcmp.eq.s32.totalorder %v256, %v233
        %vm309 = vcmp.eq.s32.totalorder %v256, %v234
        %vm310 = vcmp.eq.s32.totalorder %v257, %v233
        %vm311 = vcmp.eq.s32.totalorder %v257, %v234
        %vm312 = vcmp.eq.s32.totalorder %v258, %v233
        %vm313 = vcmp.eq.s32.totalorder %v258, %v234
        %vm314 = vcmp.eq.s32.totalorder %v259, %v233
        %vm315 = vcmp.eq.s32.totalorder %v259, %v234
        %vm316 = vcmp.eq.s32.totalorder %v260, %v233
        %vm317 = vcmp.eq.s32.totalorder %v260, %v234
        %vm318 = vcmp.eq.s32.totalorder %v261, %v233
        %vm319 = vcmp.eq.s32.totalorder %v261, %v234
        %vm320 = vcmp.eq.s32.totalorder %v262, %v233
        %vm321 = vcmp.eq.s32.totalorder %v262, %v234
        %vm322 = vcmp.eq.s32.totalorder %v263, %v233
        %vm323 = vcmp.eq.s32.totalorder %v263, %v234
        %vm324 = vcmp.eq.s32.totalorder %v264, %v233
        %vm325 = vcmp.eq.s32.totalorder %v264, %v234
        %vm326 = vcmp.eq.s32.totalorder %v265, %v233
        %vm327 = vcmp.eq.s32.totalorder %v265, %v234
        %vm328 = vcmp.eq.s32.totalorder %v266, %v233
        %vm329 = vcmp.eq.s32.totalorder %v266, %v234
        %vm330 = vcmp.eq.s32.totalorder %v267, %v233
        %vm331 = vcmp.eq.s32.totalorder %v267, %v234
        %v332 = vsel %vm268, 1, 0
        %v333 = vsel %vm269, 1, 0
        %v334 = vsel %vm270, 1, 0
        %v335 = vsel %vm271, 1, 0
        %v336 = vsel %vm272, 1, 0
        %v337 = vsel %vm273, 1, 0
        %v338 = vsel %vm274, 1, 0
        %v339 = vsel %vm275, 1, 0
        %v340 = vsel %vm276, 1, 0
        %v341 = vsel %vm277, 1, 0
        %v342 = vsel %vm278, 1, 0
        %v343 = vsel %vm279, 1, 0
        %v344 = vsel %vm280, 1, 0
        %v345 = vsel %vm281, 1, 0
        %v346 = vsel %vm282, 1, 0
        %v347 = vsel %vm283, 1, 0
        %v348 = vsel %vm284, 1, 0
        %v349 = vsel %vm285, 1, 0
        %v350 = vsel %vm286, 1, 0
        %v351 = vsel %vm287, 1, 0
        %v352 = vsel %vm288, 1, 0
        %v353 = vsel %vm289, 1, 0
        %v354 = vsel %vm290, 1, 0
        %v355 = vsel %vm291, 1, 0
        %v356 = vsel %vm292, 1, 0
        %v357 = vsel %vm293, 1, 0
        %v358 = vsel %vm294, 1, 0
        %v359 = vsel %vm295, 1, 0
        %v360 = vsel %vm296, 1, 0
        %v361 = vsel %vm297, 1, 0
        %v362 = vsel %vm298, 1, 0
        %v363 = vsel %vm299, 1, 0
        %v364 = vsel %vm300, 1, 0
        %v365 = vsel %vm301, 1, 0
        %v366 = vsel %vm302, 1, 0
        %v367 = vsel %vm303, 1, 0
        %v368 = vsel %vm304, 1, 0
        %v369 = vsel %vm305, 1, 0
        %v370 = vsel %vm306, 1, 0
        %v371 = vsel %vm307, 1, 0
        %v372 = vsel %vm308, 1, 0
        %v373 = vsel %vm309, 1, 0
        %v374 = vsel %vm310, 1, 0
        %v375 = vsel %vm311, 1, 0
        %v376 = vsel %vm312, 1, 0
        %v377 = vsel %vm313, 1, 0
        %v378 = vsel %vm314, 1, 0
        %v379 = vsel %vm315, 1, 0
        %v380 = vsel %vm316, 1, 0
        %v381 = vsel %vm317, 1, 0
        %v382 = vsel %vm318, 1, 0
        %v383 = vsel %vm319, 1, 0
        %v384 = vsel %vm320, 1, 0
        %v385 = vsel %vm321, 1, 0
        %v386 = vsel %vm322, 1, 0
        %v387 = vsel %vm323, 1, 0
        %v388 = vsel %vm324, 1, 0
        %v389 = vsel %vm325, 1, 0
        %v390 = vsel %vm326, 1, 0
        %v391 = vsel %vm327, 1, 0
        %v392 = vsel %vm328, 1, 0
        %v393 = vsel %vm329, 1, 0
        %v394 = vsel %vm330, 1, 0
        %v395 = vsel %vm331, 1, 0
        %v396 = vcvt.s32.f32 %v332
        %v397 = vcvt.s32.f32 %v333
        %v398 = vcvt.s32.f32 %v334
        %v399 = vcvt.s32.f32 %v335
        %v400 = vcvt.s32.f32 %v336
        %v401 = vcvt.s32.f32 %v337
        %v402 = vcvt.s32.f32 %v338
        %v403 = vcvt.s32.f32 %v339
        %v404 = vcvt.s32.f32 %v340
        %v405 = vcvt.s32.f32 %v341
        %v406 = vcvt.s32.f32 %v342
        %v407 = vcvt.s32.f32 %v343
        %v408 = vcvt.s32.f32 %v344
        %v409 = vcvt.s32.f32 %v345
        %v410 = vcvt.s32.f32 %v346
        %v411 = vcvt.s32.f32 %v347
        %v412 = vcvt.s32.f32 %v348
        %v413 = vcvt.s32.f32 %v349
        %v414 = vcvt.s32.f32 %v350
        %v415 = vcvt.s32.f32 %v351
        %v416 = vcvt.s32.f32 %v352
        %v417 = vcvt.s32.f32 %v353
        %v418 = vcvt.s32.f32 %v354
        %v419 = vcvt.s32.f32 %v355
        %v420 = vcvt.s32.f32 %v356
        %v421 = vcvt.s32.f32 %v357
        %v422 = vcvt.s32.f32 %v358
        %v423 = vcvt.s32.f32 %v359
        %v424 = vcvt.s32.f32 %v360
        %v425 = vcvt.s32.f32 %v361
        %v426 = vcvt.s32.f32 %v362
        %v427 = vcvt.s32.f32 %v363
        %v428 = vcvt.s32.f32 %v364
        %v429 = vcvt.s32.f32 %v365
        %v430 = vcvt.s32.f32 %v366
        %v431 = vcvt.s32.f32 %v367
        %v432 = vcvt.s32.f32 %v368
        %v433 = vcvt.s32.f32 %v369
        %v434 = vcvt.s32.f32 %v370
        %v435 = vcvt.s32.f32 %v371
        %v436 = vcvt.s32.f32 %v372
        %v437 = vcvt.s32.f32 %v373
        %v438 = vcvt.s32.f32 %v374
        %v439 = vcvt.s32.f32 %v375
        %v440 = vcvt.s32.f32 %v376
        %v441 = vcvt.s32.f32 %v377
        %v442 = vcvt.s32.f32 %v378
        %v443 = vcvt.s32.f32 %v379
        %v444 = vcvt.s32.f32 %v380
        %v445 = vcvt.s32.f32 %v381
        %v446 = vcvt.s32.f32 %v382
        %v447 = vcvt.s32.f32 %v383
        %v448 = vcvt.s32.f32 %v384
        %v449 = vcvt.s32.f32 %v385
        %v450 = vcvt.s32.f32 %v386
        %v451 = vcvt.s32.f32 %v387
        %v452 = vcvt.s32.f32 %v388
        %v453 = vcvt.s32.f32 %v389
        %v454 = vcvt.s32.f32 %v390
        %v455 = vcvt.s32.f32 %v391
        %v456 = vcvt.s32.f32 %v392
        %v457 = vcvt.s32.f32 %v393
        %v458 = vcvt.s32.f32 %v394
        %v459 = vcvt.s32.f32 %v395
        %v460 = vpack.c.bf16 %v398, %v396
        %v461 = vpack.c.bf16 %v399, %v397
        %v462 = vpack.c.bf16 %v402, %v400
        %v463 = vpack.c.bf16 %v403, %v401
        %v464 = vpack.c.bf16 %v406, %v404
        %v465 = vpack.c.bf16 %v407, %v405
        %v466 = vpack.c.bf16 %v410, %v408
        %v467 = vpack.c.bf16 %v411, %v409
        %v468 = vpack.c.bf16 %v414, %v412
        %v469 = vpack.c.bf16 %v415, %v413
        %v470 = vpack.c.bf16 %v418, %v416
        %v471 = vpack.c.bf16 %v419, %v417
        %v472 = vpack.c.bf16 %v422, %v420
        %v473 = vpack.c.bf16 %v423, %v421
        %v474 = vpack.c.bf16 %v426, %v424
        %v475 = vpack.c.bf16 %v427, %v425
        %v476 = vpack.c.bf16 %v430, %v428
        %v477 = vpack.c.bf16 %v431, %v429
        %v478 = vpack.c.bf16 %v434, %v432
        %v479 = vpack.c.bf16 %v435, %v433
        %v480 = vpack.c.bf16 %v438, %v436
        %v481 = vpack.c.bf16 %v439, %v437
        %v482 = vpack.c.bf16 %v442, %v440
        %v483 = vpack.c.bf16 %v443, %v441
        %v484 = vpack.c.bf16 %v446, %v444
        %v485 = vpack.c.bf16 %v447, %v445
        %v486 = vpack.c.bf16 %v450, %v448
        %v487 = vpack.c.bf16 %v451, %v449
        %v488 = vpack.c.bf16 %v454, %v452
        %v489 = vpack.c.bf16 %v455, %v453
        %v490 = vpack.c.bf16 %v458, %v456
        %v491 = vpack.c.bf16 %v459, %v457
        %v492 = vld [vmem:[#allocation8] sm:$0xff]
        %v493 = vld [vmem:[#allocation8 + $0x8] sm:$0xff]
        %v494 = vld [vmem:[#allocation8 + $0x10] sm:$0xff]
        %v495 = vld [vmem:[#allocation8 + $0x18] sm:$0xff]
        %v500 = vunpack.c.l.b16 %v492
        %v501 = vunpack.c.h.b16 %v492
        %v502 = vunpack.c.l.b16 %v493
        %v503 = vunpack.c.h.b16 %v493
        %v504 = vunpack.c.l.b16 %v494
        %v505 = vunpack.c.h.b16 %v494
        %v506 = vunpack.c.l.b16 %v495
        %v507 = vunpack.c.h.b16 %v495
        %v508 = vpack.c.b16 %v502, %v500
        %v509 = vpack.c.b16 %v503, %v501
        %v510 = vpack.c.b16 %v506, %v504
        %v511 = vpack.c.b16 %v507, %v505
        %516 = vmatpush.bf16.msra.mxu0 %v474
        %517 = vmatpush.bf16.msra.mxu0 %v472
        %518 = vmatpush.bf16.msra.mxu0 %v470
        %519 = vmatpush.bf16.msra.mxu0 %v468
        %520 = vmatpush.bf16.msra.mxu0 %v466
        %521 = vmatpush.bf16.msra.mxu0 %v464
        %522 = vmatpush.bf16.msra.mxu0 %v462
        %523 = vmatpush.bf16.msra.mxu0 %v460
        %524 = vmatmul.bf16.gmra.mxu0 %v508
        %v525 = vpop.f32.mrf.mxu0
        %v526 = vadd.f32 0.0, %v525
        %v527 = vpop.f32.mrf.mxu0
        %v528 = vadd.f32 0.0, %v527
        %529 = vmatmul.bf16.gmra.mxu0 %v510
        %v530 = vpop.f32.mrf.mxu0
        %v531 = vadd.f32 0.0, %v530
        %v532 = vpop.f32.mrf.mxu0
        %v533 = vadd.f32 0.0, %v532
        %534 = vdwg.mxu0
        %535 = vmatpush.bf16.msra.mxu0 %v490
        %536 = vmatpush.bf16.msra.mxu0 %v488
        %537 = vmatpush.bf16.msra.mxu0 %v486
        %538 = vmatpush.bf16.msra.mxu0 %v484
        %539 = vmatpush.bf16.msra.mxu0 %v482
        %540 = vmatpush.bf16.msra.mxu0 %v480
        %541 = vmatpush.bf16.msra.mxu0 %v478
        %542 = vmatpush.bf16.msra.mxu0 %v476
        %543 = vmatmul.bf16.gmra.mxu0 %v509
        %v544 = vpop.f32.mrf.mxu0
        %v545 = vadd.f32 %v526, %v544
        %v546 = vpop.f32.mrf.mxu0
        %v547 = vadd.f32 %v528, %v546
        %548 = vmatmul.bf16.gmra.mxu0 %v511
        %v549 = vpop.f32.mrf.mxu0
        %v550 = vadd.f32 %v531, %v549
        %v551 = vpop.f32.mrf.mxu0
        %v552 = vadd.f32 %v533, %v551
        %553 = vdwg.mxu0
        %554 = vmatpush.bf16.msra.mxu0 %v475
        %555 = vmatpush.bf16.msra.mxu0 %v473
        %556 = vmatpush.bf16.msra.mxu0 %v471
        %557 = vmatpush.bf16.msra.mxu0 %v469
        %558 = vmatpush.bf16.msra.mxu0 %v467
        %559 = vmatpush.bf16.msra.mxu0 %v465
        %560 = vmatpush.bf16.msra.mxu0 %v463
        %561 = vmatpush.bf16.msra.mxu0 %v461
        %562 = vmatmul.bf16.gmra.mxu0 %v508
        %v563 = vpop.f32.mrf.mxu0
        %v564 = vadd.f32 0.0, %v563
        %v565 = vpop.f32.mrf.mxu0
        %v566 = vadd.f32 0.0, %v565
        %567 = vmatmul.bf16.gmra.mxu0 %v510
        %v568 = vpop.f32.mrf.mxu0
        %v569 = vadd.f32 0.0, %v568
        %v570 = vpop.f32.mrf.mxu0
        %v571 = vadd.f32 0.0, %v570
        %572 = vdwg.mxu0
        %573 = vmatpush.bf16.msra.mxu0 %v491
        %574 = vmatpush.bf16.msra.mxu0 %v489
        %575 = vmatpush.bf16.msra.mxu0 %v487
        %576 = vmatpush.bf16.msra.mxu0 %v485
        %577 = vmatpush.bf16.msra.mxu0 %v483
        %578 = vmatpush.bf16.msra.mxu0 %v481
        %579 = vmatpush.bf16.msra.mxu0 %v479
        %580 = vmatpush.bf16.msra.mxu0 %v477
        %581 = vmatmul.bf16.gmra.mxu0 %v509
        %v582 = vpop.f32.mrf.mxu0
        %v583 = vadd.f32 %v564, %v582
        %v584 = vpop.f32.mrf.mxu0
        %v585 = vadd.f32 %v566, %v584
        %586 = vmatmul.bf16.gmra.mxu0 %v511
        %v587 = vpop.f32.mrf.mxu0
        %v588 = vadd.f32 %v569, %v587
        %v589 = vpop.f32.mrf.mxu0
        %v590 = vadd.f32 %v571, %v589
        %591 = vdwg.mxu0
        %v592 = vadd.f32 %v545, %v550
        %v593 = vadd.f32 %v583, %v588
        %v594 = vadd.f32 %v547, %v552
        %v595 = vadd.f32 %v585, %v590
        %vm596 = vcmask 1040384
        %v597 = vsel %vm596, %v223, %v218
        %v598 = vsel %vm596, %v224, %v219
        %vm599 = vcmask 1041408
        %v600 = vsel %vm599, %v597, %v211
        %v601 = vsel %vm599, %v598, %v212
        %v602 = vcvt.s32.f32 %v600
        %v603 = vcvt.s32.f32 %v601
        %v604 = vstv %s194
        %v605 = vmul.f32 %v592, %v604
        %v606 = vmul.f32 %v593, %v604
        %v607 = vstv %s195
        %v608 = vadd.f32 %v605, %v607
        %v609 = vadd.f32 %v606, %v607
        %v610 = vstv %s196
        %v611 = vmul.f32 %v602, %v610
        %v612 = vmul.f32 %v603, %v610
        %v613 = vstv %s197
        %v614 = vadd.f32 %v611, %v613
        %v615 = vadd.f32 %v612, %v613
        %v616 = vadd.f32 %v608, %v614
        %v617 = vadd.f32 %v609, %v615
        %v618 = vxor.u32 %v592, 2147483648
        %v619 = vxor.u32 %v593, 2147483648
        %v620 = vxor.u32 %v594, 2147483648
        %v621 = vxor.u32 %v595, 2147483648
        %v622 = vmul.f32 %v618, 1.442695
        %v623 = vpow.pop %v622
        %v624 = vmul.f32 %v619, 1.442695
        %v625 = vpow.pop %v624
        %v626 = vmul.f32 %v620, 1.442695
        %v627 = vpow.pop %v626
        %v628 = vmul.f32 %v621, 1.442695
        %v629 = vpow.pop %v628
        %v630 = vadd.f32 %v623, 1.0
        %v631 = vadd.f32 %v625, 1.0
        %v632 = vadd.f32 %v627, 1.0
        %v633 = vadd.f32 %v629, 1.0
        %v634 = vrcp.pop %v630
        %v635 = vmul.f32 %v630, %v634
        %v636 = vsub.f32 1.0, %v635
        %v637 = vmul.f32 %v634, %v636
        %v638 = vadd.f32 %v634, %v637
        %vm639 = vweird.f32 %v630
        %vm640 = vweird.f32 %v634
        %vm641 = vmor %vm639, %vm640
        %v642 = vsel %vm641, %v634, %v638
        %v643 = vand.u32 2147483647, %v630
        %vm644 = vcmp.eq.f32.partialorder %v643, 8.507059e+37
        %v645 = vand.u32 %v630, 2147483648
        %v646 = vor.u32 1.1754944e-38, %v645
        %v647 = vsel %vm644, %v646, %v642
        %v648 = vmul.f32 1.0, %v647
        %v649 = vrcp.pop %v631
        %v650 = vmul.f32 %v631, %v649
        %v651 = vsub.f32 1.0, %v650
        %v652 = vmul.f32 %v649, %v651
        %v653 = vadd.f32 %v649, %v652
        %vm654 = vweird.f32 %v631
        %vm655 = vweird.f32 %v649
        %vm656 = vmor %vm654, %vm655
        %v657 = vsel %vm656, %v649, %v653
        %v658 = vand.u32 2147483647, %v631
        %vm659 = vcmp.eq.f32.partialorder %v658, 8.507059e+37
        %v660 = vand.u32 %v631, 2147483648
        %v661 = vor.u32 1.1754944e-38, %v660
        %v662 = vsel %vm659, %v661, %v657
        %v663 = vmul.f32 1.0, %v662
        %v664 = vrcp.pop %v632
        %v665 = vmul.f32 %v632, %v664
        %v666 = vsub.f32 1.0, %v665
        %v667 = vmul.f32 %v664, %v666
        %v668 = vadd.f32 %v664, %v667
        %vm669 = vweird.f32 %v632
        %vm670 = vweird.f32 %v664
        %vm671 = vmor %vm669, %vm670
        %v672 = vsel %vm671, %v664, %v668
        %v673 = vand.u32 2147483647, %v632
        %vm674 = vcmp.eq.f32.partialorder %v673, 8.507059e+37
        %v675 = vand.u32 %v632, 2147483648
        %v676 = vor.u32 1.1754944e-38, %v675
        %v677 = vsel %vm674, %v676, %v672
        %v678 = vmul.f32 1.0, %v677
        %v679 = vrcp.pop %v633
        %v680 = vmul.f32 %v633, %v679
        %v681 = vsub.f32 1.0, %v680
        %v682 = vmul.f32 %v679, %v681
        %v683 = vadd.f32 %v679, %v682
        %vm684 = vweird.f32 %v633
        %vm685 = vweird.f32 %v679
        %vm686 = vmor %vm684, %vm685
        %v687 = vsel %vm686, %v679, %v683
        %v688 = vand.u32 2147483647, %v633
        %vm689 = vcmp.eq.f32.partialorder %v688, 8.507059e+37
        %v690 = vand.u32 %v633, 2147483648
        %v691 = vor.u32 1.1754944e-38, %v690
        %v692 = vsel %vm689, %v691, %v687
        %v693 = vmul.f32 1.0, %v692
        %v694 = vmul.f32 %v648, %v610
        %v695 = vmul.f32 %v663, %v610
        %v696 = vmul.f32 %v678, %v610
        %v697 = vmul.f32 %v693, %v610
        %v698 = vsub.f32 %v594, 4.0
        %v699 = vsub.f32 %v595, 4.0
        %v700 = vxor.u32 %v698, 2147483648
        %v701 = vxor.u32 %v699, 2147483648
        %v702 = vmul.f32 %v700, 1.442695
        %v703 = vpow.pop %v702
        %v704 = vmul.f32 %v701, 1.442695
        %v705 = vpow.pop %v704
        %v706 = vadd.f32 %v703, 1.0
        %v707 = vadd.f32 %v705, 1.0
        %v708 = vrcp.pop %v706
        %v709 = vmul.f32 %v706, %v708
        %v710 = vsub.f32 1.0, %v709
        %v711 = vmul.f32 %v708, %v710
        %v712 = vadd.f32 %v708, %v711
        %vm713 = vweird.f32 %v706
        %vm714 = vweird.f32 %v708
        %vm715 = vmor %vm713, %vm714
        %v716 = vsel %vm715, %v708, %v712
        %v717 = vand.u32 2147483647, %v706
        %vm718 = vcmp.eq.f32.partialorder %v717, 8.507059e+37
        %v719 = vand.u32 %v706, 2147483648
        %v720 = vor.u32 1.1754944e-38, %v719
        %v721 = vsel %vm718, %v720, %v716
        %v722 = vmul.f32 1.0, %v721
        %v723 = vrcp.pop %v707
        %v724 = vmul.f32 %v707, %v723
        %v725 = vsub.f32 1.0, %v724
        %v726 = vmul.f32 %v723, %v725
        %v727 = vadd.f32 %v723, %v726
        %vm728 = vweird.f32 %v707
        %vm729 = vweird.f32 %v723
        %vm730 = vmor %vm728, %vm729
        %v731 = vsel %vm730, %v723, %v727
        %v732 = vand.u32 2147483647, %v707
        %vm733 = vcmp.eq.f32.partialorder %v732, 8.507059e+37
        %v734 = vand.u32 %v707, 2147483648
        %v735 = vor.u32 1.1754944e-38, %v734
        %v736 = vsel %vm733, %v735, %v731
        %v737 = vmul.f32 1.0, %v736
        %v738 = vmul.f32 %v592, %v592
        %v739 = vmul.f32 %v593, %v593
        %v742 = vrot.slane %v738, 1
        %v743 = vrot.slane %v739, 1
        %v746 = vadd.f32 %v738, %v742
        %v747 = vadd.f32 %v739, %v743
        %v748 = vrot.slane %v738, 2
        %v749 = vrot.slane %v739, 2
        %v752 = vadd.f32 %v746, %v748
        %v753 = vadd.f32 %v747, %v749
        %v754 = vrot.slane %v738, 3
        %v755 = vrot.slane %v739, 3
        %v758 = vadd.f32 %v752, %v754
        %v759 = vadd.f32 %v753, %v755
        %v760 = vadd.f32 %v758, 1e-12
        %v761 = vadd.f32 %v759, 1e-12
        %v762 = vrsqrt.pop %v760
        %v763 = vmul.f32 %v762, %v760
        %v764 = vmul.f32 %v763, %v762
        %v765 = vmul.f32 0.5, %v764
        %v766 = vsub.f32 1.5, %v765
        %v767 = vmul.f32 %v762, %v766
        %vm768 = vweird.f32 %v760
        %vm769 = vweird.f32 %v762
        %vm770 = vmor %vm768, %vm769
        %v771 = vsel %vm770, %v762, %v767
        %v772 = vrsqrt.pop %v761
        %v773 = vmul.f32 %v772, %v761
        %v774 = vmul.f32 %v773, %v772
        %v775 = vmul.f32 0.5, %v774
        %v776 = vsub.f32 1.5, %v775
        %v777 = vmul.f32 %v772, %v776
        %vm778 = vweird.f32 %v761
        %vm779 = vweird.f32 %v772
        %vm780 = vmor %vm778, %vm779
        %v781 = vsel %vm780, %v772, %v777
        %v782 = vmul.f32 %v592, %v771
        %v783 = vmul.f32 %v593, %v781
        %v786 = vrot.slane %v771, 7
        %v787 = vrot.slane %v781, 7
        %v790 = vmul.f32 %v592, %v786
        %v791 = vmul.f32 %v593, %v787
        %v792 = vrot.slane %v771, 6
        %v793 = vrot.slane %v781, 6
        %v796 = vmul.f32 %v592, %v792
        %v797 = vmul.f32 %v593, %v793
        %v798 = vrot.slane %v771, 5
        %v799 = vrot.slane %v781, 5
        %v802 = vmul.f32 %v592, %v798
        %v803 = vmul.f32 %v593, %v799
        %v804 = vmul.f32 %v796, %v796
        %v805 = vmul.f32 %v797, %v797
        %v806 = vmul.f32 %v802, %v802
        %v807 = vmul.f32 %v803, %v803
        %v810 = vrot.slane %v806, 1
        %v811 = vrot.slane %v807, 1
        %v814 = vadd.f32 %v804, %v810
        %v815 = vadd.f32 %v805, %v811
        %v816 = vmul.f32 %v814, 2.0
        %v817 = vmul.f32 %v815, 2.0
        %v818 = vsub.f32 1.0, %v816
        %v819 = vsub.f32 1.0, %v817
        %v822 = vrot.slane %v796, 1
        %v823 = vrot.slane %v797, 1
        %v826 = vmul.f32 %v790, %v822
        %v827 = vmul.f32 %v791, %v823
        %v830 = vrot.slane %v802, 3
        %v831 = vrot.slane %v803, 3
        %v834 = vmul.f32 %v782, %v830
        %v835 = vmul.f32 %v783, %v831
        %v838 = vrot.slane %v834, 7
        %v839 = vrot.slane %v835, 7
        %v842 = vsub.f32 %v826, %v838
        %v843 = vsub.f32 %v827, %v839
        %v844 = vmul.f32 %v842, 2.0
        %v845 = vmul.f32 %v843, 2.0
        %v846 = vrot.slane %v802, 2
        %v847 = vrot.slane %v803, 2
        %v850 = vmul.f32 %v790, %v846
        %v851 = vmul.f32 %v791, %v847
        %v852 = vrot.slane %v796, 2
        %v853 = vrot.slane %v797, 2
        %v856 = vmul.f32 %v782, %v852
        %v857 = vmul.f32 %v783, %v853
        %v860 = vrot.slane %v856, 7
        %v861 = vrot.slane %v857, 7
        %v864 = vadd.f32 %v850, %v860
        %v865 = vadd.f32 %v851, %v861
        %v866 = vmul.f32 %v864, 2.0
        %v867 = vmul.f32 %v865, 2.0
        %v868 = vadd.f32 %v826, %v838
        %v869 = vadd.f32 %v827, %v839
        %v870 = vmul.f32 %v868, 2.0
        %v871 = vmul.f32 %v869, 2.0
        %v872 = vmul.f32 %v790, %v790
        %v873 = vmul.f32 %v791, %v791
        %v874 = vrot.slane %v806, 2
        %v875 = vrot.slane %v807, 2
        %v878 = vadd.f32 %v872, %v874
        %v879 = vadd.f32 %v873, %v875
        %v880 = vmul.f32 %v878, 2.0
        %v881 = vmul.f32 %v879, 2.0
        %v882 = vsub.f32 1.0, %v880
        %v883 = vsub.f32 1.0, %v881
        %v884 = vrot.slane %v802, 1
        %v885 = vrot.slane %v803, 1
        %v888 = vmul.f32 %v796, %v884
        %v889 = vmul.f32 %v797, %v885
        %v892 = vrot.slane %v790, 1
        %v893 = vrot.slane %v791, 1
        %v896 = vmul.f32 %v782, %v892
        %v897 = vmul.f32 %v783, %v893
        %v900 = vrot.slane %v896, 6
        %v901 = vrot.slane %v897, 6
        %v904 = vsub.f32 %v888, %v900
        %v905 = vsub.f32 %v889, %v901
        %v906 = vmul.f32 %v904, 2.0
        %v907 = vmul.f32 %v905, 2.0
        %v908 = vsub.f32 %v850, %v860
        %v909 = vsub.f32 %v851, %v861
        %v910 = vmul.f32 %v908, 2.0
        %v911 = vmul.f32 %v909, 2.0
        %v912 = vadd.f32 %v888, %v900
        %v913 = vadd.f32 %v889, %v901
        %v914 = vmul.f32 %v912, 2.0
        %v915 = vmul.f32 %v913, 2.0
        %v918 = vrot.slane %v804, 1
        %v919 = vrot.slane %v805, 1
        %v922 = vadd.f32 %v872, %v918
        %v923 = vadd.f32 %v873, %v919
        %v924 = vmul.f32 %v922, 2.0
        %v925 = vmul.f32 %v923, 2.0
        %v926 = vsub.f32 1.0, %v924
        %v927 = vsub.f32 1.0, %v925
        %v930 = vrot.slane %v694, 2
        %v931 = vrot.slane %v695, 2
        %v934 = vmul.f32 %v818, %v930
        %v935 = vmul.f32 %v819, %v931
        %v938 = vrot.slane %v696, 4
        %v939 = vrot.slane %v697, 4
        %v942 = vmul.f32 %v844, %v938
        %v943 = vmul.f32 %v845, %v939
        %v944 = vrot.slane %v696, 5
        %v945 = vrot.slane %v697, 5
        %v948 = vmul.f32 %v866, %v944
        %v949 = vmul.f32 %v867, %v945
        %v950 = vrot.slane %v694, 3
        %v951 = vrot.slane %v695, 3
        %v954 = vmul.f32 %v870, %v950
        %v955 = vmul.f32 %v871, %v951
        %v956 = vmul.f32 %v882, %v938
        %v957 = vmul.f32 %v883, %v939
        %v958 = vmul.f32 %v906, %v938
        %v959 = vmul.f32 %v907, %v939
        %v960 = vmul.f32 %v910, %v950
        %v961 = vmul.f32 %v911, %v951
        %v962 = vrot.slane %v696, 3
        %v963 = vrot.slane %v697, 3
        %v966 = vmul.f32 %v914, %v962
        %v967 = vmul.f32 %v915, %v963
        %v968 = vmul.f32 %v926, %v944
        %v969 = vmul.f32 %v927, %v945
        %v970 = vmul.f32 %v934, %v934
        %v971 = vmul.f32 %v935, %v935
        %v972 = vmul.f32 %v942, %v942
        %v973 = vmul.f32 %v943, %v943
        %v976 = vrot.slane %v972, 7
        %v977 = vrot.slane %v973, 7
        %v980 = vadd.f32 %v970, %v976
        %v981 = vadd.f32 %v971, %v977
        %v982 = vmul.f32 %v948, %v948
        %v983 = vmul.f32 %v949, %v949
        %v986 = vrot.slane %v982, 7
        %v987 = vrot.slane %v983, 7
        %v990 = vadd.f32 %v980, %v986
        %v991 = vadd.f32 %v981, %v987
        %v994 = vrot.slane %v954, 7
        %v995 = vrot.slane %v955, 7
        %v998 = vmul.f32 %v934, %v994
        %v999 = vmul.f32 %v935, %v995
        %v1000 = vmul.f32 %v942, %v956
        %v1001 = vmul.f32 %v943, %v957
        %v1004 = vrot.slane %v1000, 7
        %v1005 = vrot.slane %v1001, 7
        %v1008 = vadd.f32 %v998, %v1004
        %v1009 = vadd.f32 %v999, %v1005
        %v1012 = vrot.slane %v958, 1
        %v1013 = vrot.slane %v959, 1
        %v1016 = vmul.f32 %v948, %v1012
        %v1017 = vmul.f32 %v949, %v1013
        %v1020 = vrot.slane %v1016, 7
        %v1021 = vrot.slane %v1017, 7
        %v1024 = vadd.f32 %v1008, %v1020
        %v1025 = vadd.f32 %v1009, %v1021
        %v1028 = vrot.slane %v960, 7
        %v1029 = vrot.slane %v961, 7
        %v1032 = vmul.f32 %v934, %v1028
        %v1033 = vmul.f32 %v935, %v1029
        %v1036 = vrot.slane %v966, 1
        %v1037 = vrot.slane %v967, 1
        %v1040 = vmul.f32 %v942, %v1036
        %v1041 = vmul.f32 %v943, %v1037
        %v1044 = vrot.slane %v1040, 7
        %v1045 = vrot.slane %v1041, 7
        %v1048 = vadd.f32 %v1032, %v1044
        %v1049 = vadd.f32 %v1033, %v1045
        %v1050 = vmul.f32 %v948, %v968
        %v1051 = vmul.f32 %v949, %v969
        %v1054 = vrot.slane %v1050, 7
        %v1055 = vrot.slane %v1051, 7
        %v1058 = vadd.f32 %v1048, %v1054
        %v1059 = vadd.f32 %v1049, %v1055
        %v1060 = vmul.f32 %v954, %v954
        %v1061 = vmul.f32 %v955, %v955
        %v1062 = vmul.f32 %v956, %v956
        %v1063 = vmul.f32 %v957, %v957
        %v1064 = vadd.f32 %v1060, %v1062
        %v1065 = vadd.f32 %v1061, %v1063
        %v1066 = vmul.f32 %v958, %v958
        %v1067 = vmul.f32 %v959, %v959
        %v1070 = vrot.slane %v1066, 1
        %v1071 = vrot.slane %v1067, 1
        %v1074 = vadd.f32 %v1064, %v1070
        %v1075 = vadd.f32 %v1065, %v1071
        %v1076 = vmul.f32 %v954, %v960
        %v1077 = vmul.f32 %v955, %v961
        %v1078 = vmul.f32 %v956, %v1036
        %v1079 = vmul.f32 %v957, %v1037
        %v1080 = vadd.f32 %v1076, %v1078
        %v1081 = vadd.f32 %v1077, %v1079
        %v1084 = vrot.slane %v968, 7
        %v1085 = vrot.slane %v969, 7
        %v1088 = vmul.f32 %v958, %v1084
        %v1089 = vmul.f32 %v959, %v1085
        %v1092 = vrot.slane %v1088, 1
        %v1093 = vrot.slane %v1089, 1
        %v1096 = vadd.f32 %v1080, %v1092
        %v1097 = vadd.f32 %v1081, %v1093
        %v1098 = vmul.f32 %v960, %v960
        %v1099 = vmul.f32 %v961, %v961
        %v1100 = vmul.f32 %v966, %v966
        %v1101 = vmul.f32 %v967, %v967
        %v1104 = vrot.slane %v1100, 1
        %v1105 = vrot.slane %v1101, 1
        %v1108 = vadd.f32 %v1098, %v1104
        %v1109 = vadd.f32 %v1099, %v1105
        %v1110 = vmul.f32 %v968, %v968
        %v1111 = vmul.f32 %v969, %v969
        %v1112 = vadd.f32 %v1108, %v1110
        %v1113 = vadd.f32 %v1109, %v1111
        %v1116 = vrot.slane %v990, 5
        %v1117 = vrot.slane %v991, 5
        %v1122 = vrot.slane %v1024, 4
        %v1123 = vrot.slane %v1025, 4
        %v1128 = vrot.slane %v1058, 3
        %v1129 = vrot.slane %v1059, 3
        %v1132 = vrot.slane %v1024, 2
        %v1133 = vrot.slane %v1025, 2
        %v1138 = vrot.slane %v1096, 7
        %v1139 = vrot.slane %v1097, 7
        %v1142 = vrot.slane %v1058, 7
        %v1143 = vrot.slane %v1059, 7
        %v1146 = vrot.slane %v1096, 5
        %v1147 = vrot.slane %v1097, 5
        %v1152 = vrot.slane %v1112, 4
        %v1153 = vrot.slane %v1113, 4
        %v1154 = vsel %vm596, %v1116, %v1122
        %v1155 = vsel %vm596, %v1117, %v1123
        %v1156 = vsel %vm599, %v1154, %v1128
        %v1157 = vsel %vm599, %v1155, %v1129
        %vm1158 = vcmask 1042432
        %v1159 = vsel %vm1158, %v1156, %v1132
        %v1160 = vsel %vm1158, %v1157, %v1133
        %vm1161 = vcmask 1043456
        %v1162 = vsel %vm1161, %v1159, %v1074
        %v1163 = vsel %vm1161, %v1160, %v1075
        %vm1164 = vcmask 1044480
        %v1165 = vsel %vm1164, %v1162, %v1138
        %v1166 = vsel %vm1164, %v1163, %v1139
        %vm1167 = vcmask 1045504
        %v1168 = vsel %vm1167, %v1165, %v1142
        %v1169 = vsel %vm1167, %v1166, %v1143
        %vm1170 = vcmask 1046528
        %v1171 = vsel %vm1170, %v1168, %v1146
        %v1172 = vsel %vm1170, %v1169, %v1147
        %vm1173 = vcmp.ge.f32.partialorder %v722, 0.1
        %vm1174 = vcmp.ge.f32.partialorder %v737, 0.1
        %v1175 = vsel %vm1173, 1, 0
        %v1176 = vsel %vm1174, 1, 0
        %v1177 = vcvt.s32.f32 %v1175
        %v1178 = vcvt.s32.f32 %v1176
        %vm1179 = vcmp.ge.f32.partialorder %v678, 0.5
        %vm1180 = vcmp.ge.f32.partialorder %v693, 0.5
        %v1181 = vsel %vm1179, 1, 0
        %v1182 = vsel %vm1180, 1, 0
        %v1183 = vcvt.s32.f32 %v1181
        %v1184 = vcvt.s32.f32 %v1182
        %v1187 = vrot.slane %v1183, 1
        %v1188 = vrot.slane %v1184, 1
        %v1191 = vmul.f32 %v1177, %v1187
        %v1192 = vmul.f32 %v1178, %v1188
        %v1193 = vsub.f32 1.0, %v1183
        %v1194 = vsub.f32 1.0, %v1184
        %v1197 = vrot.slane %v1193, 1
        %v1198 = vrot.slane %v1194, 1
        %v1201 = vmul.f32 %v1177, %v1197
        %v1202 = vmul.f32 %v1178, %v1198
        %v1205 = vrot.slane %v1191, 5
        %v1206 = vrot.slane %v1192, 5
        %v1211 = vrot.slane %v1201, 4
        %v1212 = vrot.slane %v1202, 4
        %v1215 = vsel %vm596, %v1205, %v1211
        %v1216 = vsel %vm596, %v1206, %v1212
        %1217 = vst [vmem:[%s192] sm:$0x7] %v616
        %1218 = vst [vmem:[%s192 + $0x8] sm:$0x7] %v617
        %v1221 = vrot.slane %v1171, 5
        %v1222 = vrot.slane %v1172, 5
        %v1223 = vrot.slane %v1152, 5
        %v1224 = vsel %vm1158, %v1221, %v1223
        %v1225 = vrot.slane %v1153, 5
        %v1226 = vsel %vm1158, %v1222, %v1225
        %1231 = vst [vmem:[%s192] sm:$0xf8] %v1221
        %1232 = vst [vmem:[%s192 + $0x8] sm:$0xf8] %v1222
        %1233 = vst [vmem:[%s192 + $0x10] sm:$0xf] %v1224
        %1234 = vst [vmem:[%s192 + $0x18] sm:$0xf] %v1226
        %v1237 = vrot.slane %v678, 2
        %v1238 = vrot.slane %v693, 2
        %v1243 = vrot.slane %v722, 2
        %v1244 = vrot.slane %v737, 2
        %v1247 = vsel %vm1158, %v1237, %v1243
        %v1248 = vsel %vm1158, %v1238, %v1244
        %v1251 = vrot.slane %v1247, 4
        %v1252 = vrot.slane %v1248, 4
        %1255 = vst [vmem:[%s192 + $0x10] sm:$0xf0] %v1251
        %1256 = vst [vmem:[%s192 + $0x18] sm:$0xf0] %v1252
        %1257 = vst [vmem:[%s192 + $0x20] sm:$0x3] %v1215
        %1258 = vst [vmem:[%s192 + $0x28] sm:$0x3] %v1216
        %s1259 = sand.u32 %s91, 1
        %s1260 = scalar_lea.sflag [#allocation4], %s1259
        %s1261 = sand.u32 %s91, 1
        %s1262 = smul.addr %s1261, 48
        %s1263 = scalar_lea.vmem [#allocation9], %s1262
        // Predicated region
        $region45: #{tpu_custom_call.1} parent=31 // pred_check
          %p1264 = pneg %p101
        $region46: #{tpu_custom_call.1} parent=31 // pred_check_branch
          %1266 = sbr.rel (%p1264) target = $region48
        $region47: #{tpu_custom_call.1} parent=31 // pred_region
          %s1267 = smul.u32 2, %s20
          %1269 = vsyncadd %s1260, 0
          %s1270 = smul.addr %s1267, 8
          %s1271 = scalar_lea.hbm %s3, %s1270
          %s1272 = sshll.u32 %s1263, 4
          %s1273 = int_to_ptr.vmem [resolvable:$true] %s1272
          %s1274 = sshll.u32 %s1271, 4
          %s1275 = int_to_ptr.hbm [resolvable:$true] %s1274
          %1280 = dma.vmem_to_hbm [thread:$0]  %s1273, 768, %s1275, %s1260, 256, 512, 16
        $region48: #{tpu_custom_call.1} parent=31 // pred_fallthru
          _
      $region32: #{tpu_custom_call.1} parent=5 // pred_fallthru
        _
      %p1281 = scmp.le.s32.totalorder 2, %s15
      // Predicated region
      $region49: #{tpu_custom_call.1} parent=5 // pred_check
        %p1282 = pneg %p1281
      $region50: #{tpu_custom_call.1} parent=5 // pred_check_branch
        %1284 = sbr.rel (%p1282) target = $region52
      $region51: #{tpu_custom_call.1} parent=5 // pred_region
        %s1285 = ssub.s32 %s15, 2
        // Predicated region
        $region53: #{tpu_custom_call.1} parent=51 // pred_check
          %p1286 = pneg %p107
        $region54: #{tpu_custom_call.1} parent=51 // pred_check_branch
          %1288 = sbr.rel (%p1286) target = $region56
        $region55: #{tpu_custom_call.1} parent=51 // pred_region
          %s1289 = sand.u32 %s92, 1
          %s1290 = scalar_lea.sflag [#allocation4], %s1289
          %s1291 = sand.u32 %s92, 1
          %s1292 = smul.addr %s1291, 48
          %s1293 = scalar_lea.vmem [#allocation9], %s1292
          %1295 = dma.done %s1290, 768
        $region56: #{tpu_custom_call.1} parent=51 // pred_fallthru
          _
      $region52: #{tpu_custom_call.1} parent=5 // pred_fallthru
        _
    $region6: #{tpu_custom_call.1} parent=1 // loop_footer
      %s19 = sadd.s32 1, %s15
    $region7: #{tpu_custom_call.1} parent=1 // loop_footer_branch
      %14 = sbr.rel target = $region3
    $region8: #{tpu_custom_call.1} parent=1 // loop_exit
      _
    %1296 = vsyncpa [#allocation3], 1
    %s1297 = scalar_lea.sflag [#allocation3], 1
    %1298 = vsyncpa %s1297, 1
    %1299 = vsyncpa [#allocation4], 1
    %s1300 = scalar_lea.sflag [#allocation4], 1
    %1301 = vsyncpa %s1300, 1
    %1302 = vsyncpa [#allocation5], 1
    %s1303 = scalar_lea.sflag [#allocation5], 1
    %1304 = vsyncpa %s1303, 1
    %1305 = vsyncpa [#allocation7], 1

</llo_original>
